<compile_context>
chip_gen: v5e
topology: v5e:2x2
jax: 0.10.0
libtpu: 0.0.40
codegen_flags: <defaults>
</compile_context>

<pallas_src>
import functools

import jax
import jax.numpy as jnp
from jax.experimental import pallas as pl
from jax.experimental.pallas import tpu as pltpu


# ----------------------------------------------------------------------------
# Kernel 1: conv1 as a single im2col matmul (+ bias, ReLU, per-channel scale)
# ----------------------------------------------------------------------------
def _conv1_kernel(p_ref, w_ref, b_ref, s_ref, o_ref):
    # p_ref: (H*W, Kp) bf16 im2col patches of one image (Kp = 9*Cin padded)
    # w_ref: (Kp, C) bf16 ; b_ref/s_ref: (1, C) f32 ; o_ref: (H*W, C) bf16
    y = jnp.dot(p_ref[...], w_ref[...], preferred_element_type=jnp.float32)
    y = jnp.maximum(y + b_ref[...], 0.0) * s_ref[...]
    o_ref[...] = y.astype(o_ref.dtype)


def conv1_matmul(patches, w, b, scale, *, n_images):
    M, Kp = patches.shape
    rows = M // n_images                       # H*W rows per image
    C = w.shape[1]
    return pl.pallas_call(
        _conv1_kernel,
        out_shape=jax.ShapeDtypeStruct((M, C), jnp.bfloat16),
        grid=(n_images,),
        in_specs=[
            pl.BlockSpec((rows, Kp), lambda i: (i, 0)),
            pl.BlockSpec((Kp, C), lambda i: (0, 0)),
            pl.BlockSpec((1, C), lambda i: (0, 0)),
            pl.BlockSpec((1, C), lambda i: (0, 0)),
        ],
        out_specs=pl.BlockSpec((rows, C), lambda i: (i, 0)),
        compiler_params=pltpu.CompilerParams(
            dimension_semantics=("parallel",)),
    )(patches, w, b, scale)


# ----------------------------------------------------------------------------
# Kernel 2: conv2 (single im2col matmul) + bias + ReLU + 2x2 maxpool + scale
# ----------------------------------------------------------------------------
def _conv2_pool_kernel(p_ref, w_ref, b_ref, s_ref, o_ref, *, H, W, C):
    # Per image: p_ref (H*W, 9*Cin) bf16, w_ref (9*Cin, C) bf16,
    # b_ref (1, C) f32, s_ref (1, (W//2)*C) f32 (per-channel scale tiled),
    # o_ref (H//2, (W//2)*C) bf16 : rows = h2, lanes = (w2, c).
    Hh, Wh = H // 2, W // 2
    z = jnp.dot(p_ref[...], w_ref[...],
                preferred_element_type=jnp.float32)        # (H*W, C) f32
    z = jnp.maximum(z + b_ref[...], 0.0)                   # bias + ReLU
    # 2x2 max pool (stride 2): pool along W (adjacent rows), then along H.
    a = z.reshape(H * Wh, 2 * C)
    a = jnp.maximum(a[:, :C], a[:, C:])                    # (H*Wh, C)
    a = a.reshape(Hh, 2 * Wh * C)
    a = jnp.maximum(a[:, :Wh * C], a[:, Wh * C:])          # (Hh, Wh*C)
    o_ref[...] = (a * s_ref[...]).astype(o_ref.dtype)      # mask scale


def conv2_pool(patches, w, b, scale_tiled, *, n_images, H, W, C):
    M, K = patches.shape
    rows = M // n_images                       # H*W rows per image
    Hh, Wh = H // 2, W // 2
    kernel = functools.partial(_conv2_pool_kernel, H=H, W=W, C=C)
    return pl.pallas_call(
        kernel,
        out_shape=jax.ShapeDtypeStruct((n_images * Hh, Wh * C), jnp.bfloat16),
        grid=(n_images,),
        in_specs=[
            pl.BlockSpec((rows, K), lambda i: (i, 0)),
            pl.BlockSpec((K, C), lambda i: (0, 0)),
            pl.BlockSpec((1, C), lambda i: (0, 0)),
            pl.BlockSpec((1, Wh * C), lambda i: (0, 0)),
        ],
        out_specs=pl.BlockSpec((Hh, Wh * C), lambda i: (i, 0)),
        compiler_params=pltpu.CompilerParams(
            dimension_semantics=("parallel",)),
    )(patches, w, b, scale_tiled)


# ----------------------------------------------------------------------------
# Kernel 3: fused fc1 (K-tiled) + fc2 + fc3
# ----------------------------------------------------------------------------
def _fc_stack_kernel(x_ref, w1_ref, b1_ref, s1_ref,
                     w2_ref, b2_ref, s2_ref,
                     w3_ref, b3_ref, o_ref, acc_ref):
    k = pl.program_id(0)

    @pl.when(k == 0)
    def _():
        acc_ref[...] = jnp.zeros_like(acc_ref)

    acc_ref[...] += jnp.dot(x_ref[...], w1_ref[...],
                            preferred_element_type=jnp.float32)

    @pl.when(k == pl.num_programs(0) - 1)
    def _():
        h = jnp.maximum(acc_ref[...] + b1_ref[...], 0.0) * s1_ref[...]
        h = jnp.dot(h.astype(w2_ref.dtype), w2_ref[...],
                    preferred_element_type=jnp.float32)
        h = jnp.maximum(h + b2_ref[...], 0.0) * s2_ref[...]
        h = jnp.dot(h.astype(w3_ref.dtype), w3_ref[...],
                    preferred_element_type=jnp.float32)
        o_ref[...] = (h + b3_ref[...]).astype(o_ref.dtype)


def fc_stack(x, w1, b1, s1, w2, b2, s2, w3, b3, *, tk):
    M, K = x.shape
    H1, H2, NOUT = w1.shape[1], w2.shape[1], w3.shape[1]
    assert K % tk == 0
    return pl.pallas_call(
        _fc_stack_kernel,
        out_shape=jax.ShapeDtypeStruct((M, NOUT), jnp.float32),
        grid_spec=pltpu.PrefetchScalarGridSpec(
            num_scalar_prefetch=0,
            grid=(K // tk,),
            in_specs=[
                pl.BlockSpec((M, tk), lambda k: (0, k)),
                pl.BlockSpec((tk, H1), lambda k: (k, 0)),
                pl.BlockSpec((1, H1), lambda k: (0, 0)),
                pl.BlockSpec((1, H1), lambda k: (0, 0)),
                pl.BlockSpec((H1, H2), lambda k: (0, 0)),
                pl.BlockSpec((1, H2), lambda k: (0, 0)),
                pl.BlockSpec((1, H2), lambda k: (0, 0)),
                pl.BlockSpec((H2, NOUT), lambda k: (0, 0)),
                pl.BlockSpec((1, NOUT), lambda k: (0, 0)),
            ],
            out_specs=pl.BlockSpec((M, NOUT), lambda k: (0, 0)),
            scratch_shapes=[pltpu.VMEM((M, H1), jnp.float32)],
        ),
        compiler_params=pltpu.CompilerParams(
            dimension_semantics=("arbitrary",)),
    )(x, w1, b1, s1, w2, b2, s2, w3, b3)


# ----------------------------------------------------------------------------
# Wrapper-side layout helpers (pure data movement, done by XLA)
# ----------------------------------------------------------------------------
def _im2col_3x3(x_nhwc):
    # (N, H, W, C) -> (N*H*W, 9*C) patches; column order = (ky, kx, c),
    # matching a (3,3,Cin,Cout) weight reshaped to (9*Cin, Cout).
    N, H, W, C = x_nhwc.shape
    xp = jnp.pad(x_nhwc, ((0, 0), (1, 1), (1, 1), (0, 0)))
    taps = [xp[:, ky:ky + H, kx:kx + W, :]
            for ky in range(3) for kx in range(3)]
    return jnp.concatenate(taps, axis=-1).reshape(N * H * W, 9 * C)


@jax.jit
def _forward_impl(x_nchw, params, scales):
    (w1m, b1, w2m, b2, fc1_w, fc1_b, fc2_w, fc2_b, fc3_w, fc3_b) = params
    s_c1, s_c2, s_f1, s_f2 = scales
    N, _, H, W = x_nchw.shape
    C = w1m.shape[1]
    Hh, Wh = H // 2, W // 2

    # conv1: XLA im2col + one Pallas bf16 matmul (bias/ReLU/mask-scale fused)
    x = jnp.transpose(x_nchw, (0, 2, 3, 1)).astype(jnp.float32)
    p1 = _im2col_3x3(x)
    p1 = jnp.pad(p1, ((0, 0), (0, w1m.shape[0] - p1.shape[1])))
    p1 = p1.astype(jnp.bfloat16)
    h1 = conv1_matmul(p1, w1m, b1, s_c1, n_images=N)          # (N*H*W, C) bf16

    # conv2 + ReLU + 2x2 maxpool + mask scale: one well-shaped MXU matmul
    p2 = _im2col_3x3(h1.reshape(N, H, W, C))                  # (N*H*W, 9C) bf16
    s_c2_tiled = jnp.tile(s_c2, (1, Wh))                      # (1, Wh*C)
    pooled = conv2_pool(p2, w2m, b2, s_c2_tiled,
                        n_images=N, H=H, W=W, C=C)            # (N*Hh, Wh*C)

    # flatten in NHWC order (fc1_w rows were permuted at init to match, so no
    # NCHW transpose of the activation is needed).
    act = pooled.reshape(N, Hh * Wh * C)

    K = act.shape[1]
    tk = 2048 if K % 2048 == 0 else K
    return fc_stack(act, fc1_w, fc1_b, s_f1, fc2_w, fc2_b, s_f2,
                    fc3_w, fc3_b, tk=tk)                      # (N, 128) f32


# ----------------------------------------------------------------------------
# Conv2 module (Pallas version)
# ----------------------------------------------------------------------------
class Conv2Pallas:
    def __init__(self, n_outputs, input_size, input_channels, p, key):
        self.p = p
        self.n_outputs = n_outputs
        self.sizes = [128, 128, 256, 256]
        self.flatten_img_dim = input_size // 2
        C1, C2, F1, F2 = self.sizes

        ks = jax.random.split(key, 11)
        s = 0.05

        def normal(k, shape):
            return (s * jax.random.normal(k, shape)).astype(jnp.float32)

        # conv weights in PyTorch OIHW order -> HWIO -> im2col matrices (bf16).
        w1 = jnp.transpose(normal(ks[0], (C1, input_channels, 3, 3)),
                           (2, 3, 1, 0))                      # (3,3,Cin,C1)
        w2 = jnp.transpose(normal(ks[1], (C2, C1, 3, 3)), (2, 3, 1, 0))
        k1 = 9 * input_channels
        k1p = -(-k1 // 8) * 8                                 # pad K for packing
        self.w1m = jnp.pad(w1.reshape(k1, C1),
                           ((0, k1p - k1), (0, 0))).astype(jnp.bfloat16)
        self.b1 = normal(ks[2], (C1,)).reshape(1, C1)
        self.w2m = w2.reshape(9 * C1, C2).astype(jnp.bfloat16)
        self.b2 = normal(ks[3], (C2,)).reshape(1, C2)

        hw = self.flatten_img_dim
        fc1_in = C2 * hw * hw
        # fc1 weight generated in PyTorch (c,h,w)-flatten row order, then
        # permuted once to the NHWC flatten order produced by the conv kernels.
        fc1_w = normal(ks[4], (fc1_in, F1))
        fc1_w = fc1_w.reshape(C2, hw, hw, F1).transpose(1, 2, 0, 3)
        self.fc1_w = fc1_w.reshape(fc1_in, F1).astype(jnp.bfloat16)
        self.fc1_b = normal(ks[5], (F1,)).reshape(1, F1)
        self.fc2_w = normal(ks[6], (F1, F2)).astype(jnp.bfloat16)
        self.fc2_b = normal(ks[7], (F2,)).reshape(1, F2)

        # fc3: pad the output dim up to 128 lanes (lane-dense store).
        nout_p = max(128, -(-n_outputs // 128) * 128)
        fc3_w = normal(ks[8], (F2, n_outputs))
        self.fc3_w = jnp.pad(fc3_w, ((0, 0), (0, nout_p - n_outputs))
                             ).astype(jnp.bfloat16)
        fc3_b = normal(ks[9], (n_outputs,))
        self.fc3_b = jnp.pad(fc3_b, (0, nout_p - n_outputs)).reshape(1, nout_p)

        # dropout masks (ModelProto.get_dropout_masks): rand(size) < p
        mkeys = jax.random.split(ks[10], len(self.sizes))
        self.masks = [jax.random.uniform(mk, (sz,)) < p
                      for mk, sz in zip(mkeys, self.sizes)]

    def _mask_scale(self, idx, use_mask):
        m = self.masks[idx].astype(jnp.float32)
        if use_mask:
            return (m / jnp.mean(m)).reshape(1, -1)    # h * mask / mask.mean()
        return jnp.ones((1, m.shape[0]), jnp.float32)

    def forward(self, x_nchw, mask):
        scales = tuple(self._mask_scale(i, mask) for i in range(4))
        params = (self.w1m, self.b1, self.w2m, self.b2,
                  self.fc1_w, self.fc1_b, self.fc2_w, self.fc2_b,
                  self.fc3_w, self.fc3_b)
        out = _forward_impl(x_nchw, params, scales)
        return out[:, :self.n_outputs]


# ----------------------------------------------------------------------------
if __name__ == "__main__":
    key = jax.random.PRNGKey(0)
    k_x, k_params = jax.random.split(key)

    batch, channels, size, n_outputs, p = 2, 3, 16, 10, 0.5
    x = jax.random.normal(k_x, (batch, channels, size, size), jnp.float32)

    model = Conv2Pallas(n_outputs=n_outputs, input_size=size,
                        input_channels=channels, p=p, key=k_params)

    out_nomask = jax.block_until_ready(model.forward(x, mask=False))
    out_mask = jax.block_until_ready(model.forward(x, mask=True))

    assert out_nomask.shape == (batch, n_outputs)
    assert out_mask.shape == (batch, n_outputs)
    assert jnp.all(jnp.isfinite(out_nomask))
    assert jnp.all(jnp.isfinite(out_mask))
    print("KERNEL_OK")
</pallas_src>

<mosaic_0001>
module attributes {stable_mosaic.version = 11 : i64} {
  func.func @_conv1_kernel(%arg0: i32, %arg1: memref<256x32xbf16, #tpu.memory_space<vmem>>, %arg2: memref<32x128xbf16, #tpu.memory_space<vmem>>, %arg3: memref<1x128xf32, #tpu.memory_space<vmem>>, %arg4: memref<1x128xf32, #tpu.memory_space<vmem>>, %arg5: memref<256x128xbf16, #tpu.memory_space<vmem>>) attributes {dimension_semantics = [#tpu.dimension_semantics<parallel>], iteration_bounds = array<i64: 2>, scalar_prefetch = 0 : i64, scratch_operands = 0 : i64, tpu.core_type = #tpu.core_type<tc>, window_params = [{transform_indices = @transform_0, window_bounds = array<i64: 256, 32>}, {pipeline_mode = #tpu.pipeline_mode<synchronous>, transform_indices = @transform_1, window_bounds = array<i64: 32, 128>}, {pipeline_mode = #tpu.pipeline_mode<synchronous>, transform_indices = @transform_2, window_bounds = array<i64: 1, 128>}, {pipeline_mode = #tpu.pipeline_mode<synchronous>, transform_indices = @transform_3, window_bounds = array<i64: 1, 128>}, {transform_indices = @transform_4, window_bounds = array<i64: 256, 128>}]} {
    %c0 = arith.constant 0 : index
    %c0_0 = arith.constant 0 : index
    %0 = vector.load %arg1[%c0, %c0_0] : memref<256x32xbf16, #tpu.memory_space<vmem>>, vector<256x32xbf16>
    %c0_1 = arith.constant 0 : index
    %c0_2 = arith.constant 0 : index
    %1 = vector.load %arg2[%c0_1, %c0_2] : memref<32x128xbf16, #tpu.memory_space<vmem>>, vector<32x128xbf16>
    %cst = arith.constant dense<0.000000e+00> : vector<256x128xf32>
    %2 = tpu.matmul %0, %1, %cst {dimension_numbers = #tpu.dot_dimension_numbers<[1], [0], [0], [1], [0, 0, 1, 1], [], []>} : vector<256x32xbf16>, vector<32x128xbf16>, vector<256x128xf32> -> vector<256x128xf32>
    %c0_3 = arith.constant 0 : index
    %c0_4 = arith.constant 0 : index
    %3 = vector.load %arg3[%c0_3, %c0_4] : memref<1x128xf32, #tpu.memory_space<vmem>>, vector<1x128xf32>
    %4 = vector.broadcast %3 : vector<1x128xf32> to vector<256x128xf32>
    %5 = arith.addf %2, %4 : vector<256x128xf32>
    %cst_5 = arith.constant 0.000000e+00 : f32
    %6 = vector.broadcast %cst_5 : f32 to vector<256x128xf32>
    %7 = arith.maximumf %5, %6 : vector<256x128xf32>
    %c0_6 = arith.constant 0 : index
    %c0_7 = arith.constant 0 : index
    %8 = vector.load %arg4[%c0_6, %c0_7] : memref<1x128xf32, #tpu.memory_space<vmem>>, vector<1x128xf32>
    %9 = vector.broadcast %8 : vector<1x128xf32> to vector<256x128xf32>
    %10 = arith.mulf %7, %9 : vector<256x128xf32>
    %11 = arith.truncf %10 : vector<256x128xf32> to vector<256x128xbf16>
    %c0_8 = arith.constant 0 : index
    %c0_9 = arith.constant 0 : index
    %12 = vector.load %arg5[%c0_8, %c0_9] : memref<256x128xbf16, #tpu.memory_space<vmem>>, vector<256x128xbf16>
    tpu.vector_store %arg5[%c0_8, %c0_9], %11 {strides = array<i32>} : memref<256x128xbf16, #tpu.memory_space<vmem>>, vector<256x128xbf16>,
    return
  }
  func.func @transform_0(%arg0: i32) -> (i32, i32) {
    %c0_i32 = arith.constant 0 : i32
    %c0_i32_0 = arith.constant 0 : i32
    return %arg0, %c0_i32 : i32, i32
  }
  func.func @transform_1(%arg0: i32) -> (i32, i32) {
    %c0_i32 = arith.constant 0 : i32
    %c0_i32_0 = arith.constant 0 : i32
    %c0_i32_1 = arith.constant 0 : i32
    return %c0_i32, %c0_i32_0 : i32, i32
  }
  func.func @transform_2(%arg0: i32) -> (i32, i32) {
    %c0_i32 = arith.constant 0 : i32
    %c0_i32_0 = arith.constant 0 : i32
    %c0_i32_1 = arith.constant 0 : i32
    return %c0_i32, %c0_i32_0 : i32, i32
  }
  func.func @transform_3(%arg0: i32) -> (i32, i32) {
    %c0_i32 = arith.constant 0 : i32
    %c0_i32_0 = arith.constant 0 : i32
    %c0_i32_1 = arith.constant 0 : i32
    return %c0_i32, %c0_i32_0 : i32, i32
  }
  func.func @transform_4(%arg0: i32) -> (i32, i32) {
    %c0_i32 = arith.constant 0 : i32
    %c0_i32_0 = arith.constant 0 : i32
    return %arg0, %c0_i32 : i32, i32
  }
}

module attributes {stable_mosaic.version = 11 : i64} {
  func.func @_conv2_pool_kernel(%arg0: i32, %arg1: memref<256x1152xbf16, #tpu.memory_space<vmem>>, %arg2: memref<1152x128xbf16, #tpu.memory_space<vmem>>, %arg3: memref<1x128xf32, #tpu.memory_space<vmem>>, %arg4: memref<1x1024xf32, #tpu.memory_space<vmem>>, %arg5: memref<8x1024xbf16, #tpu.memory_space<vmem>>) attributes {dimension_semantics = [#tpu.dimension_semantics<parallel>], iteration_bounds = array<i64: 2>, scalar_prefetch = 0 : i64, scratch_operands = 0 : i64, tpu.core_type = #tpu.core_type<tc>, window_params = [{transform_indices = @transform_0, window_bounds = array<i64: 256, 1152>}, {pipeline_mode = #tpu.pipeline_mode<synchronous>, transform_indices = @transform_1, window_bounds = array<i64: 1152, 128>}, {pipeline_mode = #tpu.pipeline_mode<synchronous>, transform_indices = @transform_2, window_bounds = array<i64: 1, 128>}, {pipeline_mode = #tpu.pipeline_mode<synchronous>, transform_indices = @transform_3, window_bounds = array<i64: 1, 1024>}, {transform_indices = @transform_4, window_bounds = array<i64: 8, 1024>}]} {
    %c0 = arith.constant 0 : index
    %c0_0 = arith.constant 0 : index
    %0 = vector.load %arg1[%c0, %c0_0] : memref<256x1152xbf16, #tpu.memory_space<vmem>>, vector<256x1152xbf16>
    %c0_1 = arith.constant 0 : index
    %c0_2 = arith.constant 0 : index
    %1 = vector.load %arg2[%c0_1, %c0_2] : memref<1152x128xbf16, #tpu.memory_space<vmem>>, vector<1152x128xbf16>
    %cst = arith.constant dense<0.000000e+00> : vector<256x128xf32>
    %2 = tpu.matmul %0, %1, %cst {dimension_numbers = #tpu.dot_dimension_numbers<[1], [0], [0], [1], [0, 0, 1, 1], [], []>} : vector<256x1152xbf16>, vector<1152x128xbf16>, vector<256x128xf32> -> vector<256x128xf32>
    %c0_3 = arith.constant 0 : index
    %c0_4 = arith.constant 0 : index
    %3 = vector.load %arg3[%c0_3, %c0_4] : memref<1x128xf32, #tpu.memory_space<vmem>>, vector<1x128xf32>
    %4 = vector.broadcast %3 : vector<1x128xf32> to vector<256x128xf32>
    %5 = arith.addf %2, %4 : vector<256x128xf32>
    %cst_5 = arith.constant 0.000000e+00 : f32
    %6 = vector.broadcast %cst_5 : f32 to vector<256x128xf32>
    %7 = arith.maximumf %5, %6 : vector<256x128xf32>
    %8 = vector.shape_cast %7 : vector<256x128xf32> to vector<128x256xf32>
    %9 = vector.extract_strided_slice %8 {offsets = [0, 0], sizes = [128, 128], strides = [1, 1]} : vector<128x256xf32> to vector<128x128xf32>
    %10 = vector.extract_strided_slice %8 {offsets = [0, 128], sizes = [128, 128], strides = [1, 1]} : vector<128x256xf32> to vector<128x128xf32>
    %11 = arith.maximumf %9, %10 : vector<128x128xf32>
    %12 = vector.shape_cast %11 : vector<128x128xf32> to vector<8x2048xf32>
    %13 = vector.extract_strided_slice %12 {offsets = [0, 0], sizes = [8, 1024], strides = [1, 1]} : vector<8x2048xf32> to vector<8x1024xf32>
    %14 = vector.extract_strided_slice %12 {offsets = [0, 1024], sizes = [8, 1024], strides = [1, 1]} : vector<8x2048xf32> to vector<8x1024xf32>
    %15 = arith.maximumf %13, %14 : vector<8x1024xf32>
    %c0_6 = arith.constant 0 : index
    %c0_7 = arith.constant 0 : index
    %16 = vector.load %arg4[%c0_6, %c0_7] : memref<1x1024xf32, #tpu.memory_space<vmem>>, vector<1x1024xf32>
    %17 = vector.broadcast %16 : vector<1x1024xf32> to vector<8x1024xf32>
    %18 = arith.mulf %15, %17 : vector<8x1024xf32>
    %19 = arith.truncf %18 : vector<8x1024xf32> to vector<8x1024xbf16>
    %c0_8 = arith.constant 0 : index
    %c0_9 = arith.constant 0 : index
    %20 = vector.load %arg5[%c0_8, %c0_9] : memref<8x1024xbf16, #tpu.memory_space<vmem>>, vector<8x1024xbf16>
    tpu.vector_store %arg5[%c0_8, %c0_9], %19 {strides = array<i32>} : memref<8x1024xbf16, #tpu.memory_space<vmem>>, vector<8x1024xbf16>,
    return
  }
  func.func @transform_0(%arg0: i32) -> (i32, i32) {
    %c0_i32 = arith.constant 0 : i32
    %c0_i32_0 = arith.constant 0 : i32
    return %arg0, %c0_i32 : i32, i32
  }
  func.func @transform_1(%arg0: i32) -> (i32, i32) {
    %c0_i32 = arith.constant 0 : i32
    %c0_i32_0 = arith.constant 0 : i32
    %c0_i32_1 = arith.constant 0 : i32
    return %c0_i32, %c0_i32_0 : i32, i32
  }
  func.func @transform_2(%arg0: i32) -> (i32, i32) {
    %c0_i32 = arith.constant 0 : i32
    %c0_i32_0 = arith.constant 0 : i32
    %c0_i32_1 = arith.constant 0 : i32
    return %c0_i32, %c0_i32_0 : i32, i32
  }
  func.func @transform_3(%arg0: i32) -> (i32, i32) {
    %c0_i32 = arith.constant 0 : i32
    %c0_i32_0 = arith.constant 0 : i32
    %c0_i32_1 = arith.constant 0 : i32
    return %c0_i32, %c0_i32_0 : i32, i32
  }
  func.func @transform_4(%arg0: i32) -> (i32, i32) {
    %c0_i32 = arith.constant 0 : i32
    %c0_i32_0 = arith.constant 0 : i32
    return %arg0, %c0_i32 : i32, i32
  }
}

module attributes {stable_mosaic.version = 11 : i64} {
  func.func @_fc_stack_kernel(%arg0: i32, %arg1: memref<2x2048xbf16, #tpu.memory_space<vmem>>, %arg2: memref<2048x256xbf16, #tpu.memory_space<vmem>>, %arg3: memref<1x256xf32, #tpu.memory_space<vmem>>, %arg4: memref<1x256xf32, #tpu.memory_space<vmem>>, %arg5: memref<256x256xbf16, #tpu.memory_space<vmem>>, %arg6: memref<1x256xf32, #tpu.memory_space<vmem>>, %arg7: memref<1x256xf32, #tpu.memory_space<vmem>>, %arg8: memref<256x128xbf16, #tpu.memory_space<vmem>>, %arg9: memref<1x128xf32, #tpu.memory_space<vmem>>, %arg10: memref<2x128xf32, #tpu.memory_space<vmem>>, %arg11: memref<2x256xf32, #tpu.memory_space<vmem>>) attributes {dimension_semantics = [#tpu.dimension_semantics<arbitrary>], iteration_bounds = array<i64: 4>, scalar_prefetch = 0 : i64, scratch_operands = 1 : i64, tpu.core_type = #tpu.core_type<tc>, window_params = [{transform_indices = @transform_0, window_bounds = array<i64: 2, 2048>}, {transform_indices = @transform_1, window_bounds = array<i64: 2048, 256>}, {pipeline_mode = #tpu.pipeline_mode<synchronous>, transform_indices = @transform_2, window_bounds = array<i64: 1, 256>}, {pipeline_mode = #tpu.pipeline_mode<synchronous>, transform_indices = @transform_3, window_bounds = array<i64: 1, 256>}, {pipeline_mode = #tpu.pipeline_mode<synchronous>, transform_indices = @transform_4, window_bounds = array<i64: 256, 256>}, {pipeline_mode = #tpu.pipeline_mode<synchronous>, transform_indices = @transform_5, window_bounds = array<i64: 1, 256>}, {pipeline_mode = #tpu.pipeline_mode<synchronous>, transform_indices = @transform_6, window_bounds = array<i64: 1, 256>}, {pipeline_mode = #tpu.pipeline_mode<synchronous>, transform_indices = @transform_7, window_bounds = array<i64: 256, 128>}, {pipeline_mode = #tpu.pipeline_mode<synchronous>, transform_indices = @transform_8, window_bounds = array<i64: 1, 128>}, {pipeline_mode = #tpu.pipeline_mode<synchronous>, transform_indices = @transform_9, window_bounds = array<i64: 2, 128>}]} {
    %c0_i32 = arith.constant 0 : i32
    %0 = arith.cmpi eq, %arg0, %c0_i32 : i32
    %1 = arith.extui %0 : i1 to i32
    %c0_i32_0 = arith.constant 0 : i32
    %2 = arith.cmpi ne, %1, %c0_i32_0 : i32
    scf.if %2 {
      %cst_9 = arith.constant 0.000000e+00 : f32
      %12 = vector.broadcast %cst_9 : f32 to vector<2x256xf32>
      %c0_10 = arith.constant 0 : index
      %c0_11 = arith.constant 0 : index
      %13 = vector.load %arg11[%c0_10, %c0_11] : memref<2x256xf32, #tpu.memory_space<vmem>>, vector<2x256xf32>
      tpu.vector_store %arg11[%c0_10, %c0_11], %12 {strides = array<i32>} : memref<2x256xf32, #tpu.memory_space<vmem>>, vector<2x256xf32>,
    } else {
    }
    %c0 = arith.constant 0 : index
    %c0_1 = arith.constant 0 : index
    %3 = vector.load %arg11[%c0, %c0_1] : memref<2x256xf32, #tpu.memory_space<vmem>>, vector<2x256xf32>
    %c0_2 = arith.constant 0 : index
    %c0_3 = arith.constant 0 : index
    %4 = vector.load %arg1[%c0_2, %c0_3] : memref<2x2048xbf16, #tpu.memory_space<vmem>>, vector<2x2048xbf16>
    %c0_4 = arith.constant 0 : index
    %c0_5 = arith.constant 0 : index
    %5 = vector.load %arg2[%c0_4, %c0_5] : memref<2048x256xbf16, #tpu.memory_space<vmem>>, vector<2048x256xbf16>
    %cst = arith.constant dense<0.000000e+00> : vector<2x256xf32>
    %6 = tpu.matmul %4, %5, %cst {dimension_numbers = #tpu.dot_dimension_numbers<[1], [0], [0], [1], [0, 0, 1, 1], [], []>} : vector<2x2048xbf16>, vector<2048x256xbf16>, vector<2x256xf32> -> vector<2x256xf32>
    %7 = arith.addf %3, %6 : vector<2x256xf32>
    %c0_6 = arith.constant 0 : index
    %c0_7 = arith.constant 0 : index
    %8 = vector.load %arg11[%c0_6, %c0_7] : memref<2x256xf32, #tpu.memory_space<vmem>>, vector<2x256xf32>
    tpu.vector_store %arg11[%c0_6, %c0_7], %7 {strides = array<i32>} : memref<2x256xf32, #tpu.memory_space<vmem>>, vector<2x256xf32>,
    %c3_i32 = arith.constant 3 : i32
    %9 = arith.cmpi eq, %arg0, %c3_i32 : i32
    %10 = arith.extui %9 : i1 to i32
    %c0_i32_8 = arith.constant 0 : i32
    %11 = arith.cmpi ne, %10, %c0_i32_8 : i32
    scf.if %11 {
      %c0_9 = arith.constant 0 : index
      %c0_10 = arith.constant 0 : index
      %12 = vector.load %arg11[%c0_9, %c0_10] : memref<2x256xf32, #tpu.memory_space<vmem>>, vector<2x256xf32>
      %c0_11 = arith.constant 0 : index
      %c0_12 = arith.constant 0 : index
      %13 = vector.load %arg3[%c0_11, %c0_12] : memref<1x256xf32, #tpu.memory_space<vmem>>, vector<1x256xf32>
      %14 = vector.broadcast %13 : vector<1x256xf32> to vector<2x256xf32>
      %15 = arith.addf %12, %14 : vector<2x256xf32>
      %cst_13 = arith.constant 0.000000e+00 : f32
      %16 = vector.broadcast %cst_13 : f32 to vector<2x256xf32>
      %17 = arith.maximumf %15, %16 : vector<2x256xf32>
      %c0_14 = arith.constant 0 : index
      %c0_15 = arith.constant 0 : index
      %18 = vector.load %arg4[%c0_14, %c0_15] : memref<1x256xf32, #tpu.memory_space<vmem>>, vector<1x256xf32>
      %19 = vector.broadcast %18 : vector<1x256xf32> to vector<2x256xf32>
      %20 = arith.mulf %17, %19 : vector<2x256xf32>
      %21 = arith.truncf %20 : vector<2x256xf32> to vector<2x256xbf16>
      %c0_16 = arith.constant 0 : index
      %c0_17 = arith.constant 0 : index
      %22 = vector.load %arg5[%c0_16, %c0_17] : memref<256x256xbf16, #tpu.memory_space<vmem>>, vector<256x256xbf16>
      %cst_18 = arith.constant dense<0.000000e+00> : vector<2x256xf32>
      %23 = tpu.matmul %21, %22, %cst_18 {dimension_numbers = #tpu.dot_dimension_numbers<[1], [0], [0], [1], [0, 0, 1, 1], [], []>} : vector<2x256xbf16>, vector<256x256xbf16>, vector<2x256xf32> -> vector<2x256xf32>
      %c0_19 = arith.constant 0 : index
      %c0_20 = arith.constant 0 : index
      %24 = vector.load %arg6[%c0_19, %c0_20] : memref<1x256xf32, #tpu.memory_space<vmem>>, vector<1x256xf32>
      %25 = vector.broadcast %24 : vector<1x256xf32> to vector<2x256xf32>
      %26 = arith.addf %23, %25 : vector<2x256xf32>
      %cst_21 = arith.constant 0.000000e+00 : f32
      %27 = vector.broadcast %cst_21 : f32 to vector<2x256xf32>
      %28 = arith.maximumf %26, %27 : vector<2x256xf32>
      %c0_22 = arith.constant 0 : index
      %c0_23 = arith.constant 0 : index
      %29 = vector.load %arg7[%c0_22, %c0_23] : memref<1x256xf32, #tpu.memory_space<vmem>>, vector<1x256xf32>
      %30 = vector.broadcast %29 : vector<1x256xf32> to vector<2x256xf32>
      %31 = arith.mulf %28, %30 : vector<2x256xf32>
      %32 = arith.truncf %31 : vector<2x256xf32> to vector<2x256xbf16>
      %c0_24 = arith.constant 0 : index
      %c0_25 = arith.constant 0 : index
      %33 = vector.load %arg8[%c0_24, %c0_25] : memref<256x128xbf16, #tpu.memory_space<vmem>>, vector<256x128xbf16>
      %cst_26 = arith.constant dense<0.000000e+00> : vector<2x128xf32>
      %34 = tpu.matmul %32, %33, %cst_26 {dimension_numbers = #tpu.dot_dimension_numbers<[1], [0], [0], [1], [0, 0, 1, 1], [], []>} : vector<2x256xbf16>, vector<256x128xbf16>, vector<2x128xf32> -> vector<2x128xf32>
      %c0_27 = arith.constant 0 : index
      %c0_28 = arith.constant 0 : index
      %35 = vector.load %arg9[%c0_27, %c0_28] : memref<1x128xf32, #tpu.memory_space<vmem>>, vector<1x128xf32>
      %36 = vector.broadcast %35 : vector<1x128xf32> to vector<2x128xf32>
      %37 = arith.addf %34, %36 : vector<2x128xf32>
      %c0_29 = arith.constant 0 : index
      %c0_30 = arith.constant 0 : index
      %38 = vector.load %arg10[%c0_29, %c0_30] : memref<2x128xf32, #tpu.memory_space<vmem>>, vector<2x128xf32>
      tpu.vector_store %arg10[%c0_29, %c0_30], %37 {strides = array<i32>} : memref<2x128xf32, #tpu.memory_space<vmem>>, vector<2x128xf32>,
    } else {
    }
    return
  }
  func.func @transform_0(%arg0: i32) -> (i32, i32) {
    %c0_i32 = arith.constant 0 : i32
    %c0_i32_0 = arith.constant 0 : i32
    return %c0_i32, %arg0 : i32, i32
  }
  func.func @transform_1(%arg0: i32) -> (i32, i32) {
    %c0_i32 = arith.constant 0 : i32
    %c0_i32_0 = arith.constant 0 : i32
    return %arg0, %c0_i32 : i32, i32
  }
  func.func @transform_2(%arg0: i32) -> (i32, i32) {
    %c0_i32 = arith.constant 0 : i32
    %c0_i32_0 = arith.constant 0 : i32
    %c0_i32_1 = arith.constant 0 : i32
    return %c0_i32, %c0_i32_0 : i32, i32
  }
  func.func @transform_3(%arg0: i32) -> (i32, i32) {
    %c0_i32 = arith.constant 0 : i32
    %c0_i32_0 = arith.constant 0 : i32
    %c0_i32_1 = arith.constant 0 : i32
    return %c0_i32, %c0_i32_0 : i32, i32
  }
  func.func @transform_4(%arg0: i32) -> (i32, i32) {
    %c0_i32 = arith.constant 0 : i32
    %c0_i32_0 = arith.constant 0 : i32
    %c0_i32_1 = arith.constant 0 : i32
    return %c0_i32, %c0_i32_0 : i32, i32
  }
  func.func @transform_5(%arg0: i32) -> (i32, i32) {
    %c0_i32 = arith.constant 0 : i32
    %c0_i32_0 = arith.constant 0 : i32
    %c0_i32_1 = arith.constant 0 : i32
    return %c0_i32, %c0_i32_0 : i32, i32
  }
  func.func @transform_6(%arg0: i32) -> (i32, i32) {
    %c0_i32 = arith.constant 0 : i32
    %c0_i32_0 = arith.constant 0 : i32
    %c0_i32_1 = arith.constant 0 : i32
    return %c0_i32, %c0_i32_0 : i32, i32
  }
  func.func @transform_7(%arg0: i32) -> (i32, i32) {
    %c0_i32 = arith.constant 0 : i32
    %c0_i32_0 = arith.constant 0 : i32
    %c0_i32_1 = arith.constant 0 : i32
    return %c0_i32, %c0_i32_0 : i32, i32
  }
  func.func @transform_8(%arg0: i32) -> (i32, i32) {
    %c0_i32 = arith.constant 0 : i32
    %c0_i32_0 = arith.constant 0 : i32
    %c0_i32_1 = arith.constant 0 : i32
    return %c0_i32, %c0_i32_0 : i32, i32
  }
  func.func @transform_9(%arg0: i32) -> (i32, i32) {
    %c0_i32 = arith.constant 0 : i32
    %c0_i32_0 = arith.constant 0 : i32
    %c0_i32_1 = arith.constant 0 : i32
    return %c0_i32, %c0_i32_0 : i32, i32
  }
}

</mosaic_0001>

<llo_original>
// kernel: _forward_impl.3
$region0: #{_forward_impl.3}
  #allocation0 [shape = 'u32[]', space=smem, size = 0x4, offset = 0x4, fixed_abs, tag = 'smem constant byte address 0x4 - core index']
  #allocation1 [shape = 'u32[72,128]{1,0:T(1,128)}', space=vmem, size = 0x9000, scoped, tag = 'internal scratch']
  %s0 = inlined_call_operand.vmem [shape: bf16[512,32], index: 0, kind: input, shape index: {}]
  %s1 = inlined_call_operand.hbm [shape: bf16[32,128], index: 1, kind: input, shape index: {}]
  %s2 = inlined_call_operand.hbm [shape: f32[1,128], index: 2, kind: input, shape index: {}]
  %s3 = inlined_call_operand.hbm [shape: f32[1,128], index: 3, kind: input, shape index: {}]
  %s4 = inlined_call_operand.vmem [shape: bf16[512,128], index: 4, kind: output, shape index: {}]
  %s5 = sld [smem:[#allocation0]]
  $region61: #{_forward_impl.3} parent=0
    _
  %s7 = ssub.s32 1, %s5
  %s8 = scalar_select 0, %s7, %s5
  $region1: #{_forward_impl.3} parent=0
    #allocation2 [shape = 'u8[8192]{0}', space=vmem, size = 0x2000, scoped, tag = 'input window, operand 1, single buffered']
    #allocation3 [shape = 's32[2]{0}', space=sflag, size = 0x8, scoped, tag = 'scoped memory for _forward_impl.3']
    #allocation4 [shape = 'u8[512]{0}', space=vmem, size = 0x400, scoped, tag = 'input window, operand 2, single buffered']
    #allocation5 [shape = 's32[1]{0}', space=sflag, size = 0x4, scoped, tag = 'scoped memory for _forward_impl.3']
    #allocation6 [shape = 'u8[512]{0}', space=vmem, size = 0x400, scoped, tag = 'input window, operand 3, single buffered']
    %9 = vsyncpa [#allocation3], 0
    %10 = vsyncpa [#allocation5], 0
    loop: start=0, step=1, limit=4
    $region2: #{_forward_impl.3} parent=1 // loop_pre_header
      _
    $region3: #{_forward_impl.3} parent=1 // loop_header
      %s12 = sphi 0, %s16
      %p13 = scmp.ge.s32.totalorder %s12, 4
      %s22 = sphi 0, %s24
      %s25 = sphi 0, %s22
      %s26 = sphi 0, %s25
      %s42 = sphi 0, %s26
      %s46 = sphi 0, %s46
      %s48 = sphi 0, %s46
      %s49 = sphi 0, %s48
      %s63 = sphi 0, %s49
      %s67 = sphi 0, %s67
      %s69 = sphi 0, %s67
      %s70 = sphi 0, %s69
      %s84 = sphi 0, %s70
      %s88 = sphi 0, %s88
      %s90 = sphi 0, %s88
      %s91 = sphi 0, %s90
      %s105 = sphi 0, %s91
      %s111 = sphi 0, %s113
      %s114 = sphi 0, %s111
      %s115 = sphi 0, %s114
      %s131 = sphi 0, %s115
    $region4: #{_forward_impl.3} parent=1 // loop_header_branch
      %15 = sbr.rel (%p13) target = $region8
    $region5: #{_forward_impl.3} parent=1 // loop_body
      %s17 = ssub.s32 %s12, 1
      %s18 = ssub.s32 %s12, 2
      %s19 = sadd.s32 %s12, 1
      %s20 = ssub.s32 %s12, %s19
      %p21 = scmp.eq.s32.totalorder %s20, 0
      %s23 = sadd.s32 %s22, 1
      %s24 = scalar_select %p21, %s22, %s23
      %p27 = pneg %p21
      %p28 = scmp.eq.s32.totalorder %s12, 1
      %p29 = por %p27, %p28
      %p30 = scmp.ne.s32.totalorder %s22, %s25
      %p31 = scmp.eq.s32.totalorder %s12, 0
      %p32 = por %p30, %p31
      %p33 = scmp.ne.s32.totalorder %s22, %s25
      %p34 = scmp.eq.s32.totalorder %s17, 1
      %p35 = por %p33, %p34
      %p36 = scmp.ne.s32.totalorder %s25, %s26
      %p37 = scmp.eq.s32.totalorder %s17, 0
      %p38 = por %p36, %p37
      %p39 = scmp.ne.s32.totalorder %s25, %s26
      %p40 = scmp.eq.s32.totalorder %s18, 1
      %p41 = por %p39, %p40
      %p43 = scmp.ne.s32.totalorder %s26, %s42
      %p44 = scmp.eq.s32.totalorder %s18, 0
      %p45 = por %p43, %p44
      %s47 = sadd.s32 %s46, 1
      %p50 = scmp.eq.s32.totalorder %s12, 1
      %p51 = scmp.ne.s32.totalorder %s46, %s48
      %p52 = scmp.eq.s32.totalorder %s12, 0
      %p53 = por %p51, %p52
      %p54 = scmp.ne.s32.totalorder %s46, %s48
      %p55 = scmp.eq.s32.totalorder %s17, 1
      %p56 = por %p54, %p55
      %p57 = scmp.ne.s32.totalorder %s48, %s49
      %p58 = scmp.eq.s32.totalorder %s17, 0
      %p59 = por %p57, %p58
      %p60 = scmp.ne.s32.totalorder %s48, %s49
      %p61 = scmp.eq.s32.totalorder %s18, 1
      %p62 = por %p60, %p61
      %p64 = scmp.ne.s32.totalorder %s49, %s63
      %p65 = scmp.eq.s32.totalorder %s18, 0
      %p66 = por %p64, %p65
      %s68 = sadd.s32 %s67, 1
      %p71 = scmp.eq.s32.totalorder %s12, 1
      %p72 = scmp.ne.s32.totalorder %s67, %s69
      %p73 = scmp.eq.s32.totalorder %s12, 0
      %p74 = por %p72, %p73
      %p75 = scmp.ne.s32.totalorder %s67, %s69
      %p76 = scmp.eq.s32.totalorder %s17, 1
      %p77 = por %p75, %p76
      %p78 = scmp.ne.s32.totalorder %s69, %s70
      %p79 = scmp.eq.s32.totalorder %s17, 0
      %p80 = por %p78, %p79
      %p81 = scmp.ne.s32.totalorder %s69, %s70
      %p82 = scmp.eq.s32.totalorder %s18, 1
      %p83 = por %p81, %p82
      %p85 = scmp.ne.s32.totalorder %s70, %s84
      %p86 = scmp.eq.s32.totalorder %s18, 0
      %p87 = por %p85, %p86
      %s89 = sadd.s32 %s88, 1
      %p92 = scmp.eq.s32.totalorder %s12, 1
      %p93 = scmp.ne.s32.totalorder %s88, %s90
      %p94 = scmp.eq.s32.totalorder %s12, 0
      %p95 = por %p93, %p94
      %p96 = scmp.ne.s32.totalorder %s88, %s90
      %p97 = scmp.eq.s32.totalorder %s17, 1
      %p98 = por %p96, %p97
      %p99 = scmp.ne.s32.totalorder %s90, %s91
      %p100 = scmp.eq.s32.totalorder %s17, 0
      %p101 = por %p99, %p100
      %p102 = scmp.ne.s32.totalorder %s90, %s91
      %p103 = scmp.eq.s32.totalorder %s18, 1
      %p104 = por %p102, %p103
      %p106 = scmp.ne.s32.totalorder %s91, %s105
      %p107 = scmp.eq.s32.totalorder %s18, 0
      %p108 = por %p106, %p107
      %s109 = ssub.s32 %s12, %s19
      %p110 = scmp.eq.s32.totalorder %s109, 0
      %s112 = sadd.s32 %s111, 1
      %s113 = scalar_select %p110, %s111, %s112
      %p116 = pneg %p110
      %p117 = scmp.eq.s32.totalorder %s12, 1
      %p118 = por %p116, %p117
      %p119 = scmp.ne.s32.totalorder %s111, %s114
      %p120 = scmp.eq.s32.totalorder %s12, 0
      %p121 = por %p119, %p120
      %p122 = scmp.ne.s32.totalorder %s111, %s114
      %p123 = scmp.eq.s32.totalorder %s17, 1
      %p124 = por %p122, %p123
      %p125 = scmp.ne.s32.totalorder %s114, %s115
      %p126 = scmp.eq.s32.totalorder %s17, 0
      %p127 = por %p125, %p126
      %p128 = scmp.ne.s32.totalorder %s114, %s115
      %p129 = scmp.eq.s32.totalorder %s18, 1
      %p130 = por %p128, %p129
      %p132 = scmp.ne.s32.totalorder %s115, %s131
      %p133 = scmp.eq.s32.totalorder %s18, 0
      %p134 = por %p132, %p133
      %p135 = scmp.le.s32.totalorder 1, %s12
      %p136 = scmp.lt.s32.totalorder %s12, 3
      %p137 = pnand %p135, %p136
      %p138 = pneg %p137
      // Predicated region
      $region9: #{_forward_impl.3} parent=5 // pred_check
        _
      $region10: #{_forward_impl.3} parent=5 // pred_check_branch
        %140 = sbr.rel (%p137) target = $region12
      $region11: #{_forward_impl.3} parent=5 // pred_region
        %s141 = ssub.s32 %s12, 1
        // Predicated region
        $region13: #{_forward_impl.3} parent=11 // pred_check
          %p142 = pneg %p59
        $region14: #{_forward_impl.3} parent=11 // pred_check_branch
          %144 = sbr.rel (%p142) target = $region16
        $region15: #{_forward_impl.3} parent=11 // pred_region
          %146 = vsyncadd [#allocation3], 0
          %s147 = sshll.u32 %s1, 4
          %s148 = int_to_ptr.hbm [resolvable:$true] %s147
          %s149 = sshll.u32 [#allocation2], 4
          %s150 = int_to_ptr.vmem [resolvable:$true] %s149
          %155 = dma.hbm_to_vmem [thread:$0]  %s148, 256, %s150, [#allocation3], 64, 64, 4
        $region16: #{_forward_impl.3} parent=11 // pred_fallthru
          _
        // Predicated region
        $region17: #{_forward_impl.3} parent=11 // pred_check
          %p156 = pneg %p80
        $region18: #{_forward_impl.3} parent=11 // pred_check_branch
          %158 = sbr.rel (%p156) target = $region20
        $region19: #{_forward_impl.3} parent=11 // pred_region
          %160 = vsyncadd [#allocation5], 0
          %s162 = sshll.u32 %s2, 4
          %s163 = int_to_ptr.hbm [resolvable:$true] %s162
          %s164 = sshll.u32 [#allocation4], 4
          %s165 = int_to_ptr.vmem [resolvable:$true] %s164
          %167 = dma.hbm_to_vmem [thread:$0]  %s163, 16, %s165, [#allocation5]
        $region20: #{_forward_impl.3} parent=11 // pred_fallthru
          _
        // Predicated region
        $region21: #{_forward_impl.3} parent=11 // pred_check
          %p168 = pneg %p101
        $region22: #{_forward_impl.3} parent=11 // pred_check_branch
          %170 = sbr.rel (%p168) target = $region24
        $region23: #{_forward_impl.3} parent=11 // pred_region
          %172 = vsyncadd [#allocation5], 0
          %s174 = sshll.u32 %s3, 4
          %s175 = int_to_ptr.hbm [resolvable:$true] %s174
          %s176 = sshll.u32 [#allocation6], 4
          %s177 = int_to_ptr.vmem [resolvable:$true] %s176
          %179 = dma.hbm_to_vmem [thread:$0]  %s175, 16, %s177, [#allocation5]
        $region24: #{_forward_impl.3} parent=11 // pred_fallthru
          _
      $region12: #{_forward_impl.3} parent=5 // pred_fallthru
        _
      %p180 = scmp.lt.s32.totalorder %s12, 2
      // Predicated region
      $region25: #{_forward_impl.3} parent=5 // pred_check
        %p181 = pneg %p180
      $region26: #{_forward_impl.3} parent=5 // pred_check_branch
        %183 = sbr.rel (%p181) target = $region28
      $region27: #{_forward_impl.3} parent=5 // pred_region
        // Predicated region
        $region29: #{_forward_impl.3} parent=27 // pred_check
          %p184 = pneg %p32
        $region30: #{_forward_impl.3} parent=27 // pred_check_branch
          %186 = sbr.rel (%p184) target = $region32
        $region31: #{_forward_impl.3} parent=27 // pred_region
          %s187 = smul.u32 32, %s12
          %p188 = scmp.lt.s32.totalorder %s187, 63
          %s189 = scalar_select %p188, %s187, 63
          %s190 = smul.addr %s189, 4
          %s191 = scalar_lea.vmem %s0, %s190
          %s192 = smul.u32 32, %s12
        $region32: #{_forward_impl.3} parent=27 // pred_fallthru
          _
      $region28: #{_forward_impl.3} parent=5 // pred_fallthru
        _
      %p193 = scmp.le.s32.totalorder 1, %s12
      %p194 = scmp.lt.s32.totalorder %s12, 3
      %p195 = pnand %p193, %p194
      %p196 = pneg %p195
      // Predicated region
      $region33: #{_forward_impl.3} parent=5 // pred_check
        _
      $region34: #{_forward_impl.3} parent=5 // pred_check_branch
        %198 = sbr.rel (%p195) target = $region36
      $region35: #{_forward_impl.3} parent=5 // pred_region
        %s199 = ssub.s32 %s12, 1
        // Predicated region
        $region37: #{_forward_impl.3} parent=35 // pred_check
          %p200 = pneg %p59
        $region38: #{_forward_impl.3} parent=35 // pred_check_branch
          %202 = sbr.rel (%p200) target = $region40
        $region39: #{_forward_impl.3} parent=35 // pred_region
          %204 = dma.done [#allocation3], 256
        $region40: #{_forward_impl.3} parent=35 // pred_fallthru
          _
        // Predicated region
        $region41: #{_forward_impl.3} parent=35 // pred_check
          %p205 = pneg %p80
        $region42: #{_forward_impl.3} parent=35 // pred_check_branch
          %207 = sbr.rel (%p205) target = $region44
        $region43: #{_forward_impl.3} parent=35 // pred_region
          %209 = dma.done [#allocation5], 16
        $region44: #{_forward_impl.3} parent=35 // pred_fallthru
          _
        // Predicated region
        $region45: #{_forward_impl.3} parent=35 // pred_check
          %p210 = pneg %p101
        $region46: #{_forward_impl.3} parent=35 // pred_check_branch
          %212 = sbr.rel (%p210) target = $region48
        $region47: #{_forward_impl.3} parent=35 // pred_region
          %214 = dma.done [#allocation5], 16
        $region48: #{_forward_impl.3} parent=35 // pred_fallthru
          _
        %s215 = smul.u32 32, %s17
        %p216 = scmp.lt.s32.totalorder %s215, 63
        %s217 = scalar_select %p216, %s215, 63
        %s218 = smul.addr %s217, 4
        %s219 = scalar_lea.vmem %s0, %s218
        %p220 = pneg %p38
        %p221 = pneg %p35
        %p222 = pneg %p59
        %p223 = pneg %p56
        %p224 = pneg %p80
        %p225 = pneg %p77
        %p226 = pneg %p101
        %p227 = pneg %p98
        %p228 = pneg %p127
        %p229 = pneg %p124
        %s230 = smul.u32 32, %s17
        %p231 = scmp.lt.s32.totalorder %s230, 63
        %s232 = scalar_select %p231, %s230, 63
        %s233 = smul.addr %s232, 4
        %s234 = scalar_lea.vmem %s4, %s233
        %s235 = smul.u32 32, %s17
        %p236 = scmp.lt.s32.totalorder %s235, 63
        %s237 = scalar_select %p236, %s235, 63
        %s238 = smul.addr %s237, 4
        %s239 = scalar_lea.vmem %s0, %s238
        %s240 = smul.u32 32, %s17
        %s241 = smul.u32 32, %s17
        %p242 = scmp.lt.s32.totalorder %s241, 63
        %s243 = scalar_select %p242, %s241, 63
        %s244 = smul.addr %s243, 4
        %s245 = scalar_lea.vmem %s4, %s244
        %s246 = smul.u32 32, %s17
        %v248 = vld [vmem:[%s239] sm:$0xf]
        %v249 = vld [vmem:[%s239 + $0x4] sm:$0xf]
        %v250 = vld [vmem:[%s239 + $0x8] sm:$0xf]
        %v251 = vld [vmem:[%s239 + $0xc] sm:$0xf]
        %v252 = vld [vmem:[%s239 + $0x10] sm:$0xf]
        %v253 = vld [vmem:[%s239 + $0x14] sm:$0xf]
        %v254 = vld [vmem:[%s239 + $0x18] sm:$0xf]
        %v255 = vld [vmem:[%s239 + $0x1c] sm:$0xf]
        %v256 = vld [vmem:[%s239 + $0x20] sm:$0xf]
        %v257 = vld [vmem:[%s239 + $0x24] sm:$0xf]
        %v258 = vld [vmem:[%s239 + $0x28] sm:$0xf]
        %v259 = vld [vmem:[%s239 + $0x2c] sm:$0xf]
        %v260 = vld [vmem:[%s239 + $0x30] sm:$0xf]
        %v261 = vld [vmem:[%s239 + $0x34] sm:$0xf]
        %v262 = vld [vmem:[%s239 + $0x38] sm:$0xf]
        %v263 = vld [vmem:[%s239 + $0x3c] sm:$0xf]
        %v264 = vld [vmem:[%s239 + $0x40] sm:$0xf]
        %v265 = vld [vmem:[%s239 + $0x44] sm:$0xf]
        %v266 = vld [vmem:[%s239 + $0x48] sm:$0xf]
        %v267 = vld [vmem:[%s239 + $0x4c] sm:$0xf]
        %v268 = vld [vmem:[%s239 + $0x50] sm:$0xf]
        %v269 = vld [vmem:[%s239 + $0x54] sm:$0xf]
        %v270 = vld [vmem:[%s239 + $0x58] sm:$0xf]
        %v271 = vld [vmem:[%s239 + $0x5c] sm:$0xf]
        %v272 = vld [vmem:[%s239 + $0x60] sm:$0xf]
        %v273 = vld [vmem:[%s239 + $0x64] sm:$0xf]
        %v274 = vld [vmem:[%s239 + $0x68] sm:$0xf]
        %v275 = vld [vmem:[%s239 + $0x6c] sm:$0xf]
        %v276 = vld [vmem:[%s239 + $0x70] sm:$0xf]
        %v277 = vld [vmem:[%s239 + $0x74] sm:$0xf]
        %v278 = vld [vmem:[%s239 + $0x78] sm:$0xf]
        %v279 = vld [vmem:[%s239 + $0x7c] sm:$0xf]
        %v280 = vld [vmem:[#allocation2] sm:$0xf]
        %v281 = vld [vmem:[#allocation2 + $0x4] sm:$0xf]
        %v282 = vld [vmem:[#allocation2 + $0x8] sm:$0xf]
        %v283 = vld [vmem:[#allocation2 + $0xc] sm:$0xf]
        %v284 = vld [vmem:[#allocation4] sm:$0x1]
        %v286 = vperm.slane %v284, 0
        %v320 = vunpack.c.l.b16 %v248
        %v321 = vunpack.c.l.b16 %v249
        %v322 = vunpack.c.l.b16 %v250
        %v323 = vunpack.c.l.b16 %v251
        %v324 = vunpack.c.l.b16 %v252
        %v325 = vunpack.c.l.b16 %v253
        %v326 = vunpack.c.l.b16 %v254
        %v327 = vunpack.c.l.b16 %v255
        %v328 = vunpack.c.l.b16 %v256
        %v329 = vunpack.c.l.b16 %v257
        %v330 = vunpack.c.l.b16 %v258
        %v331 = vunpack.c.l.b16 %v259
        %v332 = vunpack.c.l.b16 %v260
        %v333 = vunpack.c.l.b16 %v261
        %v334 = vunpack.c.l.b16 %v262
        %v335 = vunpack.c.l.b16 %v263
        %v336 = vunpack.c.l.b16 %v264
        %v337 = vunpack.c.l.b16 %v265
        %v338 = vunpack.c.l.b16 %v266
        %v339 = vunpack.c.l.b16 %v267
        %v340 = vunpack.c.l.b16 %v268
        %v341 = vunpack.c.l.b16 %v269
        %v342 = vunpack.c.l.b16 %v270
        %v343 = vunpack.c.l.b16 %v271
        %v344 = vunpack.c.l.b16 %v272
        %v345 = vunpack.c.l.b16 %v273
        %v346 = vunpack.c.l.b16 %v274
        %v347 = vunpack.c.l.b16 %v275
        %v348 = vunpack.c.l.b16 %v276
        %v349 = vunpack.c.l.b16 %v277
        %v350 = vunpack.c.l.b16 %v278
        %v351 = vunpack.c.l.b16 %v279
        %v352 = vpack.c.b16 %v321, %v320
        %v353 = vpack.c.b16 %v323, %v322
        %v354 = vpack.c.b16 %v325, %v324
        %v355 = vpack.c.b16 %v327, %v326
        %v356 = vpack.c.b16 %v329, %v328
        %v357 = vpack.c.b16 %v331, %v330
        %v358 = vpack.c.b16 %v333, %v332
        %v359 = vpack.c.b16 %v335, %v334
        %v360 = vpack.c.b16 %v337, %v336
        %v361 = vpack.c.b16 %v339, %v338
        %v362 = vpack.c.b16 %v341, %v340
        %v363 = vpack.c.b16 %v343, %v342
        %v364 = vpack.c.b16 %v345, %v344
        %v365 = vpack.c.b16 %v347, %v346
        %v366 = vpack.c.b16 %v349, %v348
        %v367 = vpack.c.b16 %v351, %v350
        %v372 = vunpack.c.l.b16 %v280
        %v373 = vunpack.c.l.b16 %v281
        %v374 = vunpack.c.l.b16 %v282
        %v375 = vunpack.c.l.b16 %v283
        %v376 = vpack.c.b16 %v373, %v372
        %v377 = vpack.c.b16 %v375, %v374
        %vm380 = vcmask 261120
        %v382 = vsel %vm380, %v352, 0
        %v385 = vsel %vm380, %v353, 0
        %v388 = vsel %vm380, %v354, 0
        %v391 = vsel %vm380, %v355, 0
        %v394 = vsel %vm380, %v356, 0
        %v397 = vsel %vm380, %v357, 0
        %v400 = vsel %vm380, %v358, 0
        %v403 = vsel %vm380, %v359, 0
        %v406 = vsel %vm380, %v360, 0
        %v409 = vsel %vm380, %v361, 0
        %v412 = vsel %vm380, %v362, 0
        %v415 = vsel %vm380, %v363, 0
        %v418 = vsel %vm380, %v364, 0
        %v421 = vsel %vm380, %v365, 0
        %v424 = vsel %vm380, %v366, 0
        %v427 = vsel %vm380, %v367, 0
        %429 = vmatpush.bf16.msra.mxu0 0
        %430 = vmatpush.bf16.msra.mxu0 0
        %431 = vmatpush.bf16.msra.mxu0 0
        %432 = vmatpush.bf16.msra.mxu0 0
        %433 = vmatpush.bf16.msra.mxu0 0
        %434 = vmatpush.bf16.msra.mxu0 0
        %435 = vmatpush.bf16.msra.mxu0 %v377
        %436 = vmatpush.bf16.msra.mxu0 %v376
        %437 = vmatmul.bf16.gmra.mxu0 %v382
        %v438 = vpop.f32.mrf.mxu0
        %v439 = vadd.f32 %v286, %v438
        %v440 = vpop.f32.mrf.mxu0
        %v441 = vadd.f32 %v286, %v440
        %442 = vmatmul.bf16.gmra.mxu0 %v385
        %v443 = vpop.f32.mrf.mxu0
        %v444 = vadd.f32 %v286, %v443
        %v445 = vpop.f32.mrf.mxu0
        %v446 = vadd.f32 %v286, %v445
        %447 = vmatmul.bf16.gmra.mxu0 %v388
        %v448 = vpop.f32.mrf.mxu0
        %v449 = vadd.f32 %v286, %v448
        %v450 = vpop.f32.mrf.mxu0
        %v451 = vadd.f32 %v286, %v450
        %452 = vmatmul.bf16.gmra.mxu0 %v391
        %v453 = vpop.f32.mrf.mxu0
        %v454 = vadd.f32 %v286, %v453
        %v455 = vpop.f32.mrf.mxu0
        %v456 = vadd.f32 %v286, %v455
        %457 = vmatmul.bf16.gmra.mxu0 %v394
        %v458 = vpop.f32.mrf.mxu0
        %v459 = vadd.f32 %v286, %v458
        %v460 = vpop.f32.mrf.mxu0
        %v461 = vadd.f32 %v286, %v460
        %462 = vmatmul.bf16.gmra.mxu0 %v397
        %v463 = vpop.f32.mrf.mxu0
        %v464 = vadd.f32 %v286, %v463
        %v465 = vpop.f32.mrf.mxu0
        %v466 = vadd.f32 %v286, %v465
        %467 = vmatmul.bf16.gmra.mxu0 %v400
        %v468 = vpop.f32.mrf.mxu0
        %v469 = vadd.f32 %v286, %v468
        %v470 = vpop.f32.mrf.mxu0
        %v471 = vadd.f32 %v286, %v470
        %472 = vmatmul.bf16.gmra.mxu0 %v403
        %v473 = vpop.f32.mrf.mxu0
        %v474 = vadd.f32 %v286, %v473
        %v475 = vpop.f32.mrf.mxu0
        %v476 = vadd.f32 %v286, %v475
        %477 = vmatmul.bf16.gmra.mxu0 %v406
        %v478 = vpop.f32.mrf.mxu0
        %v479 = vadd.f32 %v286, %v478
        %v480 = vpop.f32.mrf.mxu0
        %v481 = vadd.f32 %v286, %v480
        %482 = vmatmul.bf16.gmra.mxu0 %v409
        %v483 = vpop.f32.mrf.mxu0
        %v484 = vadd.f32 %v286, %v483
        %v485 = vpop.f32.mrf.mxu0
        %v486 = vadd.f32 %v286, %v485
        %487 = vmatmul.bf16.gmra.mxu0 %v412
        %v488 = vpop.f32.mrf.mxu0
        %v489 = vadd.f32 %v286, %v488
        %v490 = vpop.f32.mrf.mxu0
        %v491 = vadd.f32 %v286, %v490
        %492 = vmatmul.bf16.gmra.mxu0 %v415
        %v493 = vpop.f32.mrf.mxu0
        %v494 = vadd.f32 %v286, %v493
        %v495 = vpop.f32.mrf.mxu0
        %v496 = vadd.f32 %v286, %v495
        %497 = vmatmul.bf16.gmra.mxu0 %v418
        %v498 = vpop.f32.mrf.mxu0
        %v499 = vadd.f32 %v286, %v498
        %v500 = vpop.f32.mrf.mxu0
        %v501 = vadd.f32 %v286, %v500
        %502 = vmatmul.bf16.gmra.mxu0 %v421
        %v503 = vpop.f32.mrf.mxu0
        %v504 = vadd.f32 %v286, %v503
        %v505 = vpop.f32.mrf.mxu0
        %v506 = vadd.f32 %v286, %v505
        %507 = vmatmul.bf16.gmra.mxu0 %v424
        %v508 = vpop.f32.mrf.mxu0
        %v509 = vadd.f32 %v286, %v508
        %v510 = vpop.f32.mrf.mxu0
        %v511 = vadd.f32 %v286, %v510
        %512 = vmatmul.bf16.gmra.mxu0 %v427
        %v513 = vpop.f32.mrf.mxu0
        %v514 = vadd.f32 %v286, %v513
        %v515 = vpop.f32.mrf.mxu0
        %v516 = vadd.f32 %v286, %v515
        %517 = vdwg.mxu0
        %v518 = vmax.f32 %v439, 0.0
        %v519 = vmax.f32 %v441, 0.0
        %v520 = vmax.f32 %v444, 0.0
        %v521 = vmax.f32 %v446, 0.0
        %v522 = vmax.f32 %v449, 0.0
        %v523 = vmax.f32 %v451, 0.0
        %v524 = vmax.f32 %v454, 0.0
        %v525 = vmax.f32 %v456, 0.0
        %v526 = vmax.f32 %v459, 0.0
        %v527 = vmax.f32 %v461, 0.0
        %v528 = vmax.f32 %v464, 0.0
        %v529 = vmax.f32 %v466, 0.0
        %v530 = vmax.f32 %v469, 0.0
        %v531 = vmax.f32 %v471, 0.0
        %v532 = vmax.f32 %v474, 0.0
        %v533 = vmax.f32 %v476, 0.0
        %v534 = vmax.f32 %v479, 0.0
        %v535 = vmax.f32 %v481, 0.0
        %v536 = vmax.f32 %v484, 0.0
        %v537 = vmax.f32 %v486, 0.0
        %v538 = vmax.f32 %v489, 0.0
        %v539 = vmax.f32 %v491, 0.0
        %v540 = vmax.f32 %v494, 0.0
        %v541 = vmax.f32 %v496, 0.0
        %v542 = vmax.f32 %v499, 0.0
        %v543 = vmax.f32 %v501, 0.0
        %v544 = vmax.f32 %v504, 0.0
        %v545 = vmax.f32 %v506, 0.0
        %v546 = vmax.f32 %v509, 0.0
        %v547 = vmax.f32 %v511, 0.0
        %v548 = vmax.f32 %v514, 0.0
        %v549 = vmax.f32 %v516, 0.0
        %v550 = vld [vmem:[#allocation6] sm:$0x1]
        %v552 = vperm.slane %v550, 0
        %v554 = vmul.f32 %v518, %v552
        %v555 = vmul.f32 %v519, %v552
        %v556 = vmul.f32 %v520, %v552
        %v557 = vmul.f32 %v521, %v552
        %v558 = vmul.f32 %v522, %v552
        %v559 = vmul.f32 %v523, %v552
        %v560 = vmul.f32 %v524, %v552
        %v561 = vmul.f32 %v525, %v552
        %v562 = vmul.f32 %v526, %v552
        %v563 = vmul.f32 %v527, %v552
        %v564 = vmul.f32 %v528, %v552
        %v565 = vmul.f32 %v529, %v552
        %v566 = vmul.f32 %v530, %v552
        %v567 = vmul.f32 %v531, %v552
        %v568 = vmul.f32 %v532, %v552
        %v569 = vmul.f32 %v533, %v552
        %v570 = vmul.f32 %v534, %v552
        %v571 = vmul.f32 %v535, %v552
        %v572 = vmul.f32 %v536, %v552
        %v573 = vmul.f32 %v537, %v552
        %v574 = vmul.f32 %v538, %v552
        %v575 = vmul.f32 %v539, %v552
        %v576 = vmul.f32 %v540, %v552
        %v577 = vmul.f32 %v541, %v552
        %v578 = vmul.f32 %v542, %v552
        %v579 = vmul.f32 %v543, %v552
        %v580 = vmul.f32 %v544, %v552
        %v581 = vmul.f32 %v545, %v552
        %v582 = vmul.f32 %v546, %v552
        %v583 = vmul.f32 %v547, %v552
        %v584 = vmul.f32 %v548, %v552
        %v585 = vmul.f32 %v549, %v552
        %v586 = vpack.c.bf16 %v554, %v554
        %v587 = vpack.c.bf16 %v555, %v555
        %v588 = vpack.c.bf16 %v556, %v556
        %v589 = vpack.c.bf16 %v557, %v557
        %v590 = vpack.c.bf16 %v558, %v558
        %v591 = vpack.c.bf16 %v559, %v559
        %v592 = vpack.c.bf16 %v560, %v560
        %v593 = vpack.c.bf16 %v561, %v561
        %v594 = vpack.c.bf16 %v562, %v562
        %v595 = vpack.c.bf16 %v563, %v563
        %v596 = vpack.c.bf16 %v564, %v564
        %v597 = vpack.c.bf16 %v565, %v565
        %v598 = vpack.c.bf16 %v566, %v566
        %v599 = vpack.c.bf16 %v567, %v567
        %v600 = vpack.c.bf16 %v568, %v568
        %v601 = vpack.c.bf16 %v569, %v569
        %v602 = vpack.c.bf16 %v570, %v570
        %v603 = vpack.c.bf16 %v571, %v571
        %v604 = vpack.c.bf16 %v572, %v572
        %v605 = vpack.c.bf16 %v573, %v573
        %v606 = vpack.c.bf16 %v574, %v574
        %v607 = vpack.c.bf16 %v575, %v575
        %v608 = vpack.c.bf16 %v576, %v576
        %v609 = vpack.c.bf16 %v577, %v577
        %v610 = vpack.c.bf16 %v578, %v578
        %v611 = vpack.c.bf16 %v579, %v579
        %v612 = vpack.c.bf16 %v580, %v580
        %v613 = vpack.c.bf16 %v581, %v581
        %v614 = vpack.c.bf16 %v582, %v582
        %v615 = vpack.c.bf16 %v583, %v583
        %v616 = vpack.c.bf16 %v584, %v584
        %v617 = vpack.c.bf16 %v585, %v585
        %618 = vst [vmem:[%s245] sm:$0xf] %v586
        %619 = vst [vmem:[%s245 + $0x4] sm:$0xf] %v587
        %620 = vst [vmem:[%s245 + $0x8] sm:$0xf] %v588
        %621 = vst [vmem:[%s245 + $0xc] sm:$0xf] %v589
        %622 = vst [vmem:[%s245 + $0x10] sm:$0xf] %v590
        %623 = vst [vmem:[%s245 + $0x14] sm:$0xf] %v591
        %624 = vst [vmem:[%s245 + $0x18] sm:$0xf] %v592
        %625 = vst [vmem:[%s245 + $0x1c] sm:$0xf] %v593
        %626 = vst [vmem:[%s245 + $0x20] sm:$0xf] %v594
        %627 = vst [vmem:[%s245 + $0x24] sm:$0xf] %v595
        %628 = vst [vmem:[%s245 + $0x28] sm:$0xf] %v596
        %629 = vst [vmem:[%s245 + $0x2c] sm:$0xf] %v597
        %630 = vst [vmem:[%s245 + $0x30] sm:$0xf] %v598
        %631 = vst [vmem:[%s245 + $0x34] sm:$0xf] %v599
        %632 = vst [vmem:[%s245 + $0x38] sm:$0xf] %v600
        %633 = vst [vmem:[%s245 + $0x3c] sm:$0xf] %v601
        %634 = vst [vmem:[%s245 + $0x40] sm:$0xf] %v602
        %635 = vst [vmem:[%s245 + $0x44] sm:$0xf] %v603
        %636 = vst [vmem:[%s245 + $0x48] sm:$0xf] %v604
        %637 = vst [vmem:[%s245 + $0x4c] sm:$0xf] %v605
        %638 = vst [vmem:[%s245 + $0x50] sm:$0xf] %v606
        %639 = vst [vmem:[%s245 + $0x54] sm:$0xf] %v607
        %640 = vst [vmem:[%s245 + $0x58] sm:$0xf] %v608
        %641 = vst [vmem:[%s245 + $0x5c] sm:$0xf] %v609
        %642 = vst [vmem:[%s245 + $0x60] sm:$0xf] %v610
        %643 = vst [vmem:[%s245 + $0x64] sm:$0xf] %v611
        %644 = vst [vmem:[%s245 + $0x68] sm:$0xf] %v612
        %645 = vst [vmem:[%s245 + $0x6c] sm:$0xf] %v613
        %646 = vst [vmem:[%s245 + $0x70] sm:$0xf] %v614
        %647 = vst [vmem:[%s245 + $0x74] sm:$0xf] %v615
        %648 = vst [vmem:[%s245 + $0x78] sm:$0xf] %v616
        %649 = vst [vmem:[%s245 + $0x7c] sm:$0xf] %v617
        %s650 = smul.u32 32, %s17
        %p651 = scmp.lt.s32.totalorder %s650, 63
        %s652 = scalar_select %p651, %s650, 63
        %s653 = smul.addr %s652, 4
        %s654 = scalar_lea.vmem %s4, %s653
        // Predicated region
        $region49: #{_forward_impl.3} parent=35 // pred_check
          %p655 = pneg %p124
        $region50: #{_forward_impl.3} parent=35 // pred_check_branch
          %657 = sbr.rel (%p655) target = $region52
        $region51: #{_forward_impl.3} parent=35 // pred_region
          %s658 = smul.u32 32, %s17
        $region52: #{_forward_impl.3} parent=35 // pred_fallthru
          _
      $region36: #{_forward_impl.3} parent=5 // pred_fallthru
        _
      %p659 = scmp.le.s32.totalorder 2, %s12
      // Predicated region
      $region53: #{_forward_impl.3} parent=5 // pred_check
        %p660 = pneg %p659
      $region54: #{_forward_impl.3} parent=5 // pred_check_branch
        %662 = sbr.rel (%p660) target = $region56
      $region55: #{_forward_impl.3} parent=5 // pred_region
        %s663 = ssub.s32 %s12, 2
        // Predicated region
        $region57: #{_forward_impl.3} parent=55 // pred_check
          %p664 = pneg %p130
        $region58: #{_forward_impl.3} parent=55 // pred_check_branch
          %666 = sbr.rel (%p664) target = $region60
        $region59: #{_forward_impl.3} parent=55 // pred_region
          %s667 = smul.u32 32, %s18
          %p668 = scmp.lt.s32.totalorder %s667, 63
          %s669 = scalar_select %p668, %s667, 63
          %s670 = smul.addr %s669, 4
          %s671 = scalar_lea.vmem %s4, %s670
        $region60: #{_forward_impl.3} parent=55 // pred_fallthru
          _
      $region56: #{_forward_impl.3} parent=5 // pred_fallthru
        _
    $region6: #{_forward_impl.3} parent=1 // loop_footer
      %s16 = sadd.s32 1, %s12
    $region7: #{_forward_impl.3} parent=1 // loop_footer_branch
      %11 = sbr.rel target = $region3
    $region8: #{_forward_impl.3} parent=1 // loop_exit
      _
    %672 = vsyncpa [#allocation3], 1
    %s673 = scalar_lea.sflag [#allocation3], 1
    %674 = vsyncpa %s673, 1
    %675 = vsyncpa [#allocation5], 1

// kernel: _forward_impl.4
$region0: #{_forward_impl.4}
  #allocation0 [shape = 'u32[]', space=smem, size = 0x4, offset = 0x4, fixed_abs, tag = 'smem constant byte address 0x4 - core index']
  #allocation1 [shape = 'u32[72,128]{1,0:T(1,128)}', space=vmem, size = 0x9000, scoped, tag = 'internal scratch']
  %s0 = inlined_call_operand.vmem [shape: bf16[512,1152], index: 0, kind: input, shape index: {}]
  %s1 = inlined_call_operand.vmem [shape: bf16[1152,128], index: 1, kind: input, shape index: {}]
  %s2 = inlined_call_operand.vmem [shape: f32[1,128], index: 2, kind: input, shape index: {}]
  %s3 = inlined_call_operand.vmem [shape: f32[1,1024], index: 3, kind: input, shape index: {}]
  %s4 = inlined_call_operand.vmem [shape: bf16[16,1024], index: 4, kind: output, shape index: {}]
  %s5 = sld [smem:[#allocation0]]
  $region49: #{_forward_impl.4} parent=0
    _
  %s7 = ssub.s32 1, %s5
  %s8 = scalar_select 0, %s7, %s5
  loop: start=0, step=1, limit=4
  $region2: #{_forward_impl.4} parent=0 // loop_pre_header
    _
  $region3: #{_forward_impl.4} parent=0 // loop_header
    %s10 = sphi 0, %s14
    %p11 = scmp.ge.s32.totalorder %s10, 4
    %s20 = sphi 0, %s22
    %s23 = sphi 0, %s20
    %s24 = sphi 0, %s23
    %s40 = sphi 0, %s24
    %s44 = sphi 0, %s44
    %s46 = sphi 0, %s44
    %s47 = sphi 0, %s46
    %s61 = sphi 0, %s47
    %s65 = sphi 0, %s65
    %s67 = sphi 0, %s65
    %s68 = sphi 0, %s67
    %s82 = sphi 0, %s68
    %s86 = sphi 0, %s86
    %s88 = sphi 0, %s86
    %s89 = sphi 0, %s88
    %s103 = sphi 0, %s89
    %s109 = sphi 0, %s111
    %s112 = sphi 0, %s109
    %s113 = sphi 0, %s112
    %s129 = sphi 0, %s113
  $region4: #{_forward_impl.4} parent=0 // loop_header_branch
    %13 = sbr.rel (%p11) target = $region8
  $region5: #{_forward_impl.4} parent=0 // loop_body
    %s15 = ssub.s32 %s10, 1
    %s16 = ssub.s32 %s10, 2
    %s17 = sadd.s32 %s10, 1
    %s18 = ssub.s32 %s10, %s17
    %p19 = scmp.eq.s32.totalorder %s18, 0
    %s21 = sadd.s32 %s20, 1
    %s22 = scalar_select %p19, %s20, %s21
    %p25 = pneg %p19
    %p26 = scmp.eq.s32.totalorder %s10, 1
    %p27 = por %p25, %p26
    %p28 = scmp.ne.s32.totalorder %s20, %s23
    %p29 = scmp.eq.s32.totalorder %s10, 0
    %p30 = por %p28, %p29
    %p31 = scmp.ne.s32.totalorder %s20, %s23
    %p32 = scmp.eq.s32.totalorder %s15, 1
    %p33 = por %p31, %p32
    %p34 = scmp.ne.s32.totalorder %s23, %s24
    %p35 = scmp.eq.s32.totalorder %s15, 0
    %p36 = por %p34, %p35
    %p37 = scmp.ne.s32.totalorder %s23, %s24
    %p38 = scmp.eq.s32.totalorder %s16, 1
    %p39 = por %p37, %p38
    %p41 = scmp.ne.s32.totalorder %s24, %s40
    %p42 = scmp.eq.s32.totalorder %s16, 0
    %p43 = por %p41, %p42
    %s45 = sadd.s32 %s44, 1
    %p48 = scmp.eq.s32.totalorder %s10, 1
    %p49 = scmp.ne.s32.totalorder %s44, %s46
    %p50 = scmp.eq.s32.totalorder %s10, 0
    %p51 = por %p49, %p50
    %p52 = scmp.ne.s32.totalorder %s44, %s46
    %p53 = scmp.eq.s32.totalorder %s15, 1
    %p54 = por %p52, %p53
    %p55 = scmp.ne.s32.totalorder %s46, %s47
    %p56 = scmp.eq.s32.totalorder %s15, 0
    %p57 = por %p55, %p56
    %p58 = scmp.ne.s32.totalorder %s46, %s47
    %p59 = scmp.eq.s32.totalorder %s16, 1
    %p60 = por %p58, %p59
    %p62 = scmp.ne.s32.totalorder %s47, %s61
    %p63 = scmp.eq.s32.totalorder %s16, 0
    %p64 = por %p62, %p63
    %s66 = sadd.s32 %s65, 1
    %p69 = scmp.eq.s32.totalorder %s10, 1
    %p70 = scmp.ne.s32.totalorder %s65, %s67
    %p71 = scmp.eq.s32.totalorder %s10, 0
    %p72 = por %p70, %p71
    %p73 = scmp.ne.s32.totalorder %s65, %s67
    %p74 = scmp.eq.s32.totalorder %s15, 1
    %p75 = por %p73, %p74
    %p76 = scmp.ne.s32.totalorder %s67, %s68
    %p77 = scmp.eq.s32.totalorder %s15, 0
    %p78 = por %p76, %p77
    %p79 = scmp.ne.s32.totalorder %s67, %s68
    %p80 = scmp.eq.s32.totalorder %s16, 1
    %p81 = por %p79, %p80
    %p83 = scmp.ne.s32.totalorder %s68, %s82
    %p84 = scmp.eq.s32.totalorder %s16, 0
    %p85 = por %p83, %p84
    %s87 = sadd.s32 %s86, 1
    %p90 = scmp.eq.s32.totalorder %s10, 1
    %p91 = scmp.ne.s32.totalorder %s86, %s88
    %p92 = scmp.eq.s32.totalorder %s10, 0
    %p93 = por %p91, %p92
    %p94 = scmp.ne.s32.totalorder %s86, %s88
    %p95 = scmp.eq.s32.totalorder %s15, 1
    %p96 = por %p94, %p95
    %p97 = scmp.ne.s32.totalorder %s88, %s89
    %p98 = scmp.eq.s32.totalorder %s15, 0
    %p99 = por %p97, %p98
    %p100 = scmp.ne.s32.totalorder %s88, %s89
    %p101 = scmp.eq.s32.totalorder %s16, 1
    %p102 = por %p100, %p101
    %p104 = scmp.ne.s32.totalorder %s89, %s103
    %p105 = scmp.eq.s32.totalorder %s16, 0
    %p106 = por %p104, %p105
    %s107 = ssub.s32 %s10, %s17
    %p108 = scmp.eq.s32.totalorder %s107, 0
    %s110 = sadd.s32 %s109, 1
    %s111 = scalar_select %p108, %s109, %s110
    %p114 = pneg %p108
    %p115 = scmp.eq.s32.totalorder %s10, 1
    %p116 = por %p114, %p115
    %p117 = scmp.ne.s32.totalorder %s109, %s112
    %p118 = scmp.eq.s32.totalorder %s10, 0
    %p119 = por %p117, %p118
    %p120 = scmp.ne.s32.totalorder %s109, %s112
    %p121 = scmp.eq.s32.totalorder %s15, 1
    %p122 = por %p120, %p121
    %p123 = scmp.ne.s32.totalorder %s112, %s113
    %p124 = scmp.eq.s32.totalorder %s15, 0
    %p125 = por %p123, %p124
    %p126 = scmp.ne.s32.totalorder %s112, %s113
    %p127 = scmp.eq.s32.totalorder %s16, 1
    %p128 = por %p126, %p127
    %p130 = scmp.ne.s32.totalorder %s113, %s129
    %p131 = scmp.eq.s32.totalorder %s16, 0
    %p132 = por %p130, %p131
    %p133 = scmp.le.s32.totalorder 1, %s10
    %p134 = scmp.lt.s32.totalorder %s10, 3
    %p135 = pnand %p133, %p134
    %p136 = pneg %p135
    // Predicated region
    $region9: #{_forward_impl.4} parent=5 // pred_check
      _
    $region10: #{_forward_impl.4} parent=5 // pred_check_branch
      %138 = sbr.rel (%p135) target = $region12
    $region11: #{_forward_impl.4} parent=5 // pred_region
      %s139 = ssub.s32 %s10, 1
      // Predicated region
      $region13: #{_forward_impl.4} parent=11 // pred_check
        %p140 = pneg %p57
      $region14: #{_forward_impl.4} parent=11 // pred_check_branch
        %142 = sbr.rel (%p140) target = $region16
      $region15: #{_forward_impl.4} parent=11 // pred_region
        _
      $region16: #{_forward_impl.4} parent=11 // pred_fallthru
        _
      // Predicated region
      $region17: #{_forward_impl.4} parent=11 // pred_check
        %p143 = pneg %p78
      $region18: #{_forward_impl.4} parent=11 // pred_check_branch
        %145 = sbr.rel (%p143) target = $region20
      $region19: #{_forward_impl.4} parent=11 // pred_region
        _
      $region20: #{_forward_impl.4} parent=11 // pred_fallthru
        _
      // Predicated region
      $region21: #{_forward_impl.4} parent=11 // pred_check
        %p146 = pneg %p99
      $region22: #{_forward_impl.4} parent=11 // pred_check_branch
        %148 = sbr.rel (%p146) target = $region24
      $region23: #{_forward_impl.4} parent=11 // pred_region
        _
      $region24: #{_forward_impl.4} parent=11 // pred_fallthru
        _
    $region12: #{_forward_impl.4} parent=5 // pred_fallthru
      _
    %p149 = scmp.lt.s32.totalorder %s10, 2
    // Predicated region
    $region25: #{_forward_impl.4} parent=5 // pred_check
      %p150 = pneg %p149
    $region26: #{_forward_impl.4} parent=5 // pred_check_branch
      %152 = sbr.rel (%p150) target = $region28
    $region27: #{_forward_impl.4} parent=5 // pred_region
      // Predicated region
      $region29: #{_forward_impl.4} parent=27 // pred_check
        %p153 = pneg %p30
      $region30: #{_forward_impl.4} parent=27 // pred_check_branch
        %155 = sbr.rel (%p153) target = $region32
      $region31: #{_forward_impl.4} parent=27 // pred_region
        %s156 = smul.u32 32, %s10
        %p157 = scmp.lt.s32.totalorder %s156, 63
        %s158 = scalar_select %p157, %s156, 63
        %s159 = smul.addr %s158, 9
        %s160 = smul.addr %s159, 4
        %s161 = scalar_lea.vmem %s0, %s160
        %s162 = smul.u32 32, %s10
      $region32: #{_forward_impl.4} parent=27 // pred_fallthru
        _
    $region28: #{_forward_impl.4} parent=5 // pred_fallthru
      _
    %p163 = scmp.le.s32.totalorder 1, %s10
    %p164 = scmp.lt.s32.totalorder %s10, 3
    %p165 = pnand %p163, %p164
    %p166 = pneg %p165
    // Predicated region
    $region33: #{_forward_impl.4} parent=5 // pred_check
      _
    $region34: #{_forward_impl.4} parent=5 // pred_check_branch
      %168 = sbr.rel (%p165) target = $region36
    $region35: #{_forward_impl.4} parent=5 // pred_region
      %s169 = ssub.s32 %s10, 1
      %s170 = smul.u32 32, %s15
      %p171 = scmp.lt.s32.totalorder %s170, 63
      %s172 = scalar_select %p171, %s170, 63
      %s173 = smul.addr %s172, 9
      %s174 = smul.addr %s173, 4
      %s175 = scalar_lea.vmem %s0, %s174
      %p176 = pneg %p36
      %p177 = pneg %p33
      %p178 = pneg %p57
      %p179 = pneg %p54
      %p180 = pneg %p78
      %p181 = pneg %p75
      %p182 = pneg %p99
      %p183 = pneg %p96
      %p184 = pneg %p125
      %p185 = pneg %p122
      %p186 = scmp.lt.s32.totalorder %s15, 1
      %s187 = scalar_select %p186, %s15, 1
      %s188 = smul.addr %s187, 8
      %s189 = smul.addr %s188, 4
      %s190 = scalar_lea.vmem %s4, %s189
      %s191 = smul.u32 32, %s15
      %p192 = scmp.lt.s32.totalorder %s191, 63
      %s193 = scalar_select %p192, %s191, 63
      %s194 = smul.addr %s193, 9
      %s195 = smul.addr %s194, 4
      %s196 = scalar_lea.vmem %s0, %s195
      %s197 = smul.u32 32, %s15
      %p198 = scmp.lt.s32.totalorder %s15, 1
      %s199 = scalar_select %p198, %s15, 1
      %s200 = smul.addr %s199, 8
      %s201 = smul.addr %s200, 4
      %s202 = scalar_lea.vmem %s4, %s201
      %v203 = vld [vmem:[%s196] sm:$0xff]
      %v204 = vld [vmem:[%s196 + $0x8] sm:$0xff]
      %v205 = vld [vmem:[%s196 + $0x10] sm:$0xff]
      %v206 = vld [vmem:[%s196 + $0x18] sm:$0xff]
      %v207 = vld [vmem:[%s196 + $0x20] sm:$0xf]
      %v208 = vld [vmem:[%s196 + $0x24] sm:$0xff]
      %v209 = vld [vmem:[%s196 + $0x2c] sm:$0xff]
      %v210 = vld [vmem:[%s196 + $0x34] sm:$0xff]
      %v211 = vld [vmem:[%s196 + $0x3c] sm:$0xff]
      %v212 = vld [vmem:[%s196 + $0x44] sm:$0xf]
      %v213 = vld [vmem:[%s196 + $0x48] sm:$0xff]
      %v214 = vld [vmem:[%s196 + $0x50] sm:$0xff]
      %v215 = vld [vmem:[%s196 + $0x58] sm:$0xff]
      %v216 = vld [vmem:[%s196 + $0x60] sm:$0xff]
      %v217 = vld [vmem:[%s196 + $0x68] sm:$0xf]
      %v218 = vld [vmem:[%s196 + $0x6c] sm:$0xff]
      %v219 = vld [vmem:[%s196 + $0x74] sm:$0xff]
      %v220 = vld [vmem:[%s196 + $0x7c] sm:$0xff]
      %v221 = vld [vmem:[%s196 + $0x84] sm:$0xff]
      %v222 = vld [vmem:[%s196 + $0x8c] sm:$0xf]
      %v223 = vld [vmem:[%s196 + $0x90] sm:$0xff]
      %v224 = vld [vmem:[%s196 + $0x98] sm:$0xff]
      %v225 = vld [vmem:[%s196 + $0xa0] sm:$0xff]
      %v226 = vld [vmem:[%s196 + $0xa8] sm:$0xff]
      %v227 = vld [vmem:[%s196 + $0xb0] sm:$0xf]
      %v228 = vld [vmem:[%s196 + $0xb4] sm:$0xff]
      %v229 = vld [vmem:[%s196 + $0xbc] sm:$0xff]
      %v230 = vld [vmem:[%s196 + $0xc4] sm:$0xff]
      %v231 = vld [vmem:[%s196 + $0xcc] sm:$0xff]
      %v232 = vld [vmem:[%s196 + $0xd4] sm:$0xf]
      %v233 = vld [vmem:[%s196 + $0xd8] sm:$0xff]
      %v234 = vld [vmem:[%s196 + $0xe0] sm:$0xff]
      %v235 = vld [vmem:[%s196 + $0xe8] sm:$0xff]
      %v236 = vld [vmem:[%s196 + $0xf0] sm:$0xff]
      %v237 = vld [vmem:[%s196 + $0xf8] sm:$0xf]
      %v238 = vld [vmem:[%s196 + $0xfc] sm:$0xff]
      %v239 = vld [vmem:[%s196 + $0x104] sm:$0xff]
      %v240 = vld [vmem:[%s196 + $0x10c] sm:$0xff]
      %v241 = vld [vmem:[%s196 + $0x114] sm:$0xff]
      %v242 = vld [vmem:[%s196 + $0x11c] sm:$0xf]
      %v243 = vld [vmem:[%s196 + $0x120] sm:$0xff]
      %v244 = vld [vmem:[%s196 + $0x128] sm:$0xff]
      %v245 = vld [vmem:[%s196 + $0x130] sm:$0xff]
      %v246 = vld [vmem:[%s196 + $0x138] sm:$0xff]
      %v247 = vld [vmem:[%s196 + $0x140] sm:$0xf]
      %v248 = vld [vmem:[%s196 + $0x144] sm:$0xff]
      %v249 = vld [vmem:[%s196 + $0x14c] sm:$0xff]
      %v250 = vld [vmem:[%s196 + $0x154] sm:$0xff]
      %v251 = vld [vmem:[%s196 + $0x15c] sm:$0xff]
      %v252 = vld [vmem:[%s196 + $0x164] sm:$0xf]
      %v253 = vld [vmem:[%s196 + $0x168] sm:$0xff]
      %v254 = vld [vmem:[%s196 + $0x170] sm:$0xff]
      %v255 = vld [vmem:[%s196 + $0x178] sm:$0xff]
      %v256 = vld [vmem:[%s196 + $0x180] sm:$0xff]
      %v257 = vld [vmem:[%s196 + $0x188] sm:$0xf]
      %v258 = vld [vmem:[%s196 + $0x18c] sm:$0xff]
      %v259 = vld [vmem:[%s196 + $0x194] sm:$0xff]
      %v260 = vld [vmem:[%s196 + $0x19c] sm:$0xff]
      %v261 = vld [vmem:[%s196 + $0x1a4] sm:$0xff]
      %v262 = vld [vmem:[%s196 + $0x1ac] sm:$0xf]
      %v263 = vld [vmem:[%s196 + $0x1b0] sm:$0xff]
      %v264 = vld [vmem:[%s196 + $0x1b8] sm:$0xff]
      %v265 = vld [vmem:[%s196 + $0x1c0] sm:$0xff]
      %v266 = vld [vmem:[%s196 + $0x1c8] sm:$0xff]
      %v267 = vld [vmem:[%s196 + $0x1d0] sm:$0xf]
      %v268 = vld [vmem:[%s196 + $0x1d4] sm:$0xff]
      %v269 = vld [vmem:[%s196 + $0x1dc] sm:$0xff]
      %v270 = vld [vmem:[%s196 + $0x1e4] sm:$0xff]
      %v271 = vld [vmem:[%s196 + $0x1ec] sm:$0xff]
      %v272 = vld [vmem:[%s196 + $0x1f4] sm:$0xf]
      %v273 = vld [vmem:[%s196 + $0x1f8] sm:$0xff]
      %v274 = vld [vmem:[%s196 + $0x200] sm:$0xff]
      %v275 = vld [vmem:[%s196 + $0x208] sm:$0xff]
      %v276 = vld [vmem:[%s196 + $0x210] sm:$0xff]
      %v277 = vld [vmem:[%s196 + $0x218] sm:$0xf]
      %v278 = vld [vmem:[%s196 + $0x21c] sm:$0xff]
      %v279 = vld [vmem:[%s196 + $0x224] sm:$0xff]
      %v280 = vld [vmem:[%s196 + $0x22c] sm:$0xff]
      %v281 = vld [vmem:[%s196 + $0x234] sm:$0xff]
      %v282 = vld [vmem:[%s196 + $0x23c] sm:$0xf]
      %v283 = vld [vmem:[%s196 + $0x240] sm:$0xff]
      %v284 = vld [vmem:[%s196 + $0x248] sm:$0xff]
      %v285 = vld [vmem:[%s196 + $0x250] sm:$0xff]
      %v286 = vld [vmem:[%s196 + $0x258] sm:$0xff]
      %v287 = vld [vmem:[%s196 + $0x260] sm:$0xf]
      %v288 = vld [vmem:[%s196 + $0x264] sm:$0xff]
      %v289 = vld [vmem:[%s196 + $0x26c] sm:$0xff]
      %v290 = vld [vmem:[%s196 + $0x274] sm:$0xff]
      %v291 = vld [vmem:[%s196 + $0x27c] sm:$0xff]
      %v292 = vld [vmem:[%s196 + $0x284] sm:$0xf]
      %v293 = vld [vmem:[%s196 + $0x288] sm:$0xff]
      %v294 = vld [vmem:[%s196 + $0x290] sm:$0xff]
      %v295 = vld [vmem:[%s196 + $0x298] sm:$0xff]
      %v296 = vld [vmem:[%s196 + $0x2a0] sm:$0xff]
      %v297 = vld [vmem:[%s196 + $0x2a8] sm:$0xf]
      %v298 = vld [vmem:[%s196 + $0x2ac] sm:$0xff]
      %v299 = vld [vmem:[%s196 + $0x2b4] sm:$0xff]
      %v300 = vld [vmem:[%s196 + $0x2bc] sm:$0xff]
      %v301 = vld [vmem:[%s196 + $0x2c4] sm:$0xff]
      %v302 = vld [vmem:[%s196 + $0x2cc] sm:$0xf]
      %v303 = vld [vmem:[%s196 + $0x2d0] sm:$0xff]
      %v304 = vld [vmem:[%s196 + $0x2d8] sm:$0xff]
      %v305 = vld [vmem:[%s196 + $0x2e0] sm:$0xff]
      %v306 = vld [vmem:[%s196 + $0x2e8] sm:$0xff]
      %v307 = vld [vmem:[%s196 + $0x2f0] sm:$0xf]
      %v308 = vld [vmem:[%s196 + $0x2f4] sm:$0xff]
      %v309 = vld [vmem:[%s196 + $0x2fc] sm:$0xff]
      %v310 = vld [vmem:[%s196 + $0x304] sm:$0xff]
      %v311 = vld [vmem:[%s196 + $0x30c] sm:$0xff]
      %v312 = vld [vmem:[%s196 + $0x314] sm:$0xf]
      %v313 = vld [vmem:[%s196 + $0x318] sm:$0xff]
      %v314 = vld [vmem:[%s196 + $0x320] sm:$0xff]
      %v315 = vld [vmem:[%s196 + $0x328] sm:$0xff]
      %v316 = vld [vmem:[%s196 + $0x330] sm:$0xff]
      %v317 = vld [vmem:[%s196 + $0x338] sm:$0xf]
      %v318 = vld [vmem:[%s196 + $0x33c] sm:$0xff]
      %v319 = vld [vmem:[%s196 + $0x344] sm:$0xff]
      %v320 = vld [vmem:[%s196 + $0x34c] sm:$0xff]
      %v321 = vld [vmem:[%s196 + $0x354] sm:$0xff]
      %v322 = vld [vmem:[%s196 + $0x35c] sm:$0xf]
      %v323 = vld [vmem:[%s196 + $0x360] sm:$0xff]
      %v324 = vld [vmem:[%s196 + $0x368] sm:$0xff]
      %v325 = vld [vmem:[%s196 + $0x370] sm:$0xff]
      %v326 = vld [vmem:[%s196 + $0x378] sm:$0xff]
      %v327 = vld [vmem:[%s196 + $0x380] sm:$0xf]
      %v328 = vld [vmem:[%s196 + $0x384] sm:$0xff]
      %v329 = vld [vmem:[%s196 + $0x38c] sm:$0xff]
      %v330 = vld [vmem:[%s196 + $0x394] sm:$0xff]
      %v331 = vld [vmem:[%s196 + $0x39c] sm:$0xff]
      %v332 = vld [vmem:[%s196 + $0x3a4] sm:$0xf]
      %v333 = vld [vmem:[%s196 + $0x3a8] sm:$0xff]
      %v334 = vld [vmem:[%s196 + $0x3b0] sm:$0xff]
      %v335 = vld [vmem:[%s196 + $0x3b8] sm:$0xff]
      %v336 = vld [vmem:[%s196 + $0x3c0] sm:$0xff]
      %v337 = vld [vmem:[%s196 + $0x3c8] sm:$0xf]
      %v338 = vld [vmem:[%s196 + $0x3cc] sm:$0xff]
      %v339 = vld [vmem:[%s196 + $0x3d4] sm:$0xff]
      %v340 = vld [vmem:[%s196 + $0x3dc] sm:$0xff]
      %v341 = vld [vmem:[%s196 + $0x3e4] sm:$0xff]
      %v342 = vld [vmem:[%s196 + $0x3ec] sm:$0xf]
      %v343 = vld [vmem:[%s196 + $0x3f0] sm:$0xff]
      %v344 = vld [vmem:[%s196 + $0x3f8] sm:$0xff]
      %v345 = vld [vmem:[%s196 + $0x400] sm:$0xff]
      %v346 = vld [vmem:[%s196 + $0x408] sm:$0xff]
      %v347 = vld [vmem:[%s196 + $0x410] sm:$0xf]
      %v348 = vld [vmem:[%s196 + $0x414] sm:$0xff]
      %v349 = vld [vmem:[%s196 + $0x41c] sm:$0xff]
      %v350 = vld [vmem:[%s196 + $0x424] sm:$0xff]
      %v351 = vld [vmem:[%s196 + $0x42c] sm:$0xff]
      %v352 = vld [vmem:[%s196 + $0x434] sm:$0xf]
      %v353 = vld [vmem:[%s196 + $0x438] sm:$0xff]
      %v354 = vld [vmem:[%s196 + $0x440] sm:$0xff]
      %v355 = vld [vmem:[%s196 + $0x448] sm:$0xff]
      %v356 = vld [vmem:[%s196 + $0x450] sm:$0xff]
      %v357 = vld [vmem:[%s196 + $0x458] sm:$0xf]
      %v358 = vld [vmem:[%s196 + $0x45c] sm:$0xff]
      %v359 = vld [vmem:[%s196 + $0x464] sm:$0xff]
      %v360 = vld [vmem:[%s196 + $0x46c] sm:$0xff]
      %v361 = vld [vmem:[%s196 + $0x474] sm:$0xff]
      %v362 = vld [vmem:[%s196 + $0x47c] sm:$0xf]
      %v363 = vld [vmem:[%s1] sm:$0xf]
      %v364 = vld [vmem:[%s1 + $0x4] sm:$0xf]
      %v365 = vld [vmem:[%s1 + $0x8] sm:$0xf]
      %v366 = vld [vmem:[%s1 + $0xc] sm:$0xf]
      %v367 = vld [vmem:[%s1 + $0x10] sm:$0xf]
      %v368 = vld [vmem:[%s1 + $0x14] sm:$0xf]
      %v369 = vld [vmem:[%s1 + $0x18] sm:$0xf]
      %v370 = vld [vmem:[%s1 + $0x1c] sm:$0xf]
      %v371 = vld [vmem:[%s1 + $0x20] sm:$0xf]
      %v372 = vld [vmem:[%s1 + $0x24] sm:$0xf]
      %v373 = vld [vmem:[%s1 + $0x28] sm:$0xf]
      %v374 = vld [vmem:[%s1 + $0x2c] sm:$0xf]
      %v375 = vld [vmem:[%s1 + $0x30] sm:$0xf]
      %v376 = vld [vmem:[%s1 + $0x34] sm:$0xf]
      %v377 = vld [vmem:[%s1 + $0x38] sm:$0xf]
      %v378 = vld [vmem:[%s1 + $0x3c] sm:$0xf]
      %v379 = vld [vmem:[%s1 + $0x40] sm:$0xf]
      %v380 = vld [vmem:[%s1 + $0x44] sm:$0xf]
      %v381 = vld [vmem:[%s1 + $0x48] sm:$0xf]
      %v382 = vld [vmem:[%s1 + $0x4c] sm:$0xf]
      %v383 = vld [vmem:[%s1 + $0x50] sm:$0xf]
      %v384 = vld [vmem:[%s1 + $0x54] sm:$0xf]
      %v385 = vld [vmem:[%s1 + $0x58] sm:$0xf]
      %v386 = vld [vmem:[%s1 + $0x5c] sm:$0xf]
      %v387 = vld [vmem:[%s1 + $0x60] sm:$0xf]
      %v388 = vld [vmem:[%s1 + $0x64] sm:$0xf]
      %v389 = vld [vmem:[%s1 + $0x68] sm:$0xf]
      %v390 = vld [vmem:[%s1 + $0x6c] sm:$0xf]
      %v391 = vld [vmem:[%s1 + $0x70] sm:$0xf]
      %v392 = vld [vmem:[%s1 + $0x74] sm:$0xf]
      %v393 = vld [vmem:[%s1 + $0x78] sm:$0xf]
      %v394 = vld [vmem:[%s1 + $0x7c] sm:$0xf]
      %v395 = vld [vmem:[%s1 + $0x80] sm:$0xf]
      %v396 = vld [vmem:[%s1 + $0x84] sm:$0xf]
      %v397 = vld [vmem:[%s1 + $0x88] sm:$0xf]
      %v398 = vld [vmem:[%s1 + $0x8c] sm:$0xf]
      %v399 = vld [vmem:[%s1 + $0x90] sm:$0xf]
      %v400 = vld [vmem:[%s1 + $0x94] sm:$0xf]
      %v401 = vld [vmem:[%s1 + $0x98] sm:$0xf]
      %v402 = vld [vmem:[%s1 + $0x9c] sm:$0xf]
      %v403 = vld [vmem:[%s1 + $0xa0] sm:$0xf]
      %v404 = vld [vmem:[%s1 + $0xa4] sm:$0xf]
      %v405 = vld [vmem:[%s1 + $0xa8] sm:$0xf]
      %v406 = vld [vmem:[%s1 + $0xac] sm:$0xf]
      %v407 = vld [vmem:[%s1 + $0xb0] sm:$0xf]
      %v408 = vld [vmem:[%s1 + $0xb4] sm:$0xf]
      %v409 = vld [vmem:[%s1 + $0xb8] sm:$0xf]
      %v410 = vld [vmem:[%s1 + $0xbc] sm:$0xf]
      %v411 = vld [vmem:[%s1 + $0xc0] sm:$0xf]
      %v412 = vld [vmem:[%s1 + $0xc4] sm:$0xf]
      %v413 = vld [vmem:[%s1 + $0xc8] sm:$0xf]
      %v414 = vld [vmem:[%s1 + $0xcc] sm:$0xf]
      %v415 = vld [vmem:[%s1 + $0xd0] sm:$0xf]
      %v416 = vld [vmem:[%s1 + $0xd4] sm:$0xf]
      %v417 = vld [vmem:[%s1 + $0xd8] sm:$0xf]
      %v418 = vld [vmem:[%s1 + $0xdc] sm:$0xf]
      %v419 = vld [vmem:[%s1 + $0xe0] sm:$0xf]
      %v420 = vld [vmem:[%s1 + $0xe4] sm:$0xf]
      %v421 = vld [vmem:[%s1 + $0xe8] sm:$0xf]
      %v422 = vld [vmem:[%s1 + $0xec] sm:$0xf]
      %v423 = vld [vmem:[%s1 + $0xf0] sm:$0xf]
      %v424 = vld [vmem:[%s1 + $0xf4] sm:$0xf]
      %v425 = vld [vmem:[%s1 + $0xf8] sm:$0xf]
      %v426 = vld [vmem:[%s1 + $0xfc] sm:$0xf]
      %v427 = vld [vmem:[%s1 + $0x100] sm:$0xf]
      %v428 = vld [vmem:[%s1 + $0x104] sm:$0xf]
      %v429 = vld [vmem:[%s1 + $0x108] sm:$0xf]
      %v430 = vld [vmem:[%s1 + $0x10c] sm:$0xf]
      %v431 = vld [vmem:[%s1 + $0x110] sm:$0xf]
      %v432 = vld [vmem:[%s1 + $0x114] sm:$0xf]
      %v433 = vld [vmem:[%s1 + $0x118] sm:$0xf]
      %v434 = vld [vmem:[%s1 + $0x11c] sm:$0xf]
      %v435 = vld [vmem:[%s1 + $0x120] sm:$0xf]
      %v436 = vld [vmem:[%s1 + $0x124] sm:$0xf]
      %v437 = vld [vmem:[%s1 + $0x128] sm:$0xf]
      %v438 = vld [vmem:[%s1 + $0x12c] sm:$0xf]
      %v439 = vld [vmem:[%s1 + $0x130] sm:$0xf]
      %v440 = vld [vmem:[%s1 + $0x134] sm:$0xf]
      %v441 = vld [vmem:[%s1 + $0x138] sm:$0xf]
      %v442 = vld [vmem:[%s1 + $0x13c] sm:$0xf]
      %v443 = vld [vmem:[%s1 + $0x140] sm:$0xf]
      %v444 = vld [vmem:[%s1 + $0x144] sm:$0xf]
      %v445 = vld [vmem:[%s1 + $0x148] sm:$0xf]
      %v446 = vld [vmem:[%s1 + $0x14c] sm:$0xf]
      %v447 = vld [vmem:[%s1 + $0x150] sm:$0xf]
      %v448 = vld [vmem:[%s1 + $0x154] sm:$0xf]
      %v449 = vld [vmem:[%s1 + $0x158] sm:$0xf]
      %v450 = vld [vmem:[%s1 + $0x15c] sm:$0xf]
      %v451 = vld [vmem:[%s1 + $0x160] sm:$0xf]
      %v452 = vld [vmem:[%s1 + $0x164] sm:$0xf]
      %v453 = vld [vmem:[%s1 + $0x168] sm:$0xf]
      %v454 = vld [vmem:[%s1 + $0x16c] sm:$0xf]
      %v455 = vld [vmem:[%s1 + $0x170] sm:$0xf]
      %v456 = vld [vmem:[%s1 + $0x174] sm:$0xf]
      %v457 = vld [vmem:[%s1 + $0x178] sm:$0xf]
      %v458 = vld [vmem:[%s1 + $0x17c] sm:$0xf]
      %v459 = vld [vmem:[%s1 + $0x180] sm:$0xf]
      %v460 = vld [vmem:[%s1 + $0x184] sm:$0xf]
      %v461 = vld [vmem:[%s1 + $0x188] sm:$0xf]
      %v462 = vld [vmem:[%s1 + $0x18c] sm:$0xf]
      %v463 = vld [vmem:[%s1 + $0x190] sm:$0xf]
      %v464 = vld [vmem:[%s1 + $0x194] sm:$0xf]
      %v465 = vld [vmem:[%s1 + $0x198] sm:$0xf]
      %v466 = vld [vmem:[%s1 + $0x19c] sm:$0xf]
      %v467 = vld [vmem:[%s1 + $0x1a0] sm:$0xf]
      %v468 = vld [vmem:[%s1 + $0x1a4] sm:$0xf]
      %v469 = vld [vmem:[%s1 + $0x1a8] sm:$0xf]
      %v470 = vld [vmem:[%s1 + $0x1ac] sm:$0xf]
      %v471 = vld [vmem:[%s1 + $0x1b0] sm:$0xf]
      %v472 = vld [vmem:[%s1 + $0x1b4] sm:$0xf]
      %v473 = vld [vmem:[%s1 + $0x1b8] sm:$0xf]
      %v474 = vld [vmem:[%s1 + $0x1bc] sm:$0xf]
      %v475 = vld [vmem:[%s1 + $0x1c0] sm:$0xf]
      %v476 = vld [vmem:[%s1 + $0x1c4] sm:$0xf]
      %v477 = vld [vmem:[%s1 + $0x1c8] sm:$0xf]
      %v478 = vld [vmem:[%s1 + $0x1cc] sm:$0xf]
      %v479 = vld [vmem:[%s1 + $0x1d0] sm:$0xf]
      %v480 = vld [vmem:[%s1 + $0x1d4] sm:$0xf]
      %v481 = vld [vmem:[%s1 + $0x1d8] sm:$0xf]
      %v482 = vld [vmem:[%s1 + $0x1dc] sm:$0xf]
      %v483 = vld [vmem:[%s1 + $0x1e0] sm:$0xf]
      %v484 = vld [vmem:[%s1 + $0x1e4] sm:$0xf]
      %v485 = vld [vmem:[%s1 + $0x1e8] sm:$0xf]
      %v486 = vld [vmem:[%s1 + $0x1ec] sm:$0xf]
      %v487 = vld [vmem:[%s1 + $0x1f0] sm:$0xf]
      %v488 = vld [vmem:[%s1 + $0x1f4] sm:$0xf]
      %v489 = vld [vmem:[%s1 + $0x1f8] sm:$0xf]
      %v490 = vld [vmem:[%s1 + $0x1fc] sm:$0xf]
      %v491 = vld [vmem:[%s1 + $0x200] sm:$0xf]
      %v492 = vld [vmem:[%s1 + $0x204] sm:$0xf]
      %v493 = vld [vmem:[%s1 + $0x208] sm:$0xf]
      %v494 = vld [vmem:[%s1 + $0x20c] sm:$0xf]
      %v495 = vld [vmem:[%s1 + $0x210] sm:$0xf]
      %v496 = vld [vmem:[%s1 + $0x214] sm:$0xf]
      %v497 = vld [vmem:[%s1 + $0x218] sm:$0xf]
      %v498 = vld [vmem:[%s1 + $0x21c] sm:$0xf]
      %v499 = vld [vmem:[%s1 + $0x220] sm:$0xf]
      %v500 = vld [vmem:[%s1 + $0x224] sm:$0xf]
      %v501 = vld [vmem:[%s1 + $0x228] sm:$0xf]
      %v502 = vld [vmem:[%s1 + $0x22c] sm:$0xf]
      %v503 = vld [vmem:[%s1 + $0x230] sm:$0xf]
      %v504 = vld [vmem:[%s1 + $0x234] sm:$0xf]
      %v505 = vld [vmem:[%s1 + $0x238] sm:$0xf]
      %v506 = vld [vmem:[%s1 + $0x23c] sm:$0xf]
      %v507 = vld [vmem:[%s2] sm:$0x1]
      %v509 = vperm.slane %v507, 0
      %v671 = vunpack.c.l.b16 %v203
      %v672 = vunpack.c.h.b16 %v203
      %v673 = vunpack.c.l.b16 %v204
      %v674 = vunpack.c.h.b16 %v204
      %v675 = vunpack.c.l.b16 %v205
      %v676 = vunpack.c.h.b16 %v205
      %v677 = vunpack.c.l.b16 %v206
      %v678 = vunpack.c.h.b16 %v206
      %v679 = vunpack.c.l.b16 %v207
      %v680 = vunpack.c.l.b16 %v208
      %v681 = vunpack.c.h.b16 %v208
      %v682 = vunpack.c.l.b16 %v209
      %v683 = vunpack.c.h.b16 %v209
      %v684 = vunpack.c.l.b16 %v210
      %v685 = vunpack.c.h.b16 %v210
      %v686 = vunpack.c.l.b16 %v211
      %v687 = vunpack.c.h.b16 %v211
      %v688 = vunpack.c.l.b16 %v212
      %v689 = vunpack.c.l.b16 %v213
      %v690 = vunpack.c.h.b16 %v213
      %v691 = vunpack.c.l.b16 %v214
      %v692 = vunpack.c.h.b16 %v214
      %v693 = vunpack.c.l.b16 %v215
      %v694 = vunpack.c.h.b16 %v215
      %v695 = vunpack.c.l.b16 %v216
      %v696 = vunpack.c.h.b16 %v216
      %v697 = vunpack.c.l.b16 %v217
      %v698 = vunpack.c.l.b16 %v218
      %v699 = vunpack.c.h.b16 %v218
      %v700 = vunpack.c.l.b16 %v219
      %v701 = vunpack.c.h.b16 %v219
      %v702 = vunpack.c.l.b16 %v220
      %v703 = vunpack.c.h.b16 %v220
      %v704 = vunpack.c.l.b16 %v221
      %v705 = vunpack.c.h.b16 %v221
      %v706 = vunpack.c.l.b16 %v222
      %v707 = vunpack.c.l.b16 %v223
      %v708 = vunpack.c.h.b16 %v223
      %v709 = vunpack.c.l.b16 %v224
      %v710 = vunpack.c.h.b16 %v224
      %v711 = vunpack.c.l.b16 %v225
      %v712 = vunpack.c.h.b16 %v225
      %v713 = vunpack.c.l.b16 %v226
      %v714 = vunpack.c.h.b16 %v226
      %v715 = vunpack.c.l.b16 %v227
      %v716 = vunpack.c.l.b16 %v228
      %v717 = vunpack.c.h.b16 %v228
      %v718 = vunpack.c.l.b16 %v229
      %v719 = vunpack.c.h.b16 %v229
      %v720 = vunpack.c.l.b16 %v230
      %v721 = vunpack.c.h.b16 %v230
      %v722 = vunpack.c.l.b16 %v231
      %v723 = vunpack.c.h.b16 %v231
      %v724 = vunpack.c.l.b16 %v232
      %v725 = vunpack.c.l.b16 %v233
      %v726 = vunpack.c.h.b16 %v233
      %v727 = vunpack.c.l.b16 %v234
      %v728 = vunpack.c.h.b16 %v234
      %v729 = vunpack.c.l.b16 %v235
      %v730 = vunpack.c.h.b16 %v235
      %v731 = vunpack.c.l.b16 %v236
      %v732 = vunpack.c.h.b16 %v236
      %v733 = vunpack.c.l.b16 %v237
      %v734 = vunpack.c.l.b16 %v238
      %v735 = vunpack.c.h.b16 %v238
      %v736 = vunpack.c.l.b16 %v239
      %v737 = vunpack.c.h.b16 %v239
      %v738 = vunpack.c.l.b16 %v240
      %v739 = vunpack.c.h.b16 %v240
      %v740 = vunpack.c.l.b16 %v241
      %v741 = vunpack.c.h.b16 %v241
      %v742 = vunpack.c.l.b16 %v242
      %v743 = vunpack.c.l.b16 %v243
      %v744 = vunpack.c.h.b16 %v243
      %v745 = vunpack.c.l.b16 %v244
      %v746 = vunpack.c.h.b16 %v244
      %v747 = vunpack.c.l.b16 %v245
      %v748 = vunpack.c.h.b16 %v245
      %v749 = vunpack.c.l.b16 %v246
      %v750 = vunpack.c.h.b16 %v246
      %v751 = vunpack.c.l.b16 %v247
      %v752 = vunpack.c.l.b16 %v248
      %v753 = vunpack.c.h.b16 %v248
      %v754 = vunpack.c.l.b16 %v249
      %v755 = vunpack.c.h.b16 %v249
      %v756 = vunpack.c.l.b16 %v250
      %v757 = vunpack.c.h.b16 %v250
      %v758 = vunpack.c.l.b16 %v251
      %v759 = vunpack.c.h.b16 %v251
      %v760 = vunpack.c.l.b16 %v252
      %v761 = vunpack.c.l.b16 %v253
      %v762 = vunpack.c.h.b16 %v253
      %v763 = vunpack.c.l.b16 %v254
      %v764 = vunpack.c.h.b16 %v254
      %v765 = vunpack.c.l.b16 %v255
      %v766 = vunpack.c.h.b16 %v255
      %v767 = vunpack.c.l.b16 %v256
      %v768 = vunpack.c.h.b16 %v256
      %v769 = vunpack.c.l.b16 %v257
      %v770 = vunpack.c.l.b16 %v258
      %v771 = vunpack.c.h.b16 %v258
      %v772 = vunpack.c.l.b16 %v259
      %v773 = vunpack.c.h.b16 %v259
      %v774 = vunpack.c.l.b16 %v260
      %v775 = vunpack.c.h.b16 %v260
      %v776 = vunpack.c.l.b16 %v261
      %v777 = vunpack.c.h.b16 %v261
      %v778 = vunpack.c.l.b16 %v262
      %v779 = vunpack.c.l.b16 %v263
      %v780 = vunpack.c.h.b16 %v263
      %v781 = vunpack.c.l.b16 %v264
      %v782 = vunpack.c.h.b16 %v264
      %v783 = vunpack.c.l.b16 %v265
      %v784 = vunpack.c.h.b16 %v265
      %v785 = vunpack.c.l.b16 %v266
      %v786 = vunpack.c.h.b16 %v266
      %v787 = vunpack.c.l.b16 %v267
      %v788 = vunpack.c.l.b16 %v268
      %v789 = vunpack.c.h.b16 %v268
      %v790 = vunpack.c.l.b16 %v269
      %v791 = vunpack.c.h.b16 %v269
      %v792 = vunpack.c.l.b16 %v270
      %v793 = vunpack.c.h.b16 %v270
      %v794 = vunpack.c.l.b16 %v271
      %v795 = vunpack.c.h.b16 %v271
      %v796 = vunpack.c.l.b16 %v272
      %v797 = vunpack.c.l.b16 %v273
      %v798 = vunpack.c.h.b16 %v273
      %v799 = vunpack.c.l.b16 %v274
      %v800 = vunpack.c.h.b16 %v274
      %v801 = vunpack.c.l.b16 %v275
      %v802 = vunpack.c.h.b16 %v275
      %v803 = vunpack.c.l.b16 %v276
      %v804 = vunpack.c.h.b16 %v276
      %v805 = vunpack.c.l.b16 %v277
      %v806 = vunpack.c.l.b16 %v278
      %v807 = vunpack.c.h.b16 %v278
      %v808 = vunpack.c.l.b16 %v279
      %v809 = vunpack.c.h.b16 %v279
      %v810 = vunpack.c.l.b16 %v280
      %v811 = vunpack.c.h.b16 %v280
      %v812 = vunpack.c.l.b16 %v281
      %v813 = vunpack.c.h.b16 %v281
      %v814 = vunpack.c.l.b16 %v282
      %v815 = vunpack.c.l.b16 %v283
      %v816 = vunpack.c.h.b16 %v283
      %v817 = vunpack.c.l.b16 %v284
      %v818 = vunpack.c.h.b16 %v284
      %v819 = vunpack.c.l.b16 %v285
      %v820 = vunpack.c.h.b16 %v285
      %v821 = vunpack.c.l.b16 %v286
      %v822 = vunpack.c.h.b16 %v286
      %v823 = vunpack.c.l.b16 %v287
      %v824 = vunpack.c.l.b16 %v288
      %v825 = vunpack.c.h.b16 %v288
      %v826 = vunpack.c.l.b16 %v289
      %v827 = vunpack.c.h.b16 %v289
      %v828 = vunpack.c.l.b16 %v290
      %v829 = vunpack.c.h.b16 %v290
      %v830 = vunpack.c.l.b16 %v291
      %v831 = vunpack.c.h.b16 %v291
      %v832 = vunpack.c.l.b16 %v292
      %v833 = vunpack.c.l.b16 %v293
      %v834 = vunpack.c.h.b16 %v293
      %v835 = vunpack.c.l.b16 %v294
      %v836 = vunpack.c.h.b16 %v294
      %v837 = vunpack.c.l.b16 %v295
      %v838 = vunpack.c.h.b16 %v295
      %v839 = vunpack.c.l.b16 %v296
      %v840 = vunpack.c.h.b16 %v296
      %v841 = vunpack.c.l.b16 %v297
      %v842 = vunpack.c.l.b16 %v298
      %v843 = vunpack.c.h.b16 %v298
      %v844 = vunpack.c.l.b16 %v299
      %v845 = vunpack.c.h.b16 %v299
      %v846 = vunpack.c.l.b16 %v300
      %v847 = vunpack.c.h.b16 %v300
      %v848 = vunpack.c.l.b16 %v301
      %v849 = vunpack.c.h.b16 %v301
      %v850 = vunpack.c.l.b16 %v302
      %v851 = vunpack.c.l.b16 %v303
      %v852 = vunpack.c.h.b16 %v303
      %v853 = vunpack.c.l.b16 %v304
      %v854 = vunpack.c.h.b16 %v304
      %v855 = vunpack.c.l.b16 %v305
      %v856 = vunpack.c.h.b16 %v305
      %v857 = vunpack.c.l.b16 %v306
      %v858 = vunpack.c.h.b16 %v306
      %v859 = vunpack.c.l.b16 %v307
      %v860 = vunpack.c.l.b16 %v308
      %v861 = vunpack.c.h.b16 %v308
      %v862 = vunpack.c.l.b16 %v309
      %v863 = vunpack.c.h.b16 %v309
      %v864 = vunpack.c.l.b16 %v310
      %v865 = vunpack.c.h.b16 %v310
      %v866 = vunpack.c.l.b16 %v311
      %v867 = vunpack.c.h.b16 %v311
      %v868 = vunpack.c.l.b16 %v312
      %v869 = vunpack.c.l.b16 %v313
      %v870 = vunpack.c.h.b16 %v313
      %v871 = vunpack.c.l.b16 %v314
      %v872 = vunpack.c.h.b16 %v314
      %v873 = vunpack.c.l.b16 %v315
      %v874 = vunpack.c.h.b16 %v315
      %v875 = vunpack.c.l.b16 %v316
      %v876 = vunpack.c.h.b16 %v316
      %v877 = vunpack.c.l.b16 %v317
      %v878 = vunpack.c.l.b16 %v318
      %v879 = vunpack.c.h.b16 %v318
      %v880 = vunpack.c.l.b16 %v319
      %v881 = vunpack.c.h.b16 %v319
      %v882 = vunpack.c.l.b16 %v320
      %v883 = vunpack.c.h.b16 %v320
      %v884 = vunpack.c.l.b16 %v321
      %v885 = vunpack.c.h.b16 %v321
      %v886 = vunpack.c.l.b16 %v322
      %v887 = vunpack.c.l.b16 %v323
      %v888 = vunpack.c.h.b16 %v323
      %v889 = vunpack.c.l.b16 %v324
      %v890 = vunpack.c.h.b16 %v324
      %v891 = vunpack.c.l.b16 %v325
      %v892 = vunpack.c.h.b16 %v325
      %v893 = vunpack.c.l.b16 %v326
      %v894 = vunpack.c.h.b16 %v326
      %v895 = vunpack.c.l.b16 %v327
      %v896 = vunpack.c.l.b16 %v328
      %v897 = vunpack.c.h.b16 %v328
      %v898 = vunpack.c.l.b16 %v329
      %v899 = vunpack.c.h.b16 %v329
      %v900 = vunpack.c.l.b16 %v330
      %v901 = vunpack.c.h.b16 %v330
      %v902 = vunpack.c.l.b16 %v331
      %v903 = vunpack.c.h.b16 %v331
      %v904 = vunpack.c.l.b16 %v332
      %v905 = vunpack.c.l.b16 %v333
      %v906 = vunpack.c.h.b16 %v333
      %v907 = vunpack.c.l.b16 %v334
      %v908 = vunpack.c.h.b16 %v334
      %v909 = vunpack.c.l.b16 %v335
      %v910 = vunpack.c.h.b16 %v335
      %v911 = vunpack.c.l.b16 %v336
      %v912 = vunpack.c.h.b16 %v336
      %v913 = vunpack.c.l.b16 %v337
      %v914 = vunpack.c.l.b16 %v338
      %v915 = vunpack.c.h.b16 %v338
      %v916 = vunpack.c.l.b16 %v339
      %v917 = vunpack.c.h.b16 %v339
      %v918 = vunpack.c.l.b16 %v340
      %v919 = vunpack.c.h.b16 %v340
      %v920 = vunpack.c.l.b16 %v341
      %v921 = vunpack.c.h.b16 %v341
      %v922 = vunpack.c.l.b16 %v342
      %v923 = vunpack.c.l.b16 %v343
      %v924 = vunpack.c.h.b16 %v343
      %v925 = vunpack.c.l.b16 %v344
      %v926 = vunpack.c.h.b16 %v344
      %v927 = vunpack.c.l.b16 %v345
      %v928 = vunpack.c.h.b16 %v345
      %v929 = vunpack.c.l.b16 %v346
      %v930 = vunpack.c.h.b16 %v346
      %v931 = vunpack.c.l.b16 %v347
      %v932 = vunpack.c.l.b16 %v348
      %v933 = vunpack.c.h.b16 %v348
      %v934 = vunpack.c.l.b16 %v349
      %v935 = vunpack.c.h.b16 %v349
      %v936 = vunpack.c.l.b16 %v350
      %v937 = vunpack.c.h.b16 %v350
      %v938 = vunpack.c.l.b16 %v351
      %v939 = vunpack.c.h.b16 %v351
      %v940 = vunpack.c.l.b16 %v352
      %v941 = vunpack.c.l.b16 %v353
      %v942 = vunpack.c.h.b16 %v353
      %v943 = vunpack.c.l.b16 %v354
      %v944 = vunpack.c.h.b16 %v354
      %v945 = vunpack.c.l.b16 %v355
      %v946 = vunpack.c.h.b16 %v355
      %v947 = vunpack.c.l.b16 %v356
      %v948 = vunpack.c.h.b16 %v356
      %v949 = vunpack.c.l.b16 %v357
      %v950 = vunpack.c.l.b16 %v358
      %v951 = vunpack.c.h.b16 %v358
      %v952 = vunpack.c.l.b16 %v359
      %v953 = vunpack.c.h.b16 %v359
      %v954 = vunpack.c.l.b16 %v360
      %v955 = vunpack.c.h.b16 %v360
      %v956 = vunpack.c.l.b16 %v361
      %v957 = vunpack.c.h.b16 %v361
      %v958 = vunpack.c.l.b16 %v362
      %v959 = vpack.c.b16 %v680, %v671
      %v960 = vpack.c.b16 %v681, %v672
      %v961 = vpack.c.b16 %v682, %v673
      %v962 = vpack.c.b16 %v683, %v674
      %v963 = vpack.c.b16 %v684, %v675
      %v964 = vpack.c.b16 %v685, %v676
      %v965 = vpack.c.b16 %v686, %v677
      %v966 = vpack.c.b16 %v687, %v678
      %v967 = vpack.c.b16 %v688, %v679
      %v968 = vpack.c.b16 %v698, %v689
      %v969 = vpack.c.b16 %v699, %v690
      %v970 = vpack.c.b16 %v700, %v691
      %v971 = vpack.c.b16 %v701, %v692
      %v972 = vpack.c.b16 %v702, %v693
      %v973 = vpack.c.b16 %v703, %v694
      %v974 = vpack.c.b16 %v704, %v695
      %v975 = vpack.c.b16 %v705, %v696
      %v976 = vpack.c.b16 %v706, %v697
      %v977 = vpack.c.b16 %v716, %v707
      %v978 = vpack.c.b16 %v717, %v708
      %v979 = vpack.c.b16 %v718, %v709
      %v980 = vpack.c.b16 %v719, %v710
      %v981 = vpack.c.b16 %v720, %v711
      %v982 = vpack.c.b16 %v721, %v712
      %v983 = vpack.c.b16 %v722, %v713
      %v984 = vpack.c.b16 %v723, %v714
      %v985 = vpack.c.b16 %v724, %v715
      %v986 = vpack.c.b16 %v734, %v725
      %v987 = vpack.c.b16 %v735, %v726
      %v988 = vpack.c.b16 %v736, %v727
      %v989 = vpack.c.b16 %v737, %v728
      %v990 = vpack.c.b16 %v738, %v729
      %v991 = vpack.c.b16 %v739, %v730
      %v992 = vpack.c.b16 %v740, %v731
      %v993 = vpack.c.b16 %v741, %v732
      %v994 = vpack.c.b16 %v742, %v733
      %v995 = vpack.c.b16 %v752, %v743
      %v996 = vpack.c.b16 %v753, %v744
      %v997 = vpack.c.b16 %v754, %v745
      %v998 = vpack.c.b16 %v755, %v746
      %v999 = vpack.c.b16 %v756, %v747
      %v1000 = vpack.c.b16 %v757, %v748
      %v1001 = vpack.c.b16 %v758, %v749
      %v1002 = vpack.c.b16 %v759, %v750
      %v1003 = vpack.c.b16 %v760, %v751
      %v1004 = vpack.c.b16 %v770, %v761
      %v1005 = vpack.c.b16 %v771, %v762
      %v1006 = vpack.c.b16 %v772, %v763
      %v1007 = vpack.c.b16 %v773, %v764
      %v1008 = vpack.c.b16 %v774, %v765
      %v1009 = vpack.c.b16 %v775, %v766
      %v1010 = vpack.c.b16 %v776, %v767
      %v1011 = vpack.c.b16 %v777, %v768
      %v1012 = vpack.c.b16 %v778, %v769
      %v1013 = vpack.c.b16 %v788, %v779
      %v1014 = vpack.c.b16 %v789, %v780
      %v1015 = vpack.c.b16 %v790, %v781
      %v1016 = vpack.c.b16 %v791, %v782
      %v1017 = vpack.c.b16 %v792, %v783
      %v1018 = vpack.c.b16 %v793, %v784
      %v1019 = vpack.c.b16 %v794, %v785
      %v1020 = vpack.c.b16 %v795, %v786
      %v1021 = vpack.c.b16 %v796, %v787
      %v1022 = vpack.c.b16 %v806, %v797
      %v1023 = vpack.c.b16 %v807, %v798
      %v1024 = vpack.c.b16 %v808, %v799
      %v1025 = vpack.c.b16 %v809, %v800
      %v1026 = vpack.c.b16 %v810, %v801
      %v1027 = vpack.c.b16 %v811, %v802
      %v1028 = vpack.c.b16 %v812, %v803
      %v1029 = vpack.c.b16 %v813, %v804
      %v1030 = vpack.c.b16 %v814, %v805
      %v1031 = vpack.c.b16 %v824, %v815
      %v1032 = vpack.c.b16 %v825, %v816
      %v1033 = vpack.c.b16 %v826, %v817
      %v1034 = vpack.c.b16 %v827, %v818
      %v1035 = vpack.c.b16 %v828, %v819
      %v1036 = vpack.c.b16 %v829, %v820
      %v1037 = vpack.c.b16 %v830, %v821
      %v1038 = vpack.c.b16 %v831, %v822
      %v1039 = vpack.c.b16 %v832, %v823
      %v1040 = vpack.c.b16 %v842, %v833
      %v1041 = vpack.c.b16 %v843, %v834
      %v1042 = vpack.c.b16 %v844, %v835
      %v1043 = vpack.c.b16 %v845, %v836
      %v1044 = vpack.c.b16 %v846, %v837
      %v1045 = vpack.c.b16 %v847, %v838
      %v1046 = vpack.c.b16 %v848, %v839
      %v1047 = vpack.c.b16 %v849, %v840
      %v1048 = vpack.c.b16 %v850, %v841
      %v1049 = vpack.c.b16 %v860, %v851
      %v1050 = vpack.c.b16 %v861, %v852
      %v1051 = vpack.c.b16 %v862, %v853
      %v1052 = vpack.c.b16 %v863, %v854
      %v1053 = vpack.c.b16 %v864, %v855
      %v1054 = vpack.c.b16 %v865, %v856
      %v1055 = vpack.c.b16 %v866, %v857
      %v1056 = vpack.c.b16 %v867, %v858
      %v1057 = vpack.c.b16 %v868, %v859
      %v1058 = vpack.c.b16 %v878, %v869
      %v1059 = vpack.c.b16 %v879, %v870
      %v1060 = vpack.c.b16 %v880, %v871
      %v1061 = vpack.c.b16 %v881, %v872
      %v1062 = vpack.c.b16 %v882, %v873
      %v1063 = vpack.c.b16 %v883, %v874
      %v1064 = vpack.c.b16 %v884, %v875
      %v1065 = vpack.c.b16 %v885, %v876
      %v1066 = vpack.c.b16 %v886, %v877
      %v1067 = vpack.c.b16 %v896, %v887
      %v1068 = vpack.c.b16 %v897, %v888
      %v1069 = vpack.c.b16 %v898, %v889
      %v1070 = vpack.c.b16 %v899, %v890
      %v1071 = vpack.c.b16 %v900, %v891
      %v1072 = vpack.c.b16 %v901, %v892
      %v1073 = vpack.c.b16 %v902, %v893
      %v1074 = vpack.c.b16 %v903, %v894
      %v1075 = vpack.c.b16 %v904, %v895
      %v1076 = vpack.c.b16 %v914, %v905
      %v1077 = vpack.c.b16 %v915, %v906
      %v1078 = vpack.c.b16 %v916, %v907
      %v1079 = vpack.c.b16 %v917, %v908
      %v1080 = vpack.c.b16 %v918, %v909
      %v1081 = vpack.c.b16 %v919, %v910
      %v1082 = vpack.c.b16 %v920, %v911
      %v1083 = vpack.c.b16 %v921, %v912
      %v1084 = vpack.c.b16 %v922, %v913
      %v1085 = vpack.c.b16 %v932, %v923
      %v1086 = vpack.c.b16 %v933, %v924
      %v1087 = vpack.c.b16 %v934, %v925
      %v1088 = vpack.c.b16 %v935, %v926
      %v1089 = vpack.c.b16 %v936, %v927
      %v1090 = vpack.c.b16 %v937, %v928
      %v1091 = vpack.c.b16 %v938, %v929
      %v1092 = vpack.c.b16 %v939, %v930
      %v1093 = vpack.c.b16 %v940, %v931
      %v1094 = vpack.c.b16 %v950, %v941
      %v1095 = vpack.c.b16 %v951, %v942
      %v1096 = vpack.c.b16 %v952, %v943
      %v1097 = vpack.c.b16 %v953, %v944
      %v1098 = vpack.c.b16 %v954, %v945
      %v1099 = vpack.c.b16 %v955, %v946
      %v1100 = vpack.c.b16 %v956, %v947
      %v1101 = vpack.c.b16 %v957, %v948
      %v1102 = vpack.c.b16 %v958, %v949
      %v1391 = vunpack.c.l.b16 %v363
      %v1392 = vunpack.c.l.b16 %v364
      %v1393 = vunpack.c.l.b16 %v365
      %v1394 = vunpack.c.l.b16 %v366
      %v1395 = vunpack.c.l.b16 %v367
      %v1396 = vunpack.c.l.b16 %v368
      %v1397 = vunpack.c.l.b16 %v369
      %v1398 = vunpack.c.l.b16 %v370
      %v1399 = vunpack.c.l.b16 %v371
      %v1400 = vunpack.c.l.b16 %v372
      %v1401 = vunpack.c.l.b16 %v373
      %v1402 = vunpack.c.l.b16 %v374
      %v1403 = vunpack.c.l.b16 %v375
      %v1404 = vunpack.c.l.b16 %v376
      %v1405 = vunpack.c.l.b16 %v377
      %v1406 = vunpack.c.l.b16 %v378
      %v1407 = vunpack.c.l.b16 %v379
      %v1408 = vunpack.c.l.b16 %v380
      %v1409 = vunpack.c.l.b16 %v381
      %v1410 = vunpack.c.l.b16 %v382
      %v1411 = vunpack.c.l.b16 %v383
      %v1412 = vunpack.c.l.b16 %v384
      %v1413 = vunpack.c.l.b16 %v385
      %v1414 = vunpack.c.l.b16 %v386
      %v1415 = vunpack.c.l.b16 %v387
      %v1416 = vunpack.c.l.b16 %v388
      %v1417 = vunpack.c.l.b16 %v389
      %v1418 = vunpack.c.l.b16 %v390
      %v1419 = vunpack.c.l.b16 %v391
      %v1420 = vunpack.c.l.b16 %v392
      %v1421 = vunpack.c.l.b16 %v393
      %v1422 = vunpack.c.l.b16 %v394
      %v1423 = vunpack.c.l.b16 %v395
      %v1424 = vunpack.c.l.b16 %v396
      %v1425 = vunpack.c.l.b16 %v397
      %v1426 = vunpack.c.l.b16 %v398
      %v1427 = vunpack.c.l.b16 %v399
      %v1428 = vunpack.c.l.b16 %v400
      %v1429 = vunpack.c.l.b16 %v401
      %v1430 = vunpack.c.l.b16 %v402
      %v1431 = vunpack.c.l.b16 %v403
      %v1432 = vunpack.c.l.b16 %v404
      %v1433 = vunpack.c.l.b16 %v405
      %v1434 = vunpack.c.l.b16 %v406
      %v1435 = vunpack.c.l.b16 %v407
      %v1436 = vunpack.c.l.b16 %v408
      %v1437 = vunpack.c.l.b16 %v409
      %v1438 = vunpack.c.l.b16 %v410
      %v1439 = vunpack.c.l.b16 %v411
      %v1440 = vunpack.c.l.b16 %v412
      %v1441 = vunpack.c.l.b16 %v413
      %v1442 = vunpack.c.l.b16 %v414
      %v1443 = vunpack.c.l.b16 %v415
      %v1444 = vunpack.c.l.b16 %v416
      %v1445 = vunpack.c.l.b16 %v417
      %v1446 = vunpack.c.l.b16 %v418
      %v1447 = vunpack.c.l.b16 %v419
      %v1448 = vunpack.c.l.b16 %v420
      %v1449 = vunpack.c.l.b16 %v421
      %v1450 = vunpack.c.l.b16 %v422
      %v1451 = vunpack.c.l.b16 %v423
      %v1452 = vunpack.c.l.b16 %v424
      %v1453 = vunpack.c.l.b16 %v425
      %v1454 = vunpack.c.l.b16 %v426
      %v1455 = vunpack.c.l.b16 %v427
      %v1456 = vunpack.c.l.b16 %v428
      %v1457 = vunpack.c.l.b16 %v429
      %v1458 = vunpack.c.l.b16 %v430
      %v1459 = vunpack.c.l.b16 %v431
      %v1460 = vunpack.c.l.b16 %v432
      %v1461 = vunpack.c.l.b16 %v433
      %v1462 = vunpack.c.l.b16 %v434
      %v1463 = vunpack.c.l.b16 %v435
      %v1464 = vunpack.c.l.b16 %v436
      %v1465 = vunpack.c.l.b16 %v437
      %v1466 = vunpack.c.l.b16 %v438
      %v1467 = vunpack.c.l.b16 %v439
      %v1468 = vunpack.c.l.b16 %v440
      %v1469 = vunpack.c.l.b16 %v441
      %v1470 = vunpack.c.l.b16 %v442
      %v1471 = vunpack.c.l.b16 %v443
      %v1472 = vunpack.c.l.b16 %v444
      %v1473 = vunpack.c.l.b16 %v445
      %v1474 = vunpack.c.l.b16 %v446
      %v1475 = vunpack.c.l.b16 %v447
      %v1476 = vunpack.c.l.b16 %v448
      %v1477 = vunpack.c.l.b16 %v449
      %v1478 = vunpack.c.l.b16 %v450
      %v1479 = vunpack.c.l.b16 %v451
      %v1480 = vunpack.c.l.b16 %v452
      %v1481 = vunpack.c.l.b16 %v453
      %v1482 = vunpack.c.l.b16 %v454
      %v1483 = vunpack.c.l.b16 %v455
      %v1484 = vunpack.c.l.b16 %v456
      %v1485 = vunpack.c.l.b16 %v457
      %v1486 = vunpack.c.l.b16 %v458
      %v1487 = vunpack.c.l.b16 %v459
      %v1488 = vunpack.c.l.b16 %v460
      %v1489 = vunpack.c.l.b16 %v461
      %v1490 = vunpack.c.l.b16 %v462
      %v1491 = vunpack.c.l.b16 %v463
      %v1492 = vunpack.c.l.b16 %v464
      %v1493 = vunpack.c.l.b16 %v465
      %v1494 = vunpack.c.l.b16 %v466
      %v1495 = vunpack.c.l.b16 %v467
      %v1496 = vunpack.c.l.b16 %v468
      %v1497 = vunpack.c.l.b16 %v469
      %v1498 = vunpack.c.l.b16 %v470
      %v1499 = vunpack.c.l.b16 %v471
      %v1500 = vunpack.c.l.b16 %v472
      %v1501 = vunpack.c.l.b16 %v473
      %v1502 = vunpack.c.l.b16 %v474
      %v1503 = vunpack.c.l.b16 %v475
      %v1504 = vunpack.c.l.b16 %v476
      %v1505 = vunpack.c.l.b16 %v477
      %v1506 = vunpack.c.l.b16 %v478
      %v1507 = vunpack.c.l.b16 %v479
      %v1508 = vunpack.c.l.b16 %v480
      %v1509 = vunpack.c.l.b16 %v481
      %v1510 = vunpack.c.l.b16 %v482
      %v1511 = vunpack.c.l.b16 %v483
      %v1512 = vunpack.c.l.b16 %v484
      %v1513 = vunpack.c.l.b16 %v485
      %v1514 = vunpack.c.l.b16 %v486
      %v1515 = vunpack.c.l.b16 %v487
      %v1516 = vunpack.c.l.b16 %v488
      %v1517 = vunpack.c.l.b16 %v489
      %v1518 = vunpack.c.l.b16 %v490
      %v1519 = vunpack.c.l.b16 %v491
      %v1520 = vunpack.c.l.b16 %v492
      %v1521 = vunpack.c.l.b16 %v493
      %v1522 = vunpack.c.l.b16 %v494
      %v1523 = vunpack.c.l.b16 %v495
      %v1524 = vunpack.c.l.b16 %v496
      %v1525 = vunpack.c.l.b16 %v497
      %v1526 = vunpack.c.l.b16 %v498
      %v1527 = vunpack.c.l.b16 %v499
      %v1528 = vunpack.c.l.b16 %v500
      %v1529 = vunpack.c.l.b16 %v501
      %v1530 = vunpack.c.l.b16 %v502
      %v1531 = vunpack.c.l.b16 %v503
      %v1532 = vunpack.c.l.b16 %v504
      %v1533 = vunpack.c.l.b16 %v505
      %v1534 = vunpack.c.l.b16 %v506
      %v1535 = vpack.c.b16 %v1392, %v1391
      %v1536 = vpack.c.b16 %v1394, %v1393
      %v1537 = vpack.c.b16 %v1396, %v1395
      %v1538 = vpack.c.b16 %v1398, %v1397
      %v1539 = vpack.c.b16 %v1400, %v1399
      %v1540 = vpack.c.b16 %v1402, %v1401
      %v1541 = vpack.c.b16 %v1404, %v1403
      %v1542 = vpack.c.b16 %v1406, %v1405
      %v1543 = vpack.c.b16 %v1408, %v1407
      %v1544 = vpack.c.b16 %v1410, %v1409
      %v1545 = vpack.c.b16 %v1412, %v1411
      %v1546 = vpack.c.b16 %v1414, %v1413
      %v1547 = vpack.c.b16 %v1416, %v1415
      %v1548 = vpack.c.b16 %v1418, %v1417
      %v1549 = vpack.c.b16 %v1420, %v1419
      %v1550 = vpack.c.b16 %v1422, %v1421
      %v1551 = vpack.c.b16 %v1424, %v1423
      %v1552 = vpack.c.b16 %v1426, %v1425
      %v1553 = vpack.c.b16 %v1428, %v1427
      %v1554 = vpack.c.b16 %v1430, %v1429
      %v1555 = vpack.c.b16 %v1432, %v1431
      %v1556 = vpack.c.b16 %v1434, %v1433
      %v1557 = vpack.c.b16 %v1436, %v1435
      %v1558 = vpack.c.b16 %v1438, %v1437
      %v1559 = vpack.c.b16 %v1440, %v1439
      %v1560 = vpack.c.b16 %v1442, %v1441
      %v1561 = vpack.c.b16 %v1444, %v1443
      %v1562 = vpack.c.b16 %v1446, %v1445
      %v1563 = vpack.c.b16 %v1448, %v1447
      %v1564 = vpack.c.b16 %v1450, %v1449
      %v1565 = vpack.c.b16 %v1452, %v1451
      %v1566 = vpack.c.b16 %v1454, %v1453
      %v1567 = vpack.c.b16 %v1456, %v1455
      %v1568 = vpack.c.b16 %v1458, %v1457
      %v1569 = vpack.c.b16 %v1460, %v1459
      %v1570 = vpack.c.b16 %v1462, %v1461
      %v1571 = vpack.c.b16 %v1464, %v1463
      %v1572 = vpack.c.b16 %v1466, %v1465
      %v1573 = vpack.c.b16 %v1468, %v1467
      %v1574 = vpack.c.b16 %v1470, %v1469
      %v1575 = vpack.c.b16 %v1472, %v1471
      %v1576 = vpack.c.b16 %v1474, %v1473
      %v1577 = vpack.c.b16 %v1476, %v1475
      %v1578 = vpack.c.b16 %v1478, %v1477
      %v1579 = vpack.c.b16 %v1480, %v1479
      %v1580 = vpack.c.b16 %v1482, %v1481
      %v1581 = vpack.c.b16 %v1484, %v1483
      %v1582 = vpack.c.b16 %v1486, %v1485
      %v1583 = vpack.c.b16 %v1488, %v1487
      %v1584 = vpack.c.b16 %v1490, %v1489
      %v1585 = vpack.c.b16 %v1492, %v1491
      %v1586 = vpack.c.b16 %v1494, %v1493
      %v1587 = vpack.c.b16 %v1496, %v1495
      %v1588 = vpack.c.b16 %v1498, %v1497
      %v1589 = vpack.c.b16 %v1500, %v1499
      %v1590 = vpack.c.b16 %v1502, %v1501
      %v1591 = vpack.c.b16 %v1504, %v1503
      %v1592 = vpack.c.b16 %v1506, %v1505
      %v1593 = vpack.c.b16 %v1508, %v1507
      %v1594 = vpack.c.b16 %v1510, %v1509
      %v1595 = vpack.c.b16 %v1512, %v1511
      %v1596 = vpack.c.b16 %v1514, %v1513
      %v1597 = vpack.c.b16 %v1516, %v1515
      %v1598 = vpack.c.b16 %v1518, %v1517
      %v1599 = vpack.c.b16 %v1520, %v1519
      %v1600 = vpack.c.b16 %v1522, %v1521
      %v1601 = vpack.c.b16 %v1524, %v1523
      %v1602 = vpack.c.b16 %v1526, %v1525
      %v1603 = vpack.c.b16 %v1528, %v1527
      %v1604 = vpack.c.b16 %v1530, %v1529
      %v1605 = vpack.c.b16 %v1532, %v1531
      %v1606 = vpack.c.b16 %v1534, %v1533
      %1679 = vmatpush.bf16.msra.mxu0 %v1542
      %1680 = vmatpush.bf16.msra.mxu0 %v1541
      %1681 = vmatpush.bf16.msra.mxu0 %v1540
      %1682 = vmatpush.bf16.msra.mxu0 %v1539
      %1683 = vmatpush.bf16.msra.mxu0 %v1538
      %1684 = vmatpush.bf16.msra.mxu0 %v1537
      %1685 = vmatpush.bf16.msra.mxu0 %v1536
      %1686 = vmatpush.bf16.msra.mxu0 %v1535
      %1687 = vmatmul.bf16.gmra.mxu0 %v959
      %v1688 = vpop.f32.mrf.mxu0
      %v1689 = vadd.f32 %v509, %v1688
      %v1690 = vpop.f32.mrf.mxu0
      %v1691 = vadd.f32 %v509, %v1690
      %1692 = vmatmul.bf16.gmra.mxu0 %v968
      %v1693 = vpop.f32.mrf.mxu0
      %v1694 = vadd.f32 %v509, %v1693
      %v1695 = vpop.f32.mrf.mxu0
      %v1696 = vadd.f32 %v509, %v1695
      %1697 = vmatmul.bf16.gmra.mxu0 %v977
      %v1698 = vpop.f32.mrf.mxu0
      %v1699 = vadd.f32 %v509, %v1698
      %v1700 = vpop.f32.mrf.mxu0
      %v1701 = vadd.f32 %v509, %v1700
      %1702 = vmatmul.bf16.gmra.mxu0 %v986
      %v1703 = vpop.f32.mrf.mxu0
      %v1704 = vadd.f32 %v509, %v1703
      %v1705 = vpop.f32.mrf.mxu0
      %v1706 = vadd.f32 %v509, %v1705
      %1707 = vmatmul.bf16.gmra.mxu0 %v995
      %v1708 = vpop.f32.mrf.mxu0
      %v1709 = vadd.f32 %v509, %v1708
      %v1710 = vpop.f32.mrf.mxu0
      %v1711 = vadd.f32 %v509, %v1710
      %1712 = vmatmul.bf16.gmra.mxu0 %v1004
      %v1713 = vpop.f32.mrf.mxu0
      %v1714 = vadd.f32 %v509, %v1713
      %v1715 = vpop.f32.mrf.mxu0
      %v1716 = vadd.f32 %v509, %v1715
      %1717 = vmatmul.bf16.gmra.mxu0 %v1013
      %v1718 = vpop.f32.mrf.mxu0
      %v1719 = vadd.f32 %v509, %v1718
      %v1720 = vpop.f32.mrf.mxu0
      %v1721 = vadd.f32 %v509, %v1720
      %1722 = vmatmul.bf16.gmra.mxu0 %v1022
      %v1723 = vpop.f32.mrf.mxu0
      %v1724 = vadd.f32 %v509, %v1723
      %v1725 = vpop.f32.mrf.mxu0
      %v1726 = vadd.f32 %v509, %v1725
      %1727 = vmatmul.bf16.gmra.mxu0 %v1031
      %v1728 = vpop.f32.mrf.mxu0
      %v1729 = vadd.f32 %v509, %v1728
      %v1730 = vpop.f32.mrf.mxu0
      %v1731 = vadd.f32 %v509, %v1730
      %1732 = vmatmul.bf16.gmra.mxu0 %v1040
      %v1733 = vpop.f32.mrf.mxu0
      %v1734 = vadd.f32 %v509, %v1733
      %v1735 = vpop.f32.mrf.mxu0
      %v1736 = vadd.f32 %v509, %v1735
      %1737 = vmatmul.bf16.gmra.mxu0 %v1049
      %v1738 = vpop.f32.mrf.mxu0
      %v1739 = vadd.f32 %v509, %v1738
      %v1740 = vpop.f32.mrf.mxu0
      %v1741 = vadd.f32 %v509, %v1740
      %1742 = vmatmul.bf16.gmra.mxu0 %v1058
      %v1743 = vpop.f32.mrf.mxu0
      %v1744 = vadd.f32 %v509, %v1743
      %v1745 = vpop.f32.mrf.mxu0
      %v1746 = vadd.f32 %v509, %v1745
      %1747 = vmatmul.bf16.gmra.mxu0 %v1067
      %v1748 = vpop.f32.mrf.mxu0
      %v1749 = vadd.f32 %v509, %v1748
      %v1750 = vpop.f32.mrf.mxu0
      %v1751 = vadd.f32 %v509, %v1750
      %1752 = vmatmul.bf16.gmra.mxu0 %v1076
      %v1753 = vpop.f32.mrf.mxu0
      %v1754 = vadd.f32 %v509, %v1753
      %v1755 = vpop.f32.mrf.mxu0
      %v1756 = vadd.f32 %v509, %v1755
      %1757 = vmatmul.bf16.gmra.mxu0 %v1085
      %v1758 = vpop.f32.mrf.mxu0
      %v1759 = vadd.f32 %v509, %v1758
      %v1760 = vpop.f32.mrf.mxu0
      %v1761 = vadd.f32 %v509, %v1760
      %1762 = vmatmul.bf16.gmra.mxu0 %v1094
      %v1763 = vpop.f32.mrf.mxu0
      %v1764 = vadd.f32 %v509, %v1763
      %v1765 = vpop.f32.mrf.mxu0
      %v1766 = vadd.f32 %v509, %v1765
      %1767 = vdwg.mxu0
      %1768 = vmatpush.bf16.msra.mxu0 %v1550
      %1769 = vmatpush.bf16.msra.mxu0 %v1549
      %1770 = vmatpush.bf16.msra.mxu0 %v1548
      %1771 = vmatpush.bf16.msra.mxu0 %v1547
      %1772 = vmatpush.bf16.msra.mxu0 %v1546
      %1773 = vmatpush.bf16.msra.mxu0 %v1545
      %1774 = vmatpush.bf16.msra.mxu0 %v1544
      %1775 = vmatpush.bf16.msra.mxu0 %v1543
      %1776 = vmatmul.bf16.gmra.mxu0 %v960
      %v1777 = vpop.f32.mrf.mxu0
      %v1778 = vadd.f32 %v1689, %v1777
      %v1779 = vpop.f32.mrf.mxu0
      %v1780 = vadd.f32 %v1691, %v1779
      %1781 = vmatmul.bf16.gmra.mxu0 %v969
      %v1782 = vpop.f32.mrf.mxu0
      %v1783 = vadd.f32 %v1694, %v1782
      %v1784 = vpop.f32.mrf.mxu0
      %v1785 = vadd.f32 %v1696, %v1784
      %1786 = vmatmul.bf16.gmra.mxu0 %v978
      %v1787 = vpop.f32.mrf.mxu0
      %v1788 = vadd.f32 %v1699, %v1787
      %v1789 = vpop.f32.mrf.mxu0
      %v1790 = vadd.f32 %v1701, %v1789
      %1791 = vmatmul.bf16.gmra.mxu0 %v987
      %v1792 = vpop.f32.mrf.mxu0
      %v1793 = vadd.f32 %v1704, %v1792
      %v1794 = vpop.f32.mrf.mxu0
      %v1795 = vadd.f32 %v1706, %v1794
      %1796 = vmatmul.bf16.gmra.mxu0 %v996
      %v1797 = vpop.f32.mrf.mxu0
      %v1798 = vadd.f32 %v1709, %v1797
      %v1799 = vpop.f32.mrf.mxu0
      %v1800 = vadd.f32 %v1711, %v1799
      %1801 = vmatmul.bf16.gmra.mxu0 %v1005
      %v1802 = vpop.f32.mrf.mxu0
      %v1803 = vadd.f32 %v1714, %v1802
      %v1804 = vpop.f32.mrf.mxu0
      %v1805 = vadd.f32 %v1716, %v1804
      %1806 = vmatmul.bf16.gmra.mxu0 %v1014
      %v1807 = vpop.f32.mrf.mxu0
      %v1808 = vadd.f32 %v1719, %v1807
      %v1809 = vpop.f32.mrf.mxu0
      %v1810 = vadd.f32 %v1721, %v1809
      %1811 = vmatmul.bf16.gmra.mxu0 %v1023
      %v1812 = vpop.f32.mrf.mxu0
      %v1813 = vadd.f32 %v1724, %v1812
      %v1814 = vpop.f32.mrf.mxu0
      %v1815 = vadd.f32 %v1726, %v1814
      %1816 = vmatmul.bf16.gmra.mxu0 %v1032
      %v1817 = vpop.f32.mrf.mxu0
      %v1818 = vadd.f32 %v1729, %v1817
      %v1819 = vpop.f32.mrf.mxu0
      %v1820 = vadd.f32 %v1731, %v1819
      %1821 = vmatmul.bf16.gmra.mxu0 %v1041
      %v1822 = vpop.f32.mrf.mxu0
      %v1823 = vadd.f32 %v1734, %v1822
      %v1824 = vpop.f32.mrf.mxu0
      %v1825 = vadd.f32 %v1736, %v1824
      %1826 = vmatmul.bf16.gmra.mxu0 %v1050
      %v1827 = vpop.f32.mrf.mxu0
      %v1828 = vadd.f32 %v1739, %v1827
      %v1829 = vpop.f32.mrf.mxu0
      %v1830 = vadd.f32 %v1741, %v1829
      %1831 = vmatmul.bf16.gmra.mxu0 %v1059
      %v1832 = vpop.f32.mrf.mxu0
      %v1833 = vadd.f32 %v1744, %v1832
      %v1834 = vpop.f32.mrf.mxu0
      %v1835 = vadd.f32 %v1746, %v1834
      %1836 = vmatmul.bf16.gmra.mxu0 %v1068
      %v1837 = vpop.f32.mrf.mxu0
      %v1838 = vadd.f32 %v1749, %v1837
      %v1839 = vpop.f32.mrf.mxu0
      %v1840 = vadd.f32 %v1751, %v1839
      %1841 = vmatmul.bf16.gmra.mxu0 %v1077
      %v1842 = vpop.f32.mrf.mxu0
      %v1843 = vadd.f32 %v1754, %v1842
      %v1844 = vpop.f32.mrf.mxu0
      %v1845 = vadd.f32 %v1756, %v1844
      %1846 = vmatmul.bf16.gmra.mxu0 %v1086
      %v1847 = vpop.f32.mrf.mxu0
      %v1848 = vadd.f32 %v1759, %v1847
      %v1849 = vpop.f32.mrf.mxu0
      %v1850 = vadd.f32 %v1761, %v1849
      %1851 = vmatmul.bf16.gmra.mxu0 %v1095
      %v1852 = vpop.f32.mrf.mxu0
      %v1853 = vadd.f32 %v1764, %v1852
      %v1854 = vpop.f32.mrf.mxu0
      %v1855 = vadd.f32 %v1766, %v1854
      %1856 = vdwg.mxu0
      %1857 = vmatpush.bf16.msra.mxu0 %v1558
      %1858 = vmatpush.bf16.msra.mxu0 %v1557
      %1859 = vmatpush.bf16.msra.mxu0 %v1556
      %1860 = vmatpush.bf16.msra.mxu0 %v1555
      %1861 = vmatpush.bf16.msra.mxu0 %v1554
      %1862 = vmatpush.bf16.msra.mxu0 %v1553
      %1863 = vmatpush.bf16.msra.mxu0 %v1552
      %1864 = vmatpush.bf16.msra.mxu0 %v1551
      %1865 = vmatmul.bf16.gmra.mxu0 %v961
      %v1866 = vpop.f32.mrf.mxu0
      %v1867 = vadd.f32 %v1778, %v1866
      %v1868 = vpop.f32.mrf.mxu0
      %v1869 = vadd.f32 %v1780, %v1868
      %1870 = vmatmul.bf16.gmra.mxu0 %v970
      %v1871 = vpop.f32.mrf.mxu0
      %v1872 = vadd.f32 %v1783, %v1871
      %v1873 = vpop.f32.mrf.mxu0
      %v1874 = vadd.f32 %v1785, %v1873
      %1875 = vmatmul.bf16.gmra.mxu0 %v979
      %v1876 = vpop.f32.mrf.mxu0
      %v1877 = vadd.f32 %v1788, %v1876
      %v1878 = vpop.f32.mrf.mxu0
      %v1879 = vadd.f32 %v1790, %v1878
      %1880 = vmatmul.bf16.gmra.mxu0 %v988
      %v1881 = vpop.f32.mrf.mxu0
      %v1882 = vadd.f32 %v1793, %v1881
      %v1883 = vpop.f32.mrf.mxu0
      %v1884 = vadd.f32 %v1795, %v1883
      %1885 = vmatmul.bf16.gmra.mxu0 %v997
      %v1886 = vpop.f32.mrf.mxu0
      %v1887 = vadd.f32 %v1798, %v1886
      %v1888 = vpop.f32.mrf.mxu0
      %v1889 = vadd.f32 %v1800, %v1888
      %1890 = vmatmul.bf16.gmra.mxu0 %v1006
      %v1891 = vpop.f32.mrf.mxu0
      %v1892 = vadd.f32 %v1803, %v1891
      %v1893 = vpop.f32.mrf.mxu0
      %v1894 = vadd.f32 %v1805, %v1893
      %1895 = vmatmul.bf16.gmra.mxu0 %v1015
      %v1896 = vpop.f32.mrf.mxu0
      %v1897 = vadd.f32 %v1808, %v1896
      %v1898 = vpop.f32.mrf.mxu0
      %v1899 = vadd.f32 %v1810, %v1898
      %1900 = vmatmul.bf16.gmra.mxu0 %v1024
      %v1901 = vpop.f32.mrf.mxu0
      %v1902 = vadd.f32 %v1813, %v1901
      %v1903 = vpop.f32.mrf.mxu0
      %v1904 = vadd.f32 %v1815, %v1903
      %1905 = vmatmul.bf16.gmra.mxu0 %v1033
      %v1906 = vpop.f32.mrf.mxu0
      %v1907 = vadd.f32 %v1818, %v1906
      %v1908 = vpop.f32.mrf.mxu0
      %v1909 = vadd.f32 %v1820, %v1908
      %1910 = vmatmul.bf16.gmra.mxu0 %v1042
      %v1911 = vpop.f32.mrf.mxu0
      %v1912 = vadd.f32 %v1823, %v1911
      %v1913 = vpop.f32.mrf.mxu0
      %v1914 = vadd.f32 %v1825, %v1913
      %1915 = vmatmul.bf16.gmra.mxu0 %v1051
      %v1916 = vpop.f32.mrf.mxu0
      %v1917 = vadd.f32 %v1828, %v1916
      %v1918 = vpop.f32.mrf.mxu0
      %v1919 = vadd.f32 %v1830, %v1918
      %1920 = vmatmul.bf16.gmra.mxu0 %v1060
      %v1921 = vpop.f32.mrf.mxu0
      %v1922 = vadd.f32 %v1833, %v1921
      %v1923 = vpop.f32.mrf.mxu0
      %v1924 = vadd.f32 %v1835, %v1923
      %1925 = vmatmul.bf16.gmra.mxu0 %v1069
      %v1926 = vpop.f32.mrf.mxu0
      %v1927 = vadd.f32 %v1838, %v1926
      %v1928 = vpop.f32.mrf.mxu0
      %v1929 = vadd.f32 %v1840, %v1928
      %1930 = vmatmul.bf16.gmra.mxu0 %v1078
      %v1931 = vpop.f32.mrf.mxu0
      %v1932 = vadd.f32 %v1843, %v1931
      %v1933 = vpop.f32.mrf.mxu0
      %v1934 = vadd.f32 %v1845, %v1933
      %1935 = vmatmul.bf16.gmra.mxu0 %v1087
      %v1936 = vpop.f32.mrf.mxu0
      %v1937 = vadd.f32 %v1848, %v1936
      %v1938 = vpop.f32.mrf.mxu0
      %v1939 = vadd.f32 %v1850, %v1938
      %1940 = vmatmul.bf16.gmra.mxu0 %v1096
      %v1941 = vpop.f32.mrf.mxu0
      %v1942 = vadd.f32 %v1853, %v1941
      %v1943 = vpop.f32.mrf.mxu0
      %v1944 = vadd.f32 %v1855, %v1943
      %1945 = vdwg.mxu0
      %1946 = vmatpush.bf16.msra.mxu0 %v1566
      %1947 = vmatpush.bf16.msra.mxu0 %v1565
      %1948 = vmatpush.bf16.msra.mxu0 %v1564
      %1949 = vmatpush.bf16.msra.mxu0 %v1563
      %1950 = vmatpush.bf16.msra.mxu0 %v1562
      %1951 = vmatpush.bf16.msra.mxu0 %v1561
      %1952 = vmatpush.bf16.msra.mxu0 %v1560
      %1953 = vmatpush.bf16.msra.mxu0 %v1559
      %1954 = vmatmul.bf16.gmra.mxu0 %v962
      %v1955 = vpop.f32.mrf.mxu0
      %v1956 = vadd.f32 %v1867, %v1955
      %v1957 = vpop.f32.mrf.mxu0
      %v1958 = vadd.f32 %v1869, %v1957
      %1959 = vmatmul.bf16.gmra.mxu0 %v971
      %v1960 = vpop.f32.mrf.mxu0
      %v1961 = vadd.f32 %v1872, %v1960
      %v1962 = vpop.f32.mrf.mxu0
      %v1963 = vadd.f32 %v1874, %v1962
      %1964 = vmatmul.bf16.gmra.mxu0 %v980
      %v1965 = vpop.f32.mrf.mxu0
      %v1966 = vadd.f32 %v1877, %v1965
      %v1967 = vpop.f32.mrf.mxu0
      %v1968 = vadd.f32 %v1879, %v1967
      %1969 = vmatmul.bf16.gmra.mxu0 %v989
      %v1970 = vpop.f32.mrf.mxu0
      %v1971 = vadd.f32 %v1882, %v1970
      %v1972 = vpop.f32.mrf.mxu0
      %v1973 = vadd.f32 %v1884, %v1972
      %1974 = vmatmul.bf16.gmra.mxu0 %v998
      %v1975 = vpop.f32.mrf.mxu0
      %v1976 = vadd.f32 %v1887, %v1975
      %v1977 = vpop.f32.mrf.mxu0
      %v1978 = vadd.f32 %v1889, %v1977
      %1979 = vmatmul.bf16.gmra.mxu0 %v1007
      %v1980 = vpop.f32.mrf.mxu0
      %v1981 = vadd.f32 %v1892, %v1980
      %v1982 = vpop.f32.mrf.mxu0
      %v1983 = vadd.f32 %v1894, %v1982
      %1984 = vmatmul.bf16.gmra.mxu0 %v1016
      %v1985 = vpop.f32.mrf.mxu0
      %v1986 = vadd.f32 %v1897, %v1985
      %v1987 = vpop.f32.mrf.mxu0
      %v1988 = vadd.f32 %v1899, %v1987
      %1989 = vmatmul.bf16.gmra.mxu0 %v1025
      %v1990 = vpop.f32.mrf.mxu0
      %v1991 = vadd.f32 %v1902, %v1990
      %v1992 = vpop.f32.mrf.mxu0
      %v1993 = vadd.f32 %v1904, %v1992
      %1994 = vmatmul.bf16.gmra.mxu0 %v1034
      %v1995 = vpop.f32.mrf.mxu0
      %v1996 = vadd.f32 %v1907, %v1995
      %v1997 = vpop.f32.mrf.mxu0
      %v1998 = vadd.f32 %v1909, %v1997
      %1999 = vmatmul.bf16.gmra.mxu0 %v1043
      %v2000 = vpop.f32.mrf.mxu0
      %v2001 = vadd.f32 %v1912, %v2000
      %v2002 = vpop.f32.mrf.mxu0
      %v2003 = vadd.f32 %v1914, %v2002
      %2004 = vmatmul.bf16.gmra.mxu0 %v1052
      %v2005 = vpop.f32.mrf.mxu0
      %v2006 = vadd.f32 %v1917, %v2005
      %v2007 = vpop.f32.mrf.mxu0
      %v2008 = vadd.f32 %v1919, %v2007
      %2009 = vmatmul.bf16.gmra.mxu0 %v1061
      %v2010 = vpop.f32.mrf.mxu0
      %v2011 = vadd.f32 %v1922, %v2010
      %v2012 = vpop.f32.mrf.mxu0
      %v2013 = vadd.f32 %v1924, %v2012
      %2014 = vmatmul.bf16.gmra.mxu0 %v1070
      %v2015 = vpop.f32.mrf.mxu0
      %v2016 = vadd.f32 %v1927, %v2015
      %v2017 = vpop.f32.mrf.mxu0
      %v2018 = vadd.f32 %v1929, %v2017
      %2019 = vmatmul.bf16.gmra.mxu0 %v1079
      %v2020 = vpop.f32.mrf.mxu0
      %v2021 = vadd.f32 %v1932, %v2020
      %v2022 = vpop.f32.mrf.mxu0
      %v2023 = vadd.f32 %v1934, %v2022
      %2024 = vmatmul.bf16.gmra.mxu0 %v1088
      %v2025 = vpop.f32.mrf.mxu0
      %v2026 = vadd.f32 %v1937, %v2025
      %v2027 = vpop.f32.mrf.mxu0
      %v2028 = vadd.f32 %v1939, %v2027
      %2029 = vmatmul.bf16.gmra.mxu0 %v1097
      %v2030 = vpop.f32.mrf.mxu0
      %v2031 = vadd.f32 %v1942, %v2030
      %v2032 = vpop.f32.mrf.mxu0
      %v2033 = vadd.f32 %v1944, %v2032
      %2034 = vdwg.mxu0
      %2035 = vmatpush.bf16.msra.mxu0 %v1574
      %2036 = vmatpush.bf16.msra.mxu0 %v1573
      %2037 = vmatpush.bf16.msra.mxu0 %v1572
      %2038 = vmatpush.bf16.msra.mxu0 %v1571
      %2039 = vmatpush.bf16.msra.mxu0 %v1570
      %2040 = vmatpush.bf16.msra.mxu0 %v1569
      %2041 = vmatpush.bf16.msra.mxu0 %v1568
      %2042 = vmatpush.bf16.msra.mxu0 %v1567
      %2043 = vmatmul.bf16.gmra.mxu0 %v963
      %v2044 = vpop.f32.mrf.mxu0
      %v2045 = vadd.f32 %v1956, %v2044
      %v2046 = vpop.f32.mrf.mxu0
      %v2047 = vadd.f32 %v1958, %v2046
      %2048 = vmatmul.bf16.gmra.mxu0 %v972
      %v2049 = vpop.f32.mrf.mxu0
      %v2050 = vadd.f32 %v1961, %v2049
      %v2051 = vpop.f32.mrf.mxu0
      %v2052 = vadd.f32 %v1963, %v2051
      %2053 = vmatmul.bf16.gmra.mxu0 %v981
      %v2054 = vpop.f32.mrf.mxu0
      %v2055 = vadd.f32 %v1966, %v2054
      %v2056 = vpop.f32.mrf.mxu0
      %v2057 = vadd.f32 %v1968, %v2056
      %2058 = vmatmul.bf16.gmra.mxu0 %v990
      %v2059 = vpop.f32.mrf.mxu0
      %v2060 = vadd.f32 %v1971, %v2059
      %v2061 = vpop.f32.mrf.mxu0
      %v2062 = vadd.f32 %v1973, %v2061
      %2063 = vmatmul.bf16.gmra.mxu0 %v999
      %v2064 = vpop.f32.mrf.mxu0
      %v2065 = vadd.f32 %v1976, %v2064
      %v2066 = vpop.f32.mrf.mxu0
      %v2067 = vadd.f32 %v1978, %v2066
      %2068 = vmatmul.bf16.gmra.mxu0 %v1008
      %v2069 = vpop.f32.mrf.mxu0
      %v2070 = vadd.f32 %v1981, %v2069
      %v2071 = vpop.f32.mrf.mxu0
      %v2072 = vadd.f32 %v1983, %v2071
      %2073 = vmatmul.bf16.gmra.mxu0 %v1017
      %v2074 = vpop.f32.mrf.mxu0
      %v2075 = vadd.f32 %v1986, %v2074
      %v2076 = vpop.f32.mrf.mxu0
      %v2077 = vadd.f32 %v1988, %v2076
      %2078 = vmatmul.bf16.gmra.mxu0 %v1026
      %v2079 = vpop.f32.mrf.mxu0
      %v2080 = vadd.f32 %v1991, %v2079
      %v2081 = vpop.f32.mrf.mxu0
      %v2082 = vadd.f32 %v1993, %v2081
      %2083 = vmatmul.bf16.gmra.mxu0 %v1035
      %v2084 = vpop.f32.mrf.mxu0
      %v2085 = vadd.f32 %v1996, %v2084
      %v2086 = vpop.f32.mrf.mxu0
      %v2087 = vadd.f32 %v1998, %v2086
      %2088 = vmatmul.bf16.gmra.mxu0 %v1044
      %v2089 = vpop.f32.mrf.mxu0
      %v2090 = vadd.f32 %v2001, %v2089
      %v2091 = vpop.f32.mrf.mxu0
      %v2092 = vadd.f32 %v2003, %v2091
      %2093 = vmatmul.bf16.gmra.mxu0 %v1053
      %v2094 = vpop.f32.mrf.mxu0
      %v2095 = vadd.f32 %v2006, %v2094
      %v2096 = vpop.f32.mrf.mxu0
      %v2097 = vadd.f32 %v2008, %v2096
      %2098 = vmatmul.bf16.gmra.mxu0 %v1062
      %v2099 = vpop.f32.mrf.mxu0
      %v2100 = vadd.f32 %v2011, %v2099
      %v2101 = vpop.f32.mrf.mxu0
      %v2102 = vadd.f32 %v2013, %v2101
      %2103 = vmatmul.bf16.gmra.mxu0 %v1071
      %v2104 = vpop.f32.mrf.mxu0
      %v2105 = vadd.f32 %v2016, %v2104
      %v2106 = vpop.f32.mrf.mxu0
      %v2107 = vadd.f32 %v2018, %v2106
      %2108 = vmatmul.bf16.gmra.mxu0 %v1080
      %v2109 = vpop.f32.mrf.mxu0
      %v2110 = vadd.f32 %v2021, %v2109
      %v2111 = vpop.f32.mrf.mxu0
      %v2112 = vadd.f32 %v2023, %v2111
      %2113 = vmatmul.bf16.gmra.mxu0 %v1089
      %v2114 = vpop.f32.mrf.mxu0
      %v2115 = vadd.f32 %v2026, %v2114
      %v2116 = vpop.f32.mrf.mxu0
      %v2117 = vadd.f32 %v2028, %v2116
      %2118 = vmatmul.bf16.gmra.mxu0 %v1098
      %v2119 = vpop.f32.mrf.mxu0
      %v2120 = vadd.f32 %v2031, %v2119
      %v2121 = vpop.f32.mrf.mxu0
      %v2122 = vadd.f32 %v2033, %v2121
      %2123 = vdwg.mxu0
      %2124 = vmatpush.bf16.msra.mxu0 %v1582
      %2125 = vmatpush.bf16.msra.mxu0 %v1581
      %2126 = vmatpush.bf16.msra.mxu0 %v1580
      %2127 = vmatpush.bf16.msra.mxu0 %v1579
      %2128 = vmatpush.bf16.msra.mxu0 %v1578
      %2129 = vmatpush.bf16.msra.mxu0 %v1577
      %2130 = vmatpush.bf16.msra.mxu0 %v1576
      %2131 = vmatpush.bf16.msra.mxu0 %v1575
      %2132 = vmatmul.bf16.gmra.mxu0 %v964
      %v2133 = vpop.f32.mrf.mxu0
      %v2134 = vadd.f32 %v2045, %v2133
      %v2135 = vpop.f32.mrf.mxu0
      %v2136 = vadd.f32 %v2047, %v2135
      %2137 = vmatmul.bf16.gmra.mxu0 %v973
      %v2138 = vpop.f32.mrf.mxu0
      %v2139 = vadd.f32 %v2050, %v2138
      %v2140 = vpop.f32.mrf.mxu0
      %v2141 = vadd.f32 %v2052, %v2140
      %2142 = vmatmul.bf16.gmra.mxu0 %v982
      %v2143 = vpop.f32.mrf.mxu0
      %v2144 = vadd.f32 %v2055, %v2143
      %v2145 = vpop.f32.mrf.mxu0
      %v2146 = vadd.f32 %v2057, %v2145
      %2147 = vmatmul.bf16.gmra.mxu0 %v991
      %v2148 = vpop.f32.mrf.mxu0
      %v2149 = vadd.f32 %v2060, %v2148
      %v2150 = vpop.f32.mrf.mxu0
      %v2151 = vadd.f32 %v2062, %v2150
      %2152 = vmatmul.bf16.gmra.mxu0 %v1000
      %v2153 = vpop.f32.mrf.mxu0
      %v2154 = vadd.f32 %v2065, %v2153
      %v2155 = vpop.f32.mrf.mxu0
      %v2156 = vadd.f32 %v2067, %v2155
      %2157 = vmatmul.bf16.gmra.mxu0 %v1009
      %v2158 = vpop.f32.mrf.mxu0
      %v2159 = vadd.f32 %v2070, %v2158
      %v2160 = vpop.f32.mrf.mxu0
      %v2161 = vadd.f32 %v2072, %v2160
      %2162 = vmatmul.bf16.gmra.mxu0 %v1018
      %v2163 = vpop.f32.mrf.mxu0
      %v2164 = vadd.f32 %v2075, %v2163
      %v2165 = vpop.f32.mrf.mxu0
      %v2166 = vadd.f32 %v2077, %v2165
      %2167 = vmatmul.bf16.gmra.mxu0 %v1027
      %v2168 = vpop.f32.mrf.mxu0
      %v2169 = vadd.f32 %v2080, %v2168
      %v2170 = vpop.f32.mrf.mxu0
      %v2171 = vadd.f32 %v2082, %v2170
      %2172 = vmatmul.bf16.gmra.mxu0 %v1036
      %v2173 = vpop.f32.mrf.mxu0
      %v2174 = vadd.f32 %v2085, %v2173
      %v2175 = vpop.f32.mrf.mxu0
      %v2176 = vadd.f32 %v2087, %v2175
      %2177 = vmatmul.bf16.gmra.mxu0 %v1045
      %v2178 = vpop.f32.mrf.mxu0
      %v2179 = vadd.f32 %v2090, %v2178
      %v2180 = vpop.f32.mrf.mxu0
      %v2181 = vadd.f32 %v2092, %v2180
      %2182 = vmatmul.bf16.gmra.mxu0 %v1054
      %v2183 = vpop.f32.mrf.mxu0
      %v2184 = vadd.f32 %v2095, %v2183
      %v2185 = vpop.f32.mrf.mxu0
      %v2186 = vadd.f32 %v2097, %v2185
      %2187 = vmatmul.bf16.gmra.mxu0 %v1063
      %v2188 = vpop.f32.mrf.mxu0
      %v2189 = vadd.f32 %v2100, %v2188
      %v2190 = vpop.f32.mrf.mxu0
      %v2191 = vadd.f32 %v2102, %v2190
      %2192 = vmatmul.bf16.gmra.mxu0 %v1072
      %v2193 = vpop.f32.mrf.mxu0
      %v2194 = vadd.f32 %v2105, %v2193
      %v2195 = vpop.f32.mrf.mxu0
      %v2196 = vadd.f32 %v2107, %v2195
      %2197 = vmatmul.bf16.gmra.mxu0 %v1081
      %v2198 = vpop.f32.mrf.mxu0
      %v2199 = vadd.f32 %v2110, %v2198
      %v2200 = vpop.f32.mrf.mxu0
      %v2201 = vadd.f32 %v2112, %v2200
      %2202 = vmatmul.bf16.gmra.mxu0 %v1090
      %v2203 = vpop.f32.mrf.mxu0
      %v2204 = vadd.f32 %v2115, %v2203
      %v2205 = vpop.f32.mrf.mxu0
      %v2206 = vadd.f32 %v2117, %v2205
      %2207 = vmatmul.bf16.gmra.mxu0 %v1099
      %v2208 = vpop.f32.mrf.mxu0
      %v2209 = vadd.f32 %v2120, %v2208
      %v2210 = vpop.f32.mrf.mxu0
      %v2211 = vadd.f32 %v2122, %v2210
      %2212 = vdwg.mxu0
      %2213 = vmatpush.bf16.msra.mxu0 %v1590
      %2214 = vmatpush.bf16.msra.mxu0 %v1589
      %2215 = vmatpush.bf16.msra.mxu0 %v1588
      %2216 = vmatpush.bf16.msra.mxu0 %v1587
      %2217 = vmatpush.bf16.msra.mxu0 %v1586
      %2218 = vmatpush.bf16.msra.mxu0 %v1585
      %2219 = vmatpush.bf16.msra.mxu0 %v1584
      %2220 = vmatpush.bf16.msra.mxu0 %v1583
      %2221 = vmatmul.bf16.gmra.mxu0 %v965
      %v2222 = vpop.f32.mrf.mxu0
      %v2223 = vadd.f32 %v2134, %v2222
      %v2224 = vpop.f32.mrf.mxu0
      %v2225 = vadd.f32 %v2136, %v2224
      %2226 = vmatmul.bf16.gmra.mxu0 %v974
      %v2227 = vpop.f32.mrf.mxu0
      %v2228 = vadd.f32 %v2139, %v2227
      %v2229 = vpop.f32.mrf.mxu0
      %v2230 = vadd.f32 %v2141, %v2229
      %2231 = vmatmul.bf16.gmra.mxu0 %v983
      %v2232 = vpop.f32.mrf.mxu0
      %v2233 = vadd.f32 %v2144, %v2232
      %v2234 = vpop.f32.mrf.mxu0
      %v2235 = vadd.f32 %v2146, %v2234
      %2236 = vmatmul.bf16.gmra.mxu0 %v992
      %v2237 = vpop.f32.mrf.mxu0
      %v2238 = vadd.f32 %v2149, %v2237
      %v2239 = vpop.f32.mrf.mxu0
      %v2240 = vadd.f32 %v2151, %v2239
      %2241 = vmatmul.bf16.gmra.mxu0 %v1001
      %v2242 = vpop.f32.mrf.mxu0
      %v2243 = vadd.f32 %v2154, %v2242
      %v2244 = vpop.f32.mrf.mxu0
      %v2245 = vadd.f32 %v2156, %v2244
      %2246 = vmatmul.bf16.gmra.mxu0 %v1010
      %v2247 = vpop.f32.mrf.mxu0
      %v2248 = vadd.f32 %v2159, %v2247
      %v2249 = vpop.f32.mrf.mxu0
      %v2250 = vadd.f32 %v2161, %v2249
      %2251 = vmatmul.bf16.gmra.mxu0 %v1019
      %v2252 = vpop.f32.mrf.mxu0
      %v2253 = vadd.f32 %v2164, %v2252
      %v2254 = vpop.f32.mrf.mxu0
      %v2255 = vadd.f32 %v2166, %v2254
      %2256 = vmatmul.bf16.gmra.mxu0 %v1028
      %v2257 = vpop.f32.mrf.mxu0
      %v2258 = vadd.f32 %v2169, %v2257
      %v2259 = vpop.f32.mrf.mxu0
      %v2260 = vadd.f32 %v2171, %v2259
      %2261 = vmatmul.bf16.gmra.mxu0 %v1037
      %v2262 = vpop.f32.mrf.mxu0
      %v2263 = vadd.f32 %v2174, %v2262
      %v2264 = vpop.f32.mrf.mxu0
      %v2265 = vadd.f32 %v2176, %v2264
      %2266 = vmatmul.bf16.gmra.mxu0 %v1046
      %v2267 = vpop.f32.mrf.mxu0
      %v2268 = vadd.f32 %v2179, %v2267
      %v2269 = vpop.f32.mrf.mxu0
      %v2270 = vadd.f32 %v2181, %v2269
      %2271 = vmatmul.bf16.gmra.mxu0 %v1055
      %v2272 = vpop.f32.mrf.mxu0
      %v2273 = vadd.f32 %v2184, %v2272
      %v2274 = vpop.f32.mrf.mxu0
      %v2275 = vadd.f32 %v2186, %v2274
      %2276 = vmatmul.bf16.gmra.mxu0 %v1064
      %v2277 = vpop.f32.mrf.mxu0
      %v2278 = vadd.f32 %v2189, %v2277
      %v2279 = vpop.f32.mrf.mxu0
      %v2280 = vadd.f32 %v2191, %v2279
      %2281 = vmatmul.bf16.gmra.mxu0 %v1073
      %v2282 = vpop.f32.mrf.mxu0
      %v2283 = vadd.f32 %v2194, %v2282
      %v2284 = vpop.f32.mrf.mxu0
      %v2285 = vadd.f32 %v2196, %v2284
      %2286 = vmatmul.bf16.gmra.mxu0 %v1082
      %v2287 = vpop.f32.mrf.mxu0
      %v2288 = vadd.f32 %v2199, %v2287
      %v2289 = vpop.f32.mrf.mxu0
      %v2290 = vadd.f32 %v2201, %v2289
      %2291 = vmatmul.bf16.gmra.mxu0 %v1091
      %v2292 = vpop.f32.mrf.mxu0
      %v2293 = vadd.f32 %v2204, %v2292
      %v2294 = vpop.f32.mrf.mxu0
      %v2295 = vadd.f32 %v2206, %v2294
      %2296 = vmatmul.bf16.gmra.mxu0 %v1100
      %v2297 = vpop.f32.mrf.mxu0
      %v2298 = vadd.f32 %v2209, %v2297
      %v2299 = vpop.f32.mrf.mxu0
      %v2300 = vadd.f32 %v2211, %v2299
      %2301 = vdwg.mxu0
      %2302 = vmatpush.bf16.msra.mxu0 %v1598
      %2303 = vmatpush.bf16.msra.mxu0 %v1597
      %2304 = vmatpush.bf16.msra.mxu0 %v1596
      %2305 = vmatpush.bf16.msra.mxu0 %v1595
      %2306 = vmatpush.bf16.msra.mxu0 %v1594
      %2307 = vmatpush.bf16.msra.mxu0 %v1593
      %2308 = vmatpush.bf16.msra.mxu0 %v1592
      %2309 = vmatpush.bf16.msra.mxu0 %v1591
      %2310 = vmatmul.bf16.gmra.mxu0 %v966
      %v2311 = vpop.f32.mrf.mxu0
      %v2312 = vadd.f32 %v2223, %v2311
      %v2313 = vpop.f32.mrf.mxu0
      %v2314 = vadd.f32 %v2225, %v2313
      %2315 = vmatmul.bf16.gmra.mxu0 %v975
      %v2316 = vpop.f32.mrf.mxu0
      %v2317 = vadd.f32 %v2228, %v2316
      %v2318 = vpop.f32.mrf.mxu0
      %v2319 = vadd.f32 %v2230, %v2318
      %2320 = vmatmul.bf16.gmra.mxu0 %v984
      %v2321 = vpop.f32.mrf.mxu0
      %v2322 = vadd.f32 %v2233, %v2321
      %v2323 = vpop.f32.mrf.mxu0
      %v2324 = vadd.f32 %v2235, %v2323
      %2325 = vmatmul.bf16.gmra.mxu0 %v993
      %v2326 = vpop.f32.mrf.mxu0
      %v2327 = vadd.f32 %v2238, %v2326
      %v2328 = vpop.f32.mrf.mxu0
      %v2329 = vadd.f32 %v2240, %v2328
      %2330 = vmatmul.bf16.gmra.mxu0 %v1002
      %v2331 = vpop.f32.mrf.mxu0
      %v2332 = vadd.f32 %v2243, %v2331
      %v2333 = vpop.f32.mrf.mxu0
      %v2334 = vadd.f32 %v2245, %v2333
      %2335 = vmatmul.bf16.gmra.mxu0 %v1011
      %v2336 = vpop.f32.mrf.mxu0
      %v2337 = vadd.f32 %v2248, %v2336
      %v2338 = vpop.f32.mrf.mxu0
      %v2339 = vadd.f32 %v2250, %v2338
      %2340 = vmatmul.bf16.gmra.mxu0 %v1020
      %v2341 = vpop.f32.mrf.mxu0
      %v2342 = vadd.f32 %v2253, %v2341
      %v2343 = vpop.f32.mrf.mxu0
      %v2344 = vadd.f32 %v2255, %v2343
      %2345 = vmatmul.bf16.gmra.mxu0 %v1029
      %v2346 = vpop.f32.mrf.mxu0
      %v2347 = vadd.f32 %v2258, %v2346
      %v2348 = vpop.f32.mrf.mxu0
      %v2349 = vadd.f32 %v2260, %v2348
      %2350 = vmatmul.bf16.gmra.mxu0 %v1038
      %v2351 = vpop.f32.mrf.mxu0
      %v2352 = vadd.f32 %v2263, %v2351
      %v2353 = vpop.f32.mrf.mxu0
      %v2354 = vadd.f32 %v2265, %v2353
      %2355 = vmatmul.bf16.gmra.mxu0 %v1047
      %v2356 = vpop.f32.mrf.mxu0
      %v2357 = vadd.f32 %v2268, %v2356
      %v2358 = vpop.f32.mrf.mxu0
      %v2359 = vadd.f32 %v2270, %v2358
      %2360 = vmatmul.bf16.gmra.mxu0 %v1056
      %v2361 = vpop.f32.mrf.mxu0
      %v2362 = vadd.f32 %v2273, %v2361
      %v2363 = vpop.f32.mrf.mxu0
      %v2364 = vadd.f32 %v2275, %v2363
      %2365 = vmatmul.bf16.gmra.mxu0 %v1065
      %v2366 = vpop.f32.mrf.mxu0
      %v2367 = vadd.f32 %v2278, %v2366
      %v2368 = vpop.f32.mrf.mxu0
      %v2369 = vadd.f32 %v2280, %v2368
      %2370 = vmatmul.bf16.gmra.mxu0 %v1074
      %v2371 = vpop.f32.mrf.mxu0
      %v2372 = vadd.f32 %v2283, %v2371
      %v2373 = vpop.f32.mrf.mxu0
      %v2374 = vadd.f32 %v2285, %v2373
      %2375 = vmatmul.bf16.gmra.mxu0 %v1083
      %v2376 = vpop.f32.mrf.mxu0
      %v2377 = vadd.f32 %v2288, %v2376
      %v2378 = vpop.f32.mrf.mxu0
      %v2379 = vadd.f32 %v2290, %v2378
      %2380 = vmatmul.bf16.gmra.mxu0 %v1092
      %v2381 = vpop.f32.mrf.mxu0
      %v2382 = vadd.f32 %v2293, %v2381
      %v2383 = vpop.f32.mrf.mxu0
      %v2384 = vadd.f32 %v2295, %v2383
      %2385 = vmatmul.bf16.gmra.mxu0 %v1101
      %v2386 = vpop.f32.mrf.mxu0
      %v2387 = vadd.f32 %v2298, %v2386
      %v2388 = vpop.f32.mrf.mxu0
      %v2389 = vadd.f32 %v2300, %v2388
      %2390 = vdwg.mxu0
      %2391 = vmatpush.bf16.msra.mxu0 %v1606
      %2392 = vmatpush.bf16.msra.mxu0 %v1605
      %2393 = vmatpush.bf16.msra.mxu0 %v1604
      %2394 = vmatpush.bf16.msra.mxu0 %v1603
      %2395 = vmatpush.bf16.msra.mxu0 %v1602
      %2396 = vmatpush.bf16.msra.mxu0 %v1601
      %2397 = vmatpush.bf16.msra.mxu0 %v1600
      %2398 = vmatpush.bf16.msra.mxu0 %v1599
      %2399 = vmatmul.bf16.gmra.mxu0 %v967
      %v2400 = vpop.f32.mrf.mxu0
      %v2401 = vadd.f32 %v2312, %v2400
      %v2402 = vpop.f32.mrf.mxu0
      %v2403 = vadd.f32 %v2314, %v2402
      %2404 = vmatmul.bf16.gmra.mxu0 %v976
      %v2405 = vpop.f32.mrf.mxu0
      %v2406 = vadd.f32 %v2317, %v2405
      %v2407 = vpop.f32.mrf.mxu0
      %v2408 = vadd.f32 %v2319, %v2407
      %2409 = vmatmul.bf16.gmra.mxu0 %v985
      %v2410 = vpop.f32.mrf.mxu0
      %v2411 = vadd.f32 %v2322, %v2410
      %v2412 = vpop.f32.mrf.mxu0
      %v2413 = vadd.f32 %v2324, %v2412
      %2414 = vmatmul.bf16.gmra.mxu0 %v994
      %v2415 = vpop.f32.mrf.mxu0
      %v2416 = vadd.f32 %v2327, %v2415
      %v2417 = vpop.f32.mrf.mxu0
      %v2418 = vadd.f32 %v2329, %v2417
      %2419 = vmatmul.bf16.gmra.mxu0 %v1003
      %v2420 = vpop.f32.mrf.mxu0
      %v2421 = vadd.f32 %v2332, %v2420
      %v2422 = vpop.f32.mrf.mxu0
      %v2423 = vadd.f32 %v2334, %v2422
      %2424 = vmatmul.bf16.gmra.mxu0 %v1012
      %v2425 = vpop.f32.mrf.mxu0
      %v2426 = vadd.f32 %v2337, %v2425
      %v2427 = vpop.f32.mrf.mxu0
      %v2428 = vadd.f32 %v2339, %v2427
      %2429 = vmatmul.bf16.gmra.mxu0 %v1021
      %v2430 = vpop.f32.mrf.mxu0
      %v2431 = vadd.f32 %v2342, %v2430
      %v2432 = vpop.f32.mrf.mxu0
      %v2433 = vadd.f32 %v2344, %v2432
      %2434 = vmatmul.bf16.gmra.mxu0 %v1030
      %v2435 = vpop.f32.mrf.mxu0
      %v2436 = vadd.f32 %v2347, %v2435
      %v2437 = vpop.f32.mrf.mxu0
      %v2438 = vadd.f32 %v2349, %v2437
      %2439 = vmatmul.bf16.gmra.mxu0 %v1039
      %v2440 = vpop.f32.mrf.mxu0
      %v2441 = vadd.f32 %v2352, %v2440
      %v2442 = vpop.f32.mrf.mxu0
      %v2443 = vadd.f32 %v2354, %v2442
      %2444 = vmatmul.bf16.gmra.mxu0 %v1048
      %v2445 = vpop.f32.mrf.mxu0
      %v2446 = vadd.f32 %v2357, %v2445
      %v2447 = vpop.f32.mrf.mxu0
      %v2448 = vadd.f32 %v2359, %v2447
      %2449 = vmatmul.bf16.gmra.mxu0 %v1057
      %v2450 = vpop.f32.mrf.mxu0
      %v2451 = vadd.f32 %v2362, %v2450
      %v2452 = vpop.f32.mrf.mxu0
      %v2453 = vadd.f32 %v2364, %v2452
      %2454 = vmatmul.bf16.gmra.mxu0 %v1066
      %v2455 = vpop.f32.mrf.mxu0
      %v2456 = vadd.f32 %v2367, %v2455
      %v2457 = vpop.f32.mrf.mxu0
      %v2458 = vadd.f32 %v2369, %v2457
      %2459 = vmatmul.bf16.gmra.mxu0 %v1075
      %v2460 = vpop.f32.mrf.mxu0
      %v2461 = vadd.f32 %v2372, %v2460
      %v2462 = vpop.f32.mrf.mxu0
      %v2463 = vadd.f32 %v2374, %v2462
      %2464 = vmatmul.bf16.gmra.mxu0 %v1084
      %v2465 = vpop.f32.mrf.mxu0
      %v2466 = vadd.f32 %v2377, %v2465
      %v2467 = vpop.f32.mrf.mxu0
      %v2468 = vadd.f32 %v2379, %v2467
      %2469 = vmatmul.bf16.gmra.mxu0 %v1093
      %v2470 = vpop.f32.mrf.mxu0
      %v2471 = vadd.f32 %v2382, %v2470
      %v2472 = vpop.f32.mrf.mxu0
      %v2473 = vadd.f32 %v2384, %v2472
      %2474 = vmatmul.bf16.gmra.mxu0 %v1102
      %v2475 = vpop.f32.mrf.mxu0
      %v2476 = vadd.f32 %v2387, %v2475
      %v2477 = vpop.f32.mrf.mxu0
      %v2478 = vadd.f32 %v2389, %v2477
      %2479 = vdwg.mxu0
      %v2480 = vmax.f32 %v2401, 0.0
      %v2481 = vmax.f32 %v2403, 0.0
      %v2482 = vmax.f32 %v2406, 0.0
      %v2483 = vmax.f32 %v2408, 0.0
      %v2484 = vmax.f32 %v2411, 0.0
      %v2485 = vmax.f32 %v2413, 0.0
      %v2486 = vmax.f32 %v2416, 0.0
      %v2487 = vmax.f32 %v2418, 0.0
      %v2488 = vmax.f32 %v2421, 0.0
      %v2489 = vmax.f32 %v2423, 0.0
      %v2490 = vmax.f32 %v2426, 0.0
      %v2491 = vmax.f32 %v2428, 0.0
      %v2492 = vmax.f32 %v2431, 0.0
      %v2493 = vmax.f32 %v2433, 0.0
      %v2494 = vmax.f32 %v2436, 0.0
      %v2495 = vmax.f32 %v2438, 0.0
      %v2496 = vmax.f32 %v2441, 0.0
      %v2497 = vmax.f32 %v2443, 0.0
      %v2498 = vmax.f32 %v2446, 0.0
      %v2499 = vmax.f32 %v2448, 0.0
      %v2500 = vmax.f32 %v2451, 0.0
      %v2501 = vmax.f32 %v2453, 0.0
      %v2502 = vmax.f32 %v2456, 0.0
      %v2503 = vmax.f32 %v2458, 0.0
      %v2504 = vmax.f32 %v2461, 0.0
      %v2505 = vmax.f32 %v2463, 0.0
      %v2506 = vmax.f32 %v2466, 0.0
      %v2507 = vmax.f32 %v2468, 0.0
      %v2508 = vmax.f32 %v2471, 0.0
      %v2509 = vmax.f32 %v2473, 0.0
      %v2510 = vmax.f32 %v2476, 0.0
      %v2511 = vmax.f32 %v2478, 0.0
      %v2513 = vunpack.c.l.s4 1966171168
      %v2514 = vunpack.c.0.s8 %v2513
      %v2515 = vperm.slane %v2480, %v2514
      %v2517 = vunpack.c.l.s4 1966171168
      %v2518 = vunpack.c.0.s8 %v2517
      %v2519 = vperm.slane %v2481, %v2518
      %v2521 = vunpack.c.l.s4 1966171168
      %v2522 = vunpack.c.0.s8 %v2521
      %v2523 = vperm.slane %v2482, %v2522
      %v2525 = vunpack.c.l.s4 1966171168
      %v2526 = vunpack.c.0.s8 %v2525
      %v2527 = vperm.slane %v2483, %v2526
      %v2529 = vunpack.c.l.s4 1966171168
      %v2530 = vunpack.c.0.s8 %v2529
      %v2531 = vperm.slane %v2484, %v2530
      %v2533 = vunpack.c.l.s4 1966171168
      %v2534 = vunpack.c.0.s8 %v2533
      %v2535 = vperm.slane %v2485, %v2534
      %v2537 = vunpack.c.l.s4 1966171168
      %v2538 = vunpack.c.0.s8 %v2537
      %v2539 = vperm.slane %v2486, %v2538
      %v2541 = vunpack.c.l.s4 1966171168
      %v2542 = vunpack.c.0.s8 %v2541
      %v2543 = vperm.slane %v2487, %v2542
      %v2545 = vunpack.c.l.s4 1966171168
      %v2546 = vunpack.c.0.s8 %v2545
      %v2547 = vperm.slane %v2488, %v2546
      %v2549 = vunpack.c.l.s4 1966171168
      %v2550 = vunpack.c.0.s8 %v2549
      %v2551 = vperm.slane %v2489, %v2550
      %v2553 = vunpack.c.l.s4 1966171168
      %v2554 = vunpack.c.0.s8 %v2553
      %v2555 = vperm.slane %v2490, %v2554
      %v2557 = vunpack.c.l.s4 1966171168
      %v2558 = vunpack.c.0.s8 %v2557
      %v2559 = vperm.slane %v2491, %v2558
      %v2561 = vunpack.c.l.s4 1966171168
      %v2562 = vunpack.c.0.s8 %v2561
      %v2563 = vperm.slane %v2492, %v2562
      %v2565 = vunpack.c.l.s4 1966171168
      %v2566 = vunpack.c.0.s8 %v2565
      %v2567 = vperm.slane %v2493, %v2566
      %v2569 = vunpack.c.l.s4 1966171168
      %v2570 = vunpack.c.0.s8 %v2569
      %v2571 = vperm.slane %v2494, %v2570
      %v2573 = vunpack.c.l.s4 1966171168
      %v2574 = vunpack.c.0.s8 %v2573
      %v2575 = vperm.slane %v2495, %v2574
      %v2577 = vunpack.c.l.s4 1966171168
      %v2578 = vunpack.c.0.s8 %v2577
      %v2579 = vperm.slane %v2496, %v2578
      %v2581 = vunpack.c.l.s4 1966171168
      %v2582 = vunpack.c.0.s8 %v2581
      %v2583 = vperm.slane %v2497, %v2582
      %v2585 = vunpack.c.l.s4 1966171168
      %v2586 = vunpack.c.0.s8 %v2585
      %v2587 = vperm.slane %v2498, %v2586
      %v2589 = vunpack.c.l.s4 1966171168
      %v2590 = vunpack.c.0.s8 %v2589
      %v2591 = vperm.slane %v2499, %v2590
      %v2593 = vunpack.c.l.s4 1966171168
      %v2594 = vunpack.c.0.s8 %v2593
      %v2595 = vperm.slane %v2500, %v2594
      %v2597 = vunpack.c.l.s4 1966171168
      %v2598 = vunpack.c.0.s8 %v2597
      %v2599 = vperm.slane %v2501, %v2598
      %v2601 = vunpack.c.l.s4 1966171168
      %v2602 = vunpack.c.0.s8 %v2601
      %v2603 = vperm.slane %v2502, %v2602
      %v2605 = vunpack.c.l.s4 1966171168
      %v2606 = vunpack.c.0.s8 %v2605
      %v2607 = vperm.slane %v2503, %v2606
      %v2609 = vunpack.c.l.s4 1966171168
      %v2610 = vunpack.c.0.s8 %v2609
      %v2611 = vperm.slane %v2504, %v2610
      %v2613 = vunpack.c.l.s4 1966171168
      %v2614 = vunpack.c.0.s8 %v2613
      %v2615 = vperm.slane %v2505, %v2614
      %v2617 = vunpack.c.l.s4 1966171168
      %v2618 = vunpack.c.0.s8 %v2617
      %v2619 = vperm.slane %v2506, %v2618
      %v2621 = vunpack.c.l.s4 1966171168
      %v2622 = vunpack.c.0.s8 %v2621
      %v2623 = vperm.slane %v2507, %v2622
      %v2625 = vunpack.c.l.s4 1966171168
      %v2626 = vunpack.c.0.s8 %v2625
      %v2627 = vperm.slane %v2508, %v2626
      %v2629 = vunpack.c.l.s4 1966171168
      %v2630 = vunpack.c.0.s8 %v2629
      %v2631 = vperm.slane %v2509, %v2630
      %v2633 = vunpack.c.l.s4 1966171168
      %v2634 = vunpack.c.0.s8 %v2633
      %v2635 = vperm.slane %v2510, %v2634
      %v2637 = vunpack.c.l.s4 1966171168
      %v2638 = vunpack.c.0.s8 %v2637
      %v2639 = vperm.slane %v2511, %v2638
      %v2672 = vrot.slane %v2515, 4
      %v2673 = vrot.slane %v2519, 4
      %v2674 = vrot.slane %v2523, 4
      %v2675 = vrot.slane %v2527, 4
      %v2676 = vrot.slane %v2531, 4
      %v2677 = vrot.slane %v2535, 4
      %v2678 = vrot.slane %v2539, 4
      %v2679 = vrot.slane %v2543, 4
      %v2680 = vrot.slane %v2547, 4
      %v2681 = vrot.slane %v2551, 4
      %v2682 = vrot.slane %v2555, 4
      %v2683 = vrot.slane %v2559, 4
      %v2684 = vrot.slane %v2563, 4
      %v2685 = vrot.slane %v2567, 4
      %v2686 = vrot.slane %v2571, 4
      %v2687 = vrot.slane %v2575, 4
      %v2688 = vrot.slane %v2579, 4
      %v2689 = vrot.slane %v2583, 4
      %v2690 = vrot.slane %v2587, 4
      %v2691 = vrot.slane %v2591, 4
      %v2692 = vrot.slane %v2595, 4
      %v2693 = vrot.slane %v2599, 4
      %v2694 = vrot.slane %v2603, 4
      %v2695 = vrot.slane %v2607, 4
      %v2696 = vrot.slane %v2611, 4
      %v2697 = vrot.slane %v2615, 4
      %v2698 = vrot.slane %v2619, 4
      %v2699 = vrot.slane %v2623, 4
      %v2700 = vrot.slane %v2627, 4
      %v2701 = vrot.slane %v2631, 4
      %v2702 = vrot.slane %v2635, 4
      %v2703 = vrot.slane %v2639, 4
      %v2736 = vmax.f32 %v2515, %v2672
      %v2737 = vmax.f32 %v2519, %v2673
      %v2738 = vmax.f32 %v2523, %v2674
      %v2739 = vmax.f32 %v2527, %v2675
      %v2740 = vmax.f32 %v2531, %v2676
      %v2741 = vmax.f32 %v2535, %v2677
      %v2742 = vmax.f32 %v2539, %v2678
      %v2743 = vmax.f32 %v2543, %v2679
      %v2744 = vmax.f32 %v2547, %v2680
      %v2745 = vmax.f32 %v2551, %v2681
      %v2746 = vmax.f32 %v2555, %v2682
      %v2747 = vmax.f32 %v2559, %v2683
      %v2748 = vmax.f32 %v2563, %v2684
      %v2749 = vmax.f32 %v2567, %v2685
      %v2750 = vmax.f32 %v2571, %v2686
      %v2751 = vmax.f32 %v2575, %v2687
      %v2752 = vmax.f32 %v2579, %v2688
      %v2753 = vmax.f32 %v2583, %v2689
      %v2754 = vmax.f32 %v2587, %v2690
      %v2755 = vmax.f32 %v2591, %v2691
      %v2756 = vmax.f32 %v2595, %v2692
      %v2757 = vmax.f32 %v2599, %v2693
      %v2758 = vmax.f32 %v2603, %v2694
      %v2759 = vmax.f32 %v2607, %v2695
      %v2760 = vmax.f32 %v2611, %v2696
      %v2761 = vmax.f32 %v2615, %v2697
      %v2762 = vmax.f32 %v2619, %v2698
      %v2763 = vmax.f32 %v2623, %v2699
      %v2764 = vmax.f32 %v2627, %v2700
      %v2765 = vmax.f32 %v2631, %v2701
      %v2766 = vmax.f32 %v2635, %v2702
      %v2767 = vmax.f32 %v2639, %v2703
      %2800 = vst [vmem:[#allocation1] ss:$2 sm:$0xff] %v2736
      %s2801 = scalar_lea.vmem [#allocation1], 1
      %2802 = vst [vmem:[%s2801] ss:$2 sm:$0xff] %v2737
      %s2803 = scalar_lea.vmem [#allocation1], 16
      %2804 = vst [vmem:[%s2803] ss:$2 sm:$0xff] %v2738
      %s2805 = scalar_lea.vmem [#allocation1], 17
      %2806 = vst [vmem:[%s2805] ss:$2 sm:$0xff] %v2739
      %s2807 = scalar_lea.vmem [#allocation1], 32
      %2808 = vst [vmem:[%s2807] ss:$2 sm:$0xff] %v2740
      %s2809 = scalar_lea.vmem [#allocation1], 33
      %2810 = vst [vmem:[%s2809] ss:$2 sm:$0xff] %v2741
      %s2811 = scalar_lea.vmem [#allocation1], 48
      %2812 = vst [vmem:[%s2811] ss:$2 sm:$0xff] %v2742
      %s2813 = scalar_lea.vmem [#allocation1], 49
      %2814 = vst [vmem:[%s2813] ss:$2 sm:$0xff] %v2743
      %v2815 = vld.sshfl [vmem:[#allocation1] sm:$0xff pattern:$0x75316420]
      %v2816 = vld.sshfl [vmem:[#allocation1 + $0x10] sm:$0xff pattern:$0x75316420]
      %v2817 = vld.sshfl [vmem:[#allocation1 + $0x20] sm:$0xff pattern:$0x75316420]
      %v2818 = vld.sshfl [vmem:[#allocation1 + $0x30] sm:$0xff pattern:$0x75316420]
      %2819 = vst [vmem:[#allocation1] ss:$2 sm:$0xff] %v2744
      %2820 = vst [vmem:[%s2801] ss:$2 sm:$0xff] %v2745
      %2821 = vst [vmem:[%s2803] ss:$2 sm:$0xff] %v2746
      %2822 = vst [vmem:[%s2805] ss:$2 sm:$0xff] %v2747
      %2823 = vst [vmem:[%s2807] ss:$2 sm:$0xff] %v2748
      %2824 = vst [vmem:[%s2809] ss:$2 sm:$0xff] %v2749
      %2825 = vst [vmem:[%s2811] ss:$2 sm:$0xff] %v2750
      %2826 = vst [vmem:[%s2813] ss:$2 sm:$0xff] %v2751
      %v2827 = vld.sshfl [vmem:[#allocation1] sm:$0xff pattern:$0x75316420]
      %v2828 = vld.sshfl [vmem:[#allocation1 + $0x10] sm:$0xff pattern:$0x75316420]
      %v2829 = vld.sshfl [vmem:[#allocation1 + $0x20] sm:$0xff pattern:$0x75316420]
      %v2830 = vld.sshfl [vmem:[#allocation1 + $0x30] sm:$0xff pattern:$0x75316420]
      %2831 = vst [vmem:[#allocation1] ss:$2 sm:$0xff] %v2752
      %2832 = vst [vmem:[%s2801] ss:$2 sm:$0xff] %v2753
      %2833 = vst [vmem:[%s2803] ss:$2 sm:$0xff] %v2754
      %2834 = vst [vmem:[%s2805] ss:$2 sm:$0xff] %v2755
      %2835 = vst [vmem:[%s2807] ss:$2 sm:$0xff] %v2756
      %2836 = vst [vmem:[%s2809] ss:$2 sm:$0xff] %v2757
      %2837 = vst [vmem:[%s2811] ss:$2 sm:$0xff] %v2758
      %2838 = vst [vmem:[%s2813] ss:$2 sm:$0xff] %v2759
      %v2839 = vld.sshfl [vmem:[#allocation1] sm:$0xff pattern:$0x75316420]
      %v2840 = vld.sshfl [vmem:[#allocation1 + $0x10] sm:$0xff pattern:$0x75316420]
      %v2841 = vld.sshfl [vmem:[#allocation1 + $0x20] sm:$0xff pattern:$0x75316420]
      %v2842 = vld.sshfl [vmem:[#allocation1 + $0x30] sm:$0xff pattern:$0x75316420]
      %2843 = vst [vmem:[#allocation1] ss:$2 sm:$0xff] %v2760
      %2844 = vst [vmem:[%s2801] ss:$2 sm:$0xff] %v2761
      %2845 = vst [vmem:[%s2803] ss:$2 sm:$0xff] %v2762
      %2846 = vst [vmem:[%s2805] ss:$2 sm:$0xff] %v2763
      %2847 = vst [vmem:[%s2807] ss:$2 sm:$0xff] %v2764
      %2848 = vst [vmem:[%s2809] ss:$2 sm:$0xff] %v2765
      %2849 = vst [vmem:[%s2811] ss:$2 sm:$0xff] %v2766
      %2850 = vst [vmem:[%s2813] ss:$2 sm:$0xff] %v2767
      %v2851 = vld.sshfl [vmem:[#allocation1] sm:$0xff pattern:$0x75316420]
      %v2852 = vld.sshfl [vmem:[#allocation1 + $0x10] sm:$0xff pattern:$0x75316420]
      %v2853 = vld.sshfl [vmem:[#allocation1 + $0x20] sm:$0xff pattern:$0x75316420]
      %v2854 = vld.sshfl [vmem:[#allocation1 + $0x30] sm:$0xff pattern:$0x75316420]
      %v2871 = vmax.f32 %v2815, %v2816
      %v2872 = vmax.f32 %v2817, %v2818
      %v2873 = vmax.f32 %v2827, %v2828
      %v2874 = vmax.f32 %v2829, %v2830
      %v2875 = vmax.f32 %v2839, %v2840
      %v2876 = vmax.f32 %v2841, %v2842
      %v2877 = vmax.f32 %v2851, %v2852
      %v2878 = vmax.f32 %v2853, %v2854
      %v2879 = vld [vmem:[%s3] sm:$0xff]
      %v2881 = vperm.slane %v2879, 0
      %v2882 = vperm.slane %v2879, 1
      %v2883 = vperm.slane %v2879, 2
      %v2884 = vperm.slane %v2879, 3
      %v2885 = vperm.slane %v2879, 4
      %v2886 = vperm.slane %v2879, 5
      %v2887 = vperm.slane %v2879, 6
      %v2888 = vperm.slane %v2879, 7
      %v2889 = vrot.slane %v2882, 7
      %v2890 = vrot.slane %v2883, 6
      %v2891 = vrot.slane %v2884, 5
      %v2892 = vrot.slane %v2885, 4
      %v2893 = vrot.slane %v2886, 3
      %v2894 = vrot.slane %v2887, 2
      %v2895 = vrot.slane %v2888, 1
      %vm2896 = vcmask 1040384
      %v2897 = vsel %vm2896, %v2881, %v2889
      %vm2898 = vcmask 1042434
      %v2899 = vsel %vm2898, %v2890, %v2891
      %vm2900 = vcmask 1041408
      %v2901 = vsel %vm2900, %v2897, %v2899
      %vm2902 = vcmask 1044484
      %v2903 = vsel %vm2902, %v2892, %v2893
      %vm2904 = vcmask 1046534
      %v2905 = vsel %vm2904, %v2894, %v2895
      %vm2906 = vcmask 1045508
      %v2907 = vsel %vm2906, %v2903, %v2905
      %vm2908 = vcmask 1043456
      %v2909 = vsel %vm2908, %v2901, %v2907
      %vm2910 = vcmask 1041409
      %v2911 = vsel %vm2910, %v2881, %v2889
      %vm2912 = vcmask 1043459
      %v2913 = vsel %vm2912, %v2890, %v2891
      %vm2914 = vcmask 1042433
      %v2915 = vsel %vm2914, %v2911, %v2913
      %vm2916 = vcmask 1045509
      %v2917 = vsel %vm2916, %v2892, %v2893
      %vm2918 = vcmask 1046528
      %v2919 = vsel %vm2918, %v2895, %v2894
      %vm2920 = vcmask 1046533
      %v2921 = vsel %vm2920, %v2917, %v2919
      %vm2922 = vcmask 1044481
      %v2923 = vsel %vm2922, %v2915, %v2921
      %v2924 = vrot.slane %v2923, 1
      %v2925 = vsel %vm2898, %v2881, %v2889
      %v2926 = vsel %vm2902, %v2890, %v2891
      %vm2927 = vcmask 1043458
      %v2928 = vsel %vm2927, %v2925, %v2926
      %v2929 = vsel %vm2904, %v2892, %v2893
      %v2930 = vsel %vm2896, %v2894, %v2895
      %vm2931 = vcmask 1045504
      %v2932 = vsel %vm2931, %v2930, %v2929
      %vm2933 = vcmask 1045506
      %v2934 = vsel %vm2933, %v2928, %v2932
      %v2935 = vrot.slane %v2934, 2
      %v2936 = vsel %vm2912, %v2881, %v2889
      %v2937 = vsel %vm2916, %v2890, %v2891
      %vm2938 = vcmask 1044483
      %v2939 = vsel %vm2938, %v2936, %v2937
      %v2940 = vsel %vm2918, %v2893, %v2892
      %v2941 = vsel %vm2910, %v2894, %v2895
      %vm2942 = vcmask 1046529
      %v2943 = vsel %vm2942, %v2941, %v2940
      %vm2944 = vcmask 1046531
      %v2945 = vsel %vm2944, %v2939, %v2943
      %v2946 = vrot.slane %v2945, 3
      %v2947 = vsel %vm2902, %v2881, %v2889
      %v2948 = vsel %vm2904, %v2890, %v2891
      %v2949 = vsel %vm2906, %v2947, %v2948
      %v2950 = vsel %vm2896, %v2892, %v2893
      %v2951 = vsel %vm2898, %v2894, %v2895
      %v2952 = vsel %vm2900, %v2950, %v2951
      %v2953 = vsel %vm2908, %v2952, %v2949
      %v2954 = vrot.slane %v2953, 4
      %v2955 = vsel %vm2916, %v2881, %v2889
      %v2956 = vsel %vm2918, %v2891, %v2890
      %v2957 = vsel %vm2920, %v2955, %v2956
      %v2958 = vsel %vm2910, %v2892, %v2893
      %v2959 = vsel %vm2912, %v2894, %v2895
      %v2960 = vsel %vm2914, %v2958, %v2959
      %v2961 = vsel %vm2922, %v2960, %v2957
      %v2962 = vrot.slane %v2961, 5
      %v2963 = vsel %vm2904, %v2881, %v2889
      %v2964 = vsel %vm2896, %v2890, %v2891
      %v2965 = vsel %vm2931, %v2964, %v2963
      %v2966 = vsel %vm2898, %v2892, %v2893
      %v2967 = vsel %vm2902, %v2894, %v2895
      %v2968 = vsel %vm2927, %v2966, %v2967
      %v2969 = vsel %vm2933, %v2968, %v2965
      %v2970 = vrot.slane %v2969, 6
      %v2971 = vsel %vm2918, %v2889, %v2881
      %v2972 = vsel %vm2910, %v2890, %v2891
      %v2973 = vsel %vm2942, %v2972, %v2971
      %v2974 = vsel %vm2912, %v2892, %v2893
      %v2975 = vsel %vm2916, %v2894, %v2895
      %v2976 = vsel %vm2938, %v2974, %v2975
      %v2977 = vsel %vm2944, %v2976, %v2973
      %v2978 = vrot.slane %v2977, 7
      %v2987 = vmul.f32 %v2871, %v2909
      %v2988 = vmul.f32 %v2872, %v2924
      %v2989 = vmul.f32 %v2873, %v2935
      %v2990 = vmul.f32 %v2874, %v2946
      %v2991 = vmul.f32 %v2875, %v2954
      %v2992 = vmul.f32 %v2876, %v2962
      %v2993 = vmul.f32 %v2877, %v2970
      %v2994 = vmul.f32 %v2878, %v2978
      %3003 = vst [vmem:[#allocation1] ss:$9 sm:$0xff] %v2987
      %s3004 = scalar_lea.vmem [#allocation1], 1
      %3005 = vst [vmem:[%s3004] ss:$9 sm:$0xff] %v2988
      %s3006 = scalar_lea.vmem [#allocation1], 2
      %3007 = vst [vmem:[%s3006] ss:$9 sm:$0xff] %v2989
      %s3008 = scalar_lea.vmem [#allocation1], 3
      %3009 = vst [vmem:[%s3008] ss:$9 sm:$0xff] %v2990
      %s3010 = scalar_lea.vmem [#allocation1], 4
      %3011 = vst [vmem:[%s3010] ss:$9 sm:$0xff] %v2991
      %s3012 = scalar_lea.vmem [#allocation1], 5
      %3013 = vst [vmem:[%s3012] ss:$9 sm:$0xff] %v2992
      %s3014 = scalar_lea.vmem [#allocation1], 6
      %3015 = vst [vmem:[%s3014] ss:$9 sm:$0xff] %v2993
      %s3016 = scalar_lea.vmem [#allocation1], 7
      %3017 = vst [vmem:[%s3016] ss:$9 sm:$0xff] %v2994
      %v3018 = vld [vmem:[#allocation1] sm:$0xff]
      %v3019 = vld [vmem:[#allocation1 + $0x9] sm:$0xff]
      %v3020 = vld [vmem:[#allocation1 + $0x12] sm:$0xff]
      %v3021 = vld [vmem:[#allocation1 + $0x1b] sm:$0xff]
      %v3022 = vld [vmem:[#allocation1 + $0x24] sm:$0xff]
      %v3023 = vld [vmem:[#allocation1 + $0x2d] sm:$0xff]
      %v3024 = vld [vmem:[#allocation1 + $0x36] sm:$0xff]
      %v3025 = vld [vmem:[#allocation1 + $0x3f] sm:$0xff]
      %v3034 = vpack.c.bf16 %v3019, %v3018
      %v3035 = vpack.c.bf16 %v3021, %v3020
      %v3036 = vpack.c.bf16 %v3023, %v3022
      %v3037 = vpack.c.bf16 %v3025, %v3024
      %3038 = vst [vmem:[%s202] sm:$0xff] %v3034
      %3039 = vst [vmem:[%s202 + $0x8] sm:$0xff] %v3035
      %3040 = vst [vmem:[%s202 + $0x10] sm:$0xff] %v3036
      %3041 = vst [vmem:[%s202 + $0x18] sm:$0xff] %v3037
      %p3042 = scmp.lt.s32.totalorder %s15, 1
      %s3043 = scalar_select %p3042, %s15, 1
      %s3044 = smul.addr %s3043, 8
      %s3045 = smul.addr %s3044, 4
      %s3046 = scalar_lea.vmem %s4, %s3045
      // Predicated region
      $region37: #{_forward_impl.4} parent=35 // pred_check
        %p3047 = pneg %p122
      $region38: #{_forward_impl.4} parent=35 // pred_check_branch
        %3049 = sbr.rel (%p3047) target = $region40
      $region39: #{_forward_impl.4} parent=35 // pred_region
        _
      $region40: #{_forward_impl.4} parent=35 // pred_fallthru
        _
    $region36: #{_forward_impl.4} parent=5 // pred_fallthru
      _
    %p3050 = scmp.le.s32.totalorder 2, %s10
    // Predicated region
    $region41: #{_forward_impl.4} parent=5 // pred_check
      %p3051 = pneg %p3050
    $region42: #{_forward_impl.4} parent=5 // pred_check_branch
      %3053 = sbr.rel (%p3051) target = $region44
    $region43: #{_forward_impl.4} parent=5 // pred_region
      %s3054 = ssub.s32 %s10, 2
      // Predicated region
      $region45: #{_forward_impl.4} parent=43 // pred_check
        %p3055 = pneg %p128
      $region46: #{_forward_impl.4} parent=43 // pred_check_branch
        %3057 = sbr.rel (%p3055) target = $region48
      $region47: #{_forward_impl.4} parent=43 // pred_region
        %p3058 = scmp.lt.s32.totalorder %s16, 1
        %s3059 = scalar_select %p3058, %s16, 1
        %s3060 = smul.addr %s3059, 8
        %s3061 = smul.addr %s3060, 4
        %s3062 = scalar_lea.vmem %s4, %s3061
      $region48: #{_forward_impl.4} parent=43 // pred_fallthru
        _
    $region44: #{_forward_impl.4} parent=5 // pred_fallthru
      _
  $region6: #{_forward_impl.4} parent=0 // loop_footer
    %s14 = sadd.s32 1, %s10
  $region7: #{_forward_impl.4} parent=0 // loop_footer_branch
    %9 = sbr.rel target = $region3
  $region8: #{_forward_impl.4} parent=0 // loop_exit
    _

// kernel: _forward_impl.5
$region0: #{_forward_impl.5}
  #allocation0 [shape = 'u32[]', space=smem, size = 0x4, offset = 0x4, fixed_abs, tag = 'smem constant byte address 0x4 - core index']
  #allocation1 [shape = 'u32[72,128]{1,0:T(1,128)}', space=vmem, size = 0x9000, scoped, tag = 'internal scratch']
  #allocation2 [shape = 'f32[2,256]{1,0:T(2,128)}', space=vmem, size = 0x800, scoped, tag = 'scratch operand']
  %s0 = inlined_call_operand.vmem [shape: bf16[2,8192], index: 0, kind: input, shape index: {}]
  %s1 = inlined_call_operand.vmem [shape: bf16[8192,256], index: 1, kind: input, shape index: {}]
  %s2 = inlined_call_operand.vmem [shape: f32[1,256], index: 2, kind: input, shape index: {}]
  %s3 = inlined_call_operand.vmem [shape: f32[1,256], index: 3, kind: input, shape index: {}]
  %s4 = inlined_call_operand.vmem [shape: bf16[256,256], index: 4, kind: input, shape index: {}]
  %s5 = inlined_call_operand.vmem [shape: f32[1,256], index: 5, kind: input, shape index: {}]
  %s6 = inlined_call_operand.vmem [shape: f32[1,256], index: 6, kind: input, shape index: {}]
  %s7 = inlined_call_operand.vmem [shape: bf16[256,128], index: 7, kind: input, shape index: {}]
  %s8 = inlined_call_operand.vmem [shape: f32[1,128], index: 8, kind: input, shape index: {}]
  %s9 = inlined_call_operand.hbm [shape: f32[2,128], index: 9, kind: output, shape index: {}]
  %s10 = sld [smem:[#allocation0]]
  $region77: #{_forward_impl.5} parent=0
    _
  %s12 = ssub.s32 1, %s10
  %s13 = scalar_select 0, %s12, %s10
  $region1: #{_forward_impl.5} parent=0
    #allocation3 [shape = 'u8[1024]{0}', space=vmem, size = 0x400, scoped, tag = 'output window, operand 0, single buffered']
    #allocation4 [shape = 's32[2]{0}', space=sflag, size = 0x8, scoped, tag = 'scoped memory for _forward_impl.5']
    %14 = vsyncpa [#allocation4], 0
    loop: start=0, step=1, limit=6
    $region2: #{_forward_impl.5} parent=1 // loop_pre_header
      _
    $region3: #{_forward_impl.5} parent=1 // loop_header
      %s16 = sphi 0, %s20
      %p17 = scmp.ge.s32.totalorder %s16, 6
      %s26 = sphi 0, %s28
      %s29 = sphi 0, %s26
      %s30 = sphi 0, %s29
      %s46 = sphi 0, %s30
      %s52 = sphi 0, %s54
      %s55 = sphi 0, %s52
      %s56 = sphi 0, %s55
      %s72 = sphi 0, %s56
      %s76 = sphi 0, %s76
      %s78 = sphi 0, %s76
      %s79 = sphi 0, %s78
      %s93 = sphi 0, %s79
      %s97 = sphi 0, %s97
      %s99 = sphi 0, %s97
      %s100 = sphi 0, %s99
      %s114 = sphi 0, %s100
      %s118 = sphi 0, %s118
      %s120 = sphi 0, %s118
      %s121 = sphi 0, %s120
      %s135 = sphi 0, %s121
      %s139 = sphi 0, %s139
      %s141 = sphi 0, %s139
      %s142 = sphi 0, %s141
      %s156 = sphi 0, %s142
      %s160 = sphi 0, %s160
      %s162 = sphi 0, %s160
      %s163 = sphi 0, %s162
      %s177 = sphi 0, %s163
      %s181 = sphi 0, %s181
      %s183 = sphi 0, %s181
      %s184 = sphi 0, %s183
      %s198 = sphi 0, %s184
      %s202 = sphi 0, %s202
      %s204 = sphi 0, %s202
      %s205 = sphi 0, %s204
      %s219 = sphi 0, %s205
      %s223 = sphi 0, %s223
      %s225 = sphi 0, %s223
      %s226 = sphi 0, %s225
      %s240 = sphi 0, %s226
    $region4: #{_forward_impl.5} parent=1 // loop_header_branch
      %19 = sbr.rel (%p17) target = $region8
    $region5: #{_forward_impl.5} parent=1 // loop_body
      %s21 = ssub.s32 %s16, 1
      %s22 = ssub.s32 %s16, 2
      %s23 = sadd.s32 %s16, 1
      %s24 = ssub.s32 %s16, %s23
      %p25 = scmp.eq.s32.totalorder %s24, 0
      %s27 = sadd.s32 %s26, 1
      %s28 = scalar_select %p25, %s26, %s27
      %p31 = pneg %p25
      %p32 = scmp.eq.s32.totalorder %s16, 3
      %p33 = por %p31, %p32
      %p34 = scmp.ne.s32.totalorder %s26, %s29
      %p35 = scmp.eq.s32.totalorder %s16, 0
      %p36 = por %p34, %p35
      %p37 = scmp.ne.s32.totalorder %s26, %s29
      %p38 = scmp.eq.s32.totalorder %s21, 3
      %p39 = por %p37, %p38
      %p40 = scmp.ne.s32.totalorder %s29, %s30
      %p41 = scmp.eq.s32.totalorder %s21, 0
      %p42 = por %p40, %p41
      %p43 = scmp.ne.s32.totalorder %s29, %s30
      %p44 = scmp.eq.s32.totalorder %s22, 3
      %p45 = por %p43, %p44
      %p47 = scmp.ne.s32.totalorder %s30, %s46
      %p48 = scmp.eq.s32.totalorder %s22, 0
      %p49 = por %p47, %p48
      %s50 = ssub.s32 %s16, %s23
      %p51 = scmp.eq.s32.totalorder %s50, 0
      %s53 = sadd.s32 %s52, 1
      %s54 = scalar_select %p51, %s52, %s53
      %p57 = pneg %p51
      %p58 = scmp.eq.s32.totalorder %s16, 3
      %p59 = por %p57, %p58
      %p60 = scmp.ne.s32.totalorder %s52, %s55
      %p61 = scmp.eq.s32.totalorder %s16, 0
      %p62 = por %p60, %p61
      %p63 = scmp.ne.s32.totalorder %s52, %s55
      %p64 = scmp.eq.s32.totalorder %s21, 3
      %p65 = por %p63, %p64
      %p66 = scmp.ne.s32.totalorder %s55, %s56
      %p67 = scmp.eq.s32.totalorder %s21, 0
      %p68 = por %p66, %p67
      %p69 = scmp.ne.s32.totalorder %s55, %s56
      %p70 = scmp.eq.s32.totalorder %s22, 3
      %p71 = por %p69, %p70
      %p73 = scmp.ne.s32.totalorder %s56, %s72
      %p74 = scmp.eq.s32.totalorder %s22, 0
      %p75 = por %p73, %p74
      %s77 = sadd.s32 %s76, 1
      %p80 = scmp.eq.s32.totalorder %s16, 3
      %p81 = scmp.ne.s32.totalorder %s76, %s78
      %p82 = scmp.eq.s32.totalorder %s16, 0
      %p83 = por %p81, %p82
      %p84 = scmp.ne.s32.totalorder %s76, %s78
      %p85 = scmp.eq.s32.totalorder %s21, 3
      %p86 = por %p84, %p85
      %p87 = scmp.ne.s32.totalorder %s78, %s79
      %p88 = scmp.eq.s32.totalorder %s21, 0
      %p89 = por %p87, %p88
      %p90 = scmp.ne.s32.totalorder %s78, %s79
      %p91 = scmp.eq.s32.totalorder %s22, 3
      %p92 = por %p90, %p91
      %p94 = scmp.ne.s32.totalorder %s79, %s93
      %p95 = scmp.eq.s32.totalorder %s22, 0
      %p96 = por %p94, %p95
      %s98 = sadd.s32 %s97, 1
      %p101 = scmp.eq.s32.totalorder %s16, 3
      %p102 = scmp.ne.s32.totalorder %s97, %s99
      %p103 = scmp.eq.s32.totalorder %s16, 0
      %p104 = por %p102, %p103
      %p105 = scmp.ne.s32.totalorder %s97, %s99
      %p106 = scmp.eq.s32.totalorder %s21, 3
      %p107 = por %p105, %p106
      %p108 = scmp.ne.s32.totalorder %s99, %s100
      %p109 = scmp.eq.s32.totalorder %s21, 0
      %p110 = por %p108, %p109
      %p111 = scmp.ne.s32.totalorder %s99, %s100
      %p112 = scmp.eq.s32.totalorder %s22, 3
      %p113 = por %p111, %p112
      %p115 = scmp.ne.s32.totalorder %s100, %s114
      %p116 = scmp.eq.s32.totalorder %s22, 0
      %p117 = por %p115, %p116
      %s119 = sadd.s32 %s118, 1
      %p122 = scmp.eq.s32.totalorder %s16, 3
      %p123 = scmp.ne.s32.totalorder %s118, %s120
      %p124 = scmp.eq.s32.totalorder %s16, 0
      %p125 = por %p123, %p124
      %p126 = scmp.ne.s32.totalorder %s118, %s120
      %p127 = scmp.eq.s32.totalorder %s21, 3
      %p128 = por %p126, %p127
      %p129 = scmp.ne.s32.totalorder %s120, %s121
      %p130 = scmp.eq.s32.totalorder %s21, 0
      %p131 = por %p129, %p130
      %p132 = scmp.ne.s32.totalorder %s120, %s121
      %p133 = scmp.eq.s32.totalorder %s22, 3
      %p134 = por %p132, %p133
      %p136 = scmp.ne.s32.totalorder %s121, %s135
      %p137 = scmp.eq.s32.totalorder %s22, 0
      %p138 = por %p136, %p137
      %s140 = sadd.s32 %s139, 1
      %p143 = scmp.eq.s32.totalorder %s16, 3
      %p144 = scmp.ne.s32.totalorder %s139, %s141
      %p145 = scmp.eq.s32.totalorder %s16, 0
      %p146 = por %p144, %p145
      %p147 = scmp.ne.s32.totalorder %s139, %s141
      %p148 = scmp.eq.s32.totalorder %s21, 3
      %p149 = por %p147, %p148
      %p150 = scmp.ne.s32.totalorder %s141, %s142
      %p151 = scmp.eq.s32.totalorder %s21, 0
      %p152 = por %p150, %p151
      %p153 = scmp.ne.s32.totalorder %s141, %s142
      %p154 = scmp.eq.s32.totalorder %s22, 3
      %p155 = por %p153, %p154
      %p157 = scmp.ne.s32.totalorder %s142, %s156
      %p158 = scmp.eq.s32.totalorder %s22, 0
      %p159 = por %p157, %p158
      %s161 = sadd.s32 %s160, 1
      %p164 = scmp.eq.s32.totalorder %s16, 3
      %p165 = scmp.ne.s32.totalorder %s160, %s162
      %p166 = scmp.eq.s32.totalorder %s16, 0
      %p167 = por %p165, %p166
      %p168 = scmp.ne.s32.totalorder %s160, %s162
      %p169 = scmp.eq.s32.totalorder %s21, 3
      %p170 = por %p168, %p169
      %p171 = scmp.ne.s32.totalorder %s162, %s163
      %p172 = scmp.eq.s32.totalorder %s21, 0
      %p173 = por %p171, %p172
      %p174 = scmp.ne.s32.totalorder %s162, %s163
      %p175 = scmp.eq.s32.totalorder %s22, 3
      %p176 = por %p174, %p175
      %p178 = scmp.ne.s32.totalorder %s163, %s177
      %p179 = scmp.eq.s32.totalorder %s22, 0
      %p180 = por %p178, %p179
      %s182 = sadd.s32 %s181, 1
      %p185 = scmp.eq.s32.totalorder %s16, 3
      %p186 = scmp.ne.s32.totalorder %s181, %s183
      %p187 = scmp.eq.s32.totalorder %s16, 0
      %p188 = por %p186, %p187
      %p189 = scmp.ne.s32.totalorder %s181, %s183
      %p190 = scmp.eq.s32.totalorder %s21, 3
      %p191 = por %p189, %p190
      %p192 = scmp.ne.s32.totalorder %s183, %s184
      %p193 = scmp.eq.s32.totalorder %s21, 0
      %p194 = por %p192, %p193
      %p195 = scmp.ne.s32.totalorder %s183, %s184
      %p196 = scmp.eq.s32.totalorder %s22, 3
      %p197 = por %p195, %p196
      %p199 = scmp.ne.s32.totalorder %s184, %s198
      %p200 = scmp.eq.s32.totalorder %s22, 0
      %p201 = por %p199, %p200
      %s203 = sadd.s32 %s202, 1
      %p206 = scmp.eq.s32.totalorder %s16, 3
      %p207 = scmp.ne.s32.totalorder %s202, %s204
      %p208 = scmp.eq.s32.totalorder %s16, 0
      %p209 = por %p207, %p208
      %p210 = scmp.ne.s32.totalorder %s202, %s204
      %p211 = scmp.eq.s32.totalorder %s21, 3
      %p212 = por %p210, %p211
      %p213 = scmp.ne.s32.totalorder %s204, %s205
      %p214 = scmp.eq.s32.totalorder %s21, 0
      %p215 = por %p213, %p214
      %p216 = scmp.ne.s32.totalorder %s204, %s205
      %p217 = scmp.eq.s32.totalorder %s22, 3
      %p218 = por %p216, %p217
      %p220 = scmp.ne.s32.totalorder %s205, %s219
      %p221 = scmp.eq.s32.totalorder %s22, 0
      %p222 = por %p220, %p221
      %s224 = sadd.s32 %s223, 1
      %p227 = scmp.eq.s32.totalorder %s16, 3
      %p228 = scmp.ne.s32.totalorder %s223, %s225
      %p229 = scmp.eq.s32.totalorder %s16, 0
      %p230 = por %p228, %p229
      %p231 = scmp.ne.s32.totalorder %s223, %s225
      %p232 = scmp.eq.s32.totalorder %s21, 3
      %p233 = por %p231, %p232
      %p234 = scmp.ne.s32.totalorder %s225, %s226
      %p235 = scmp.eq.s32.totalorder %s21, 0
      %p236 = por %p234, %p235
      %p237 = scmp.ne.s32.totalorder %s225, %s226
      %p238 = scmp.eq.s32.totalorder %s22, 3
      %p239 = por %p237, %p238
      %p241 = scmp.ne.s32.totalorder %s226, %s240
      %p242 = scmp.eq.s32.totalorder %s22, 0
      %p243 = por %p241, %p242
      %p244 = scmp.le.s32.totalorder 1, %s16
      %p245 = scmp.lt.s32.totalorder %s16, 5
      %p246 = pnand %p244, %p245
      %p247 = pneg %p246
      // Predicated region
      $region9: #{_forward_impl.5} parent=5 // pred_check
        _
      $region10: #{_forward_impl.5} parent=5 // pred_check_branch
        %249 = sbr.rel (%p246) target = $region12
      $region11: #{_forward_impl.5} parent=5 // pred_region
        %s250 = ssub.s32 %s16, 1
        // Predicated region
        $region13: #{_forward_impl.5} parent=11 // pred_check
          %p251 = pneg %p89
        $region14: #{_forward_impl.5} parent=11 // pred_check_branch
          %253 = sbr.rel (%p251) target = $region16
        $region15: #{_forward_impl.5} parent=11 // pred_region
          _
        $region16: #{_forward_impl.5} parent=11 // pred_fallthru
          _
        // Predicated region
        $region17: #{_forward_impl.5} parent=11 // pred_check
          %p254 = pneg %p110
        $region18: #{_forward_impl.5} parent=11 // pred_check_branch
          %256 = sbr.rel (%p254) target = $region20
        $region19: #{_forward_impl.5} parent=11 // pred_region
          _
        $region20: #{_forward_impl.5} parent=11 // pred_fallthru
          _
        // Predicated region
        $region21: #{_forward_impl.5} parent=11 // pred_check
          %p257 = pneg %p131
        $region22: #{_forward_impl.5} parent=11 // pred_check_branch
          %259 = sbr.rel (%p257) target = $region24
        $region23: #{_forward_impl.5} parent=11 // pred_region
          _
        $region24: #{_forward_impl.5} parent=11 // pred_fallthru
          _
        // Predicated region
        $region25: #{_forward_impl.5} parent=11 // pred_check
          %p260 = pneg %p152
        $region26: #{_forward_impl.5} parent=11 // pred_check_branch
          %262 = sbr.rel (%p260) target = $region28
        $region27: #{_forward_impl.5} parent=11 // pred_region
          _
        $region28: #{_forward_impl.5} parent=11 // pred_fallthru
          _
        // Predicated region
        $region29: #{_forward_impl.5} parent=11 // pred_check
          %p263 = pneg %p173
        $region30: #{_forward_impl.5} parent=11 // pred_check_branch
          %265 = sbr.rel (%p263) target = $region32
        $region31: #{_forward_impl.5} parent=11 // pred_region
          _
        $region32: #{_forward_impl.5} parent=11 // pred_fallthru
          _
        // Predicated region
        $region33: #{_forward_impl.5} parent=11 // pred_check
          %p266 = pneg %p194
        $region34: #{_forward_impl.5} parent=11 // pred_check_branch
          %268 = sbr.rel (%p266) target = $region36
        $region35: #{_forward_impl.5} parent=11 // pred_region
          _
        $region36: #{_forward_impl.5} parent=11 // pred_fallthru
          _
        // Predicated region
        $region37: #{_forward_impl.5} parent=11 // pred_check
          %p269 = pneg %p215
        $region38: #{_forward_impl.5} parent=11 // pred_check_branch
          %271 = sbr.rel (%p269) target = $region40
        $region39: #{_forward_impl.5} parent=11 // pred_region
          _
        $region40: #{_forward_impl.5} parent=11 // pred_fallthru
          _
      $region12: #{_forward_impl.5} parent=5 // pred_fallthru
        _
      %p272 = scmp.lt.s32.totalorder %s16, 4
      // Predicated region
      $region41: #{_forward_impl.5} parent=5 // pred_check
        %p273 = pneg %p272
      $region42: #{_forward_impl.5} parent=5 // pred_check_branch
        %275 = sbr.rel (%p273) target = $region44
      $region43: #{_forward_impl.5} parent=5 // pred_region
        // Predicated region
        $region45: #{_forward_impl.5} parent=43 // pred_check
          %p276 = pneg %p36
        $region46: #{_forward_impl.5} parent=43 // pred_check_branch
          %278 = sbr.rel (%p276) target = $region48
        $region47: #{_forward_impl.5} parent=43 // pred_region
          %s279 = smul.u32 16, %s16
          %p280 = scmp.lt.s32.totalorder %s279, 63
          %s281 = scalar_select %p280, %s279, 63
          %s282 = scalar_lea.vmem %s0, %s281
          %s283 = smul.u32 16, %s16
        $region48: #{_forward_impl.5} parent=43 // pred_fallthru
          _
        // Predicated region
        $region49: #{_forward_impl.5} parent=43 // pred_check
          %p284 = pneg %p62
        $region50: #{_forward_impl.5} parent=43 // pred_check_branch
          %286 = sbr.rel (%p284) target = $region52
        $region51: #{_forward_impl.5} parent=43 // pred_region
          %s287 = smul.u32 256, %s16
          %p288 = scmp.lt.s32.totalorder %s287, 1023
          %s289 = scalar_select %p288, %s287, 1023
          %s290 = smul.addr %s289, 2
          %s291 = smul.addr %s290, 4
          %s292 = scalar_lea.vmem %s1, %s291
          %s293 = smul.u32 256, %s16
        $region52: #{_forward_impl.5} parent=43 // pred_fallthru
          _
      $region44: #{_forward_impl.5} parent=5 // pred_fallthru
        _
      %p294 = scmp.le.s32.totalorder 1, %s16
      %p295 = scmp.lt.s32.totalorder %s16, 5
      %p296 = pnand %p294, %p295
      %p297 = pneg %p296
      // Predicated region
      $region53: #{_forward_impl.5} parent=5 // pred_check
        _
      $region54: #{_forward_impl.5} parent=5 // pred_check_branch
        %299 = sbr.rel (%p296) target = $region56
      $region55: #{_forward_impl.5} parent=5 // pred_region
        %s300 = ssub.s32 %s16, 1
        %s301 = smul.u32 16, %s21
        %p302 = scmp.lt.s32.totalorder %s301, 63
        %s303 = scalar_select %p302, %s301, 63
        %s304 = scalar_lea.vmem %s0, %s303
        %p305 = pneg %p42
        %p306 = pneg %p39
        %s307 = smul.u32 256, %s21
        %p308 = scmp.lt.s32.totalorder %s307, 1023
        %s309 = scalar_select %p308, %s307, 1023
        %s310 = smul.addr %s309, 2
        %s311 = smul.addr %s310, 4
        %s312 = scalar_lea.vmem %s1, %s311
        %p313 = pneg %p68
        %p314 = pneg %p65
        %p315 = pneg %p89
        %p316 = pneg %p86
        %p317 = pneg %p110
        %p318 = pneg %p107
        %p319 = pneg %p131
        %p320 = pneg %p128
        %p321 = pneg %p152
        %p322 = pneg %p149
        %p323 = pneg %p173
        %p324 = pneg %p170
        %p325 = pneg %p194
        %p326 = pneg %p191
        %p327 = pneg %p215
        %p328 = pneg %p212
        %p329 = pneg %p236
        %p330 = pneg %p233
        %s331 = smul.u32 16, %s21
        %p332 = scmp.lt.s32.totalorder %s331, 63
        %s333 = scalar_select %p332, %s331, 63
        %s334 = scalar_lea.vmem %s0, %s333
        %s335 = smul.u32 16, %s21
        %s336 = smul.u32 256, %s21
        %p337 = scmp.lt.s32.totalorder %s336, 1023
        %s338 = scalar_select %p337, %s336, 1023
        %s339 = smul.addr %s338, 2
        %s340 = smul.addr %s339, 4
        %s341 = scalar_lea.vmem %s1, %s340
        %s342 = smul.u32 256, %s21
        %p343 = scmp.eq.s32.totalorder %s21, 0
        // Predicated region
        $region57: #{_forward_impl.5} parent=55 // pred_check
          %p344 = pneg %p343
        $region58: #{_forward_impl.5} parent=55 // pred_check_branch
          %346 = sbr.rel (%p344) target = $region60
        $region59: #{_forward_impl.5} parent=55 // pred_region
          %347 = vst [vmem:[#allocation2] sm:$0xf] 0.0
        $region60: #{_forward_impl.5} parent=55 // pred_fallthru
          _
        %v348 = vld [vmem:[#allocation2] sm:$0xf]
        %v349 = vld [vmem:[%s334] sm:$0xff]
        %v350 = vld [vmem:[%s334 + $0x8] sm:$0xff]
        %v351 = vld [vmem:[%s341] sm:$0xff]
        %v352 = vld [vmem:[%s341 + $0x8] sm:$0xff]
        %v353 = vld [vmem:[%s341 + $0x10] sm:$0xff]
        %v354 = vld [vmem:[%s341 + $0x18] sm:$0xff]
        %v355 = vld [vmem:[%s341 + $0x20] sm:$0xff]
        %v356 = vld [vmem:[%s341 + $0x28] sm:$0xff]
        %v357 = vld [vmem:[%s341 + $0x30] sm:$0xff]
        %v358 = vld [vmem:[%s341 + $0x38] sm:$0xff]
        %v359 = vld [vmem:[%s341 + $0x40] sm:$0xff]
        %v360 = vld [vmem:[%s341 + $0x48] sm:$0xff]
        %v361 = vld [vmem:[%s341 + $0x50] sm:$0xff]
        %v362 = vld [vmem:[%s341 + $0x58] sm:$0xff]
        %v363 = vld [vmem:[%s341 + $0x60] sm:$0xff]
        %v364 = vld [vmem:[%s341 + $0x68] sm:$0xff]
        %v365 = vld [vmem:[%s341 + $0x70] sm:$0xff]
        %v366 = vld [vmem:[%s341 + $0x78] sm:$0xff]
        %v367 = vld [vmem:[%s341 + $0x80] sm:$0xff]
        %v368 = vld [vmem:[%s341 + $0x88] sm:$0xff]
        %v369 = vld [vmem:[%s341 + $0x90] sm:$0xff]
        %v370 = vld [vmem:[%s341 + $0x98] sm:$0xff]
        %v371 = vld [vmem:[%s341 + $0xa0] sm:$0xff]
        %v372 = vld [vmem:[%s341 + $0xa8] sm:$0xff]
        %v373 = vld [vmem:[%s341 + $0xb0] sm:$0xff]
        %v374 = vld [vmem:[%s341 + $0xb8] sm:$0xff]
        %v375 = vld [vmem:[%s341 + $0xc0] sm:$0xff]
        %v376 = vld [vmem:[%s341 + $0xc8] sm:$0xff]
        %v377 = vld [vmem:[%s341 + $0xd0] sm:$0xff]
        %v378 = vld [vmem:[%s341 + $0xd8] sm:$0xff]
        %v379 = vld [vmem:[%s341 + $0xe0] sm:$0xff]
        %v380 = vld [vmem:[%s341 + $0xe8] sm:$0xff]
        %v381 = vld [vmem:[%s341 + $0xf0] sm:$0xff]
        %v382 = vld [vmem:[%s341 + $0xf8] sm:$0xff]
        %v383 = vld [vmem:[%s341 + $0x100] sm:$0xff]
        %v384 = vld [vmem:[%s341 + $0x108] sm:$0xff]
        %v385 = vld [vmem:[%s341 + $0x110] sm:$0xff]
        %v386 = vld [vmem:[%s341 + $0x118] sm:$0xff]
        %v387 = vld [vmem:[%s341 + $0x120] sm:$0xff]
        %v388 = vld [vmem:[%s341 + $0x128] sm:$0xff]
        %v389 = vld [vmem:[%s341 + $0x130] sm:$0xff]
        %v390 = vld [vmem:[%s341 + $0x138] sm:$0xff]
        %v391 = vld [vmem:[%s341 + $0x140] sm:$0xff]
        %v392 = vld [vmem:[%s341 + $0x148] sm:$0xff]
        %v393 = vld [vmem:[%s341 + $0x150] sm:$0xff]
        %v394 = vld [vmem:[%s341 + $0x158] sm:$0xff]
        %v395 = vld [vmem:[%s341 + $0x160] sm:$0xff]
        %v396 = vld [vmem:[%s341 + $0x168] sm:$0xff]
        %v397 = vld [vmem:[%s341 + $0x170] sm:$0xff]
        %v398 = vld [vmem:[%s341 + $0x178] sm:$0xff]
        %v399 = vld [vmem:[%s341 + $0x180] sm:$0xff]
        %v400 = vld [vmem:[%s341 + $0x188] sm:$0xff]
        %v401 = vld [vmem:[%s341 + $0x190] sm:$0xff]
        %v402 = vld [vmem:[%s341 + $0x198] sm:$0xff]
        %v403 = vld [vmem:[%s341 + $0x1a0] sm:$0xff]
        %v404 = vld [vmem:[%s341 + $0x1a8] sm:$0xff]
        %v405 = vld [vmem:[%s341 + $0x1b0] sm:$0xff]
        %v406 = vld [vmem:[%s341 + $0x1b8] sm:$0xff]
        %v407 = vld [vmem:[%s341 + $0x1c0] sm:$0xff]
        %v408 = vld [vmem:[%s341 + $0x1c8] sm:$0xff]
        %v409 = vld [vmem:[%s341 + $0x1d0] sm:$0xff]
        %v410 = vld [vmem:[%s341 + $0x1d8] sm:$0xff]
        %v411 = vld [vmem:[%s341 + $0x1e0] sm:$0xff]
        %v412 = vld [vmem:[%s341 + $0x1e8] sm:$0xff]
        %v413 = vld [vmem:[%s341 + $0x1f0] sm:$0xff]
        %v414 = vld [vmem:[%s341 + $0x1f8] sm:$0xff]
        %v415 = vld [vmem:[%s341 + $0x200] sm:$0xff]
        %v416 = vld [vmem:[%s341 + $0x208] sm:$0xff]
        %v417 = vld [vmem:[%s341 + $0x210] sm:$0xff]
        %v418 = vld [vmem:[%s341 + $0x218] sm:$0xff]
        %v419 = vld [vmem:[%s341 + $0x220] sm:$0xff]
        %v420 = vld [vmem:[%s341 + $0x228] sm:$0xff]
        %v421 = vld [vmem:[%s341 + $0x230] sm:$0xff]
        %v422 = vld [vmem:[%s341 + $0x238] sm:$0xff]
        %v423 = vld [vmem:[%s341 + $0x240] sm:$0xff]
        %v424 = vld [vmem:[%s341 + $0x248] sm:$0xff]
        %v425 = vld [vmem:[%s341 + $0x250] sm:$0xff]
        %v426 = vld [vmem:[%s341 + $0x258] sm:$0xff]
        %v427 = vld [vmem:[%s341 + $0x260] sm:$0xff]
        %v428 = vld [vmem:[%s341 + $0x268] sm:$0xff]
        %v429 = vld [vmem:[%s341 + $0x270] sm:$0xff]
        %v430 = vld [vmem:[%s341 + $0x278] sm:$0xff]
        %v431 = vld [vmem:[%s341 + $0x280] sm:$0xff]
        %v432 = vld [vmem:[%s341 + $0x288] sm:$0xff]
        %v433 = vld [vmem:[%s341 + $0x290] sm:$0xff]
        %v434 = vld [vmem:[%s341 + $0x298] sm:$0xff]
        %v435 = vld [vmem:[%s341 + $0x2a0] sm:$0xff]
        %v436 = vld [vmem:[%s341 + $0x2a8] sm:$0xff]
        %v437 = vld [vmem:[%s341 + $0x2b0] sm:$0xff]
        %v438 = vld [vmem:[%s341 + $0x2b8] sm:$0xff]
        %v439 = vld [vmem:[%s341 + $0x2c0] sm:$0xff]
        %v440 = vld [vmem:[%s341 + $0x2c8] sm:$0xff]
        %v441 = vld [vmem:[%s341 + $0x2d0] sm:$0xff]
        %v442 = vld [vmem:[%s341 + $0x2d8] sm:$0xff]
        %v443 = vld [vmem:[%s341 + $0x2e0] sm:$0xff]
        %v444 = vld [vmem:[%s341 + $0x2e8] sm:$0xff]
        %v445 = vld [vmem:[%s341 + $0x2f0] sm:$0xff]
        %v446 = vld [vmem:[%s341 + $0x2f8] sm:$0xff]
        %v447 = vld [vmem:[%s341 + $0x300] sm:$0xff]
        %v448 = vld [vmem:[%s341 + $0x308] sm:$0xff]
        %v449 = vld [vmem:[%s341 + $0x310] sm:$0xff]
        %v450 = vld [vmem:[%s341 + $0x318] sm:$0xff]
        %v451 = vld [vmem:[%s341 + $0x320] sm:$0xff]
        %v452 = vld [vmem:[%s341 + $0x328] sm:$0xff]
        %v453 = vld [vmem:[%s341 + $0x330] sm:$0xff]
        %v454 = vld [vmem:[%s341 + $0x338] sm:$0xff]
        %v455 = vld [vmem:[%s341 + $0x340] sm:$0xff]
        %v456 = vld [vmem:[%s341 + $0x348] sm:$0xff]
        %v457 = vld [vmem:[%s341 + $0x350] sm:$0xff]
        %v458 = vld [vmem:[%s341 + $0x358] sm:$0xff]
        %v459 = vld [vmem:[%s341 + $0x360] sm:$0xff]
        %v460 = vld [vmem:[%s341 + $0x368] sm:$0xff]
        %v461 = vld [vmem:[%s341 + $0x370] sm:$0xff]
        %v462 = vld [vmem:[%s341 + $0x378] sm:$0xff]
        %v463 = vld [vmem:[%s341 + $0x380] sm:$0xff]
        %v464 = vld [vmem:[%s341 + $0x388] sm:$0xff]
        %v465 = vld [vmem:[%s341 + $0x390] sm:$0xff]
        %v466 = vld [vmem:[%s341 + $0x398] sm:$0xff]
        %v467 = vld [vmem:[%s341 + $0x3a0] sm:$0xff]
        %v468 = vld [vmem:[%s341 + $0x3a8] sm:$0xff]
        %v469 = vld [vmem:[%s341 + $0x3b0] sm:$0xff]
        %v470 = vld [vmem:[%s341 + $0x3b8] sm:$0xff]
        %v471 = vld [vmem:[%s341 + $0x3c0] sm:$0xff]
        %v472 = vld [vmem:[%s341 + $0x3c8] sm:$0xff]
        %v473 = vld [vmem:[%s341 + $0x3d0] sm:$0xff]
        %v474 = vld [vmem:[%s341 + $0x3d8] sm:$0xff]
        %v475 = vld [vmem:[%s341 + $0x3e0] sm:$0xff]
        %v476 = vld [vmem:[%s341 + $0x3e8] sm:$0xff]
        %v477 = vld [vmem:[%s341 + $0x3f0] sm:$0xff]
        %v478 = vld [vmem:[%s341 + $0x3f8] sm:$0xff]
        %v479 = vld [vmem:[%s341 + $0x400] sm:$0xff]
        %v480 = vld [vmem:[%s341 + $0x408] sm:$0xff]
        %v481 = vld [vmem:[%s341 + $0x410] sm:$0xff]
        %v482 = vld [vmem:[%s341 + $0x418] sm:$0xff]
        %v483 = vld [vmem:[%s341 + $0x420] sm:$0xff]
        %v484 = vld [vmem:[%s341 + $0x428] sm:$0xff]
        %v485 = vld [vmem:[%s341 + $0x430] sm:$0xff]
        %v486 = vld [vmem:[%s341 + $0x438] sm:$0xff]
        %v487 = vld [vmem:[%s341 + $0x440] sm:$0xff]
        %v488 = vld [vmem:[%s341 + $0x448] sm:$0xff]
        %v489 = vld [vmem:[%s341 + $0x450] sm:$0xff]
        %v490 = vld [vmem:[%s341 + $0x458] sm:$0xff]
        %v491 = vld [vmem:[%s341 + $0x460] sm:$0xff]
        %v492 = vld [vmem:[%s341 + $0x468] sm:$0xff]
        %v493 = vld [vmem:[%s341 + $0x470] sm:$0xff]
        %v494 = vld [vmem:[%s341 + $0x478] sm:$0xff]
        %v495 = vld [vmem:[%s341 + $0x480] sm:$0xff]
        %v496 = vld [vmem:[%s341 + $0x488] sm:$0xff]
        %v497 = vld [vmem:[%s341 + $0x490] sm:$0xff]
        %v498 = vld [vmem:[%s341 + $0x498] sm:$0xff]
        %v499 = vld [vmem:[%s341 + $0x4a0] sm:$0xff]
        %v500 = vld [vmem:[%s341 + $0x4a8] sm:$0xff]
        %v501 = vld [vmem:[%s341 + $0x4b0] sm:$0xff]
        %v502 = vld [vmem:[%s341 + $0x4b8] sm:$0xff]
        %v503 = vld [vmem:[%s341 + $0x4c0] sm:$0xff]
        %v504 = vld [vmem:[%s341 + $0x4c8] sm:$0xff]
        %v505 = vld [vmem:[%s341 + $0x4d0] sm:$0xff]
        %v506 = vld [vmem:[%s341 + $0x4d8] sm:$0xff]
        %v507 = vld [vmem:[%s341 + $0x4e0] sm:$0xff]
        %v508 = vld [vmem:[%s341 + $0x4e8] sm:$0xff]
        %v509 = vld [vmem:[%s341 + $0x4f0] sm:$0xff]
        %v510 = vld [vmem:[%s341 + $0x4f8] sm:$0xff]
        %v511 = vld [vmem:[%s341 + $0x500] sm:$0xff]
        %v512 = vld [vmem:[%s341 + $0x508] sm:$0xff]
        %v513 = vld [vmem:[%s341 + $0x510] sm:$0xff]
        %v514 = vld [vmem:[%s341 + $0x518] sm:$0xff]
        %v515 = vld [vmem:[%s341 + $0x520] sm:$0xff]
        %v516 = vld [vmem:[%s341 + $0x528] sm:$0xff]
        %v517 = vld [vmem:[%s341 + $0x530] sm:$0xff]
        %v518 = vld [vmem:[%s341 + $0x538] sm:$0xff]
        %v519 = vld [vmem:[%s341 + $0x540] sm:$0xff]
        %v520 = vld [vmem:[%s341 + $0x548] sm:$0xff]
        %v521 = vld [vmem:[%s341 + $0x550] sm:$0xff]
        %v522 = vld [vmem:[%s341 + $0x558] sm:$0xff]
        %v523 = vld [vmem:[%s341 + $0x560] sm:$0xff]
        %v524 = vld [vmem:[%s341 + $0x568] sm:$0xff]
        %v525 = vld [vmem:[%s341 + $0x570] sm:$0xff]
        %v526 = vld [vmem:[%s341 + $0x578] sm:$0xff]
        %v527 = vld [vmem:[%s341 + $0x580] sm:$0xff]
        %v528 = vld [vmem:[%s341 + $0x588] sm:$0xff]
        %v529 = vld [vmem:[%s341 + $0x590] sm:$0xff]
        %v530 = vld [vmem:[%s341 + $0x598] sm:$0xff]
        %v531 = vld [vmem:[%s341 + $0x5a0] sm:$0xff]
        %v532 = vld [vmem:[%s341 + $0x5a8] sm:$0xff]
        %v533 = vld [vmem:[%s341 + $0x5b0] sm:$0xff]
        %v534 = vld [vmem:[%s341 + $0x5b8] sm:$0xff]
        %v535 = vld [vmem:[%s341 + $0x5c0] sm:$0xff]
        %v536 = vld [vmem:[%s341 + $0x5c8] sm:$0xff]
        %v537 = vld [vmem:[%s341 + $0x5d0] sm:$0xff]
        %v538 = vld [vmem:[%s341 + $0x5d8] sm:$0xff]
        %v539 = vld [vmem:[%s341 + $0x5e0] sm:$0xff]
        %v540 = vld [vmem:[%s341 + $0x5e8] sm:$0xff]
        %v541 = vld [vmem:[%s341 + $0x5f0] sm:$0xff]
        %v542 = vld [vmem:[%s341 + $0x5f8] sm:$0xff]
        %v543 = vld [vmem:[%s341 + $0x600] sm:$0xff]
        %v544 = vld [vmem:[%s341 + $0x608] sm:$0xff]
        %v545 = vld [vmem:[%s341 + $0x610] sm:$0xff]
        %v546 = vld [vmem:[%s341 + $0x618] sm:$0xff]
        %v547 = vld [vmem:[%s341 + $0x620] sm:$0xff]
        %v548 = vld [vmem:[%s341 + $0x628] sm:$0xff]
        %v549 = vld [vmem:[%s341 + $0x630] sm:$0xff]
        %v550 = vld [vmem:[%s341 + $0x638] sm:$0xff]
        %v551 = vld [vmem:[%s341 + $0x640] sm:$0xff]
        %v552 = vld [vmem:[%s341 + $0x648] sm:$0xff]
        %v553 = vld [vmem:[%s341 + $0x650] sm:$0xff]
        %v554 = vld [vmem:[%s341 + $0x658] sm:$0xff]
        %v555 = vld [vmem:[%s341 + $0x660] sm:$0xff]
        %v556 = vld [vmem:[%s341 + $0x668] sm:$0xff]
        %v557 = vld [vmem:[%s341 + $0x670] sm:$0xff]
        %v558 = vld [vmem:[%s341 + $0x678] sm:$0xff]
        %v559 = vld [vmem:[%s341 + $0x680] sm:$0xff]
        %v560 = vld [vmem:[%s341 + $0x688] sm:$0xff]
        %v561 = vld [vmem:[%s341 + $0x690] sm:$0xff]
        %v562 = vld [vmem:[%s341 + $0x698] sm:$0xff]
        %v563 = vld [vmem:[%s341 + $0x6a0] sm:$0xff]
        %v564 = vld [vmem:[%s341 + $0x6a8] sm:$0xff]
        %v565 = vld [vmem:[%s341 + $0x6b0] sm:$0xff]
        %v566 = vld [vmem:[%s341 + $0x6b8] sm:$0xff]
        %v567 = vld [vmem:[%s341 + $0x6c0] sm:$0xff]
        %v568 = vld [vmem:[%s341 + $0x6c8] sm:$0xff]
        %v569 = vld [vmem:[%s341 + $0x6d0] sm:$0xff]
        %v570 = vld [vmem:[%s341 + $0x6d8] sm:$0xff]
        %v571 = vld [vmem:[%s341 + $0x6e0] sm:$0xff]
        %v572 = vld [vmem:[%s341 + $0x6e8] sm:$0xff]
        %v573 = vld [vmem:[%s341 + $0x6f0] sm:$0xff]
        %v574 = vld [vmem:[%s341 + $0x6f8] sm:$0xff]
        %v575 = vld [vmem:[%s341 + $0x700] sm:$0xff]
        %v576 = vld [vmem:[%s341 + $0x708] sm:$0xff]
        %v577 = vld [vmem:[%s341 + $0x710] sm:$0xff]
        %v578 = vld [vmem:[%s341 + $0x718] sm:$0xff]
        %v579 = vld [vmem:[%s341 + $0x720] sm:$0xff]
        %v580 = vld [vmem:[%s341 + $0x728] sm:$0xff]
        %v581 = vld [vmem:[%s341 + $0x730] sm:$0xff]
        %v582 = vld [vmem:[%s341 + $0x738] sm:$0xff]
        %v583 = vld [vmem:[%s341 + $0x740] sm:$0xff]
        %v584 = vld [vmem:[%s341 + $0x748] sm:$0xff]
        %v585 = vld [vmem:[%s341 + $0x750] sm:$0xff]
        %v586 = vld [vmem:[%s341 + $0x758] sm:$0xff]
        %v587 = vld [vmem:[%s341 + $0x760] sm:$0xff]
        %v588 = vld [vmem:[%s341 + $0x768] sm:$0xff]
        %v589 = vld [vmem:[%s341 + $0x770] sm:$0xff]
        %v590 = vld [vmem:[%s341 + $0x778] sm:$0xff]
        %v591 = vld [vmem:[%s341 + $0x780] sm:$0xff]
        %v592 = vld [vmem:[%s341 + $0x788] sm:$0xff]
        %v593 = vld [vmem:[%s341 + $0x790] sm:$0xff]
        %v594 = vld [vmem:[%s341 + $0x798] sm:$0xff]
        %v595 = vld [vmem:[%s341 + $0x7a0] sm:$0xff]
        %v596 = vld [vmem:[%s341 + $0x7a8] sm:$0xff]
        %v597 = vld [vmem:[%s341 + $0x7b0] sm:$0xff]
        %v598 = vld [vmem:[%s341 + $0x7b8] sm:$0xff]
        %v599 = vld [vmem:[%s341 + $0x7c0] sm:$0xff]
        %v600 = vld [vmem:[%s341 + $0x7c8] sm:$0xff]
        %v601 = vld [vmem:[%s341 + $0x7d0] sm:$0xff]
        %v602 = vld [vmem:[%s341 + $0x7d8] sm:$0xff]
        %v603 = vld [vmem:[%s341 + $0x7e0] sm:$0xff]
        %v604 = vld [vmem:[%s341 + $0x7e8] sm:$0xff]
        %v605 = vld [vmem:[%s341 + $0x7f0] sm:$0xff]
        %v606 = vld [vmem:[%s341 + $0x7f8] sm:$0xff]
        %608 = vst [vmem:[#allocation1] ss:$9 sm:$0xff] %v349
        %v609 = vld [vmem:[#allocation1] sm:$0xff]
        %v610 = vld [vmem:[#allocation1 + $0x9] sm:$0xff]
        %v611 = vld [vmem:[#allocation1 + $0x12] sm:$0xff]
        %v612 = vld [vmem:[#allocation1 + $0x1b] sm:$0xff]
        %v613 = vld [vmem:[#allocation1 + $0x24] sm:$0xff]
        %v614 = vld [vmem:[#allocation1 + $0x2d] sm:$0xff]
        %v615 = vld [vmem:[#allocation1 + $0x36] sm:$0xff]
        %v616 = vld [vmem:[#allocation1 + $0x3f] sm:$0xff]
        %618 = vst [vmem:[#allocation1] ss:$9 sm:$0xff] %v350
        %v619 = vld [vmem:[#allocation1] sm:$0xff]
        %v620 = vld [vmem:[#allocation1 + $0x9] sm:$0xff]
        %v621 = vld [vmem:[#allocation1 + $0x12] sm:$0xff]
        %v622 = vld [vmem:[#allocation1 + $0x1b] sm:$0xff]
        %v623 = vld [vmem:[#allocation1 + $0x24] sm:$0xff]
        %v624 = vld [vmem:[#allocation1 + $0x2d] sm:$0xff]
        %v625 = vld [vmem:[#allocation1 + $0x36] sm:$0xff]
        %v626 = vld [vmem:[#allocation1 + $0x3f] sm:$0xff]
        %v899 = vunpack.c.l.b16 %v351
        %v900 = vunpack.c.h.b16 %v351
        %v901 = vunpack.c.l.b16 %v352
        %v902 = vunpack.c.h.b16 %v352
        %v903 = vunpack.c.l.b16 %v353
        %v904 = vunpack.c.h.b16 %v353
        %v905 = vunpack.c.l.b16 %v354
        %v906 = vunpack.c.h.b16 %v354
        %v907 = vunpack.c.l.b16 %v355
        %v908 = vunpack.c.h.b16 %v355
        %v909 = vunpack.c.l.b16 %v356
        %v910 = vunpack.c.h.b16 %v356
        %v911 = vunpack.c.l.b16 %v357
        %v912 = vunpack.c.h.b16 %v357
        %v913 = vunpack.c.l.b16 %v358
        %v914 = vunpack.c.h.b16 %v358
        %v915 = vunpack.c.l.b16 %v359
        %v916 = vunpack.c.h.b16 %v359
        %v917 = vunpack.c.l.b16 %v360
        %v918 = vunpack.c.h.b16 %v360
        %v919 = vunpack.c.l.b16 %v361
        %v920 = vunpack.c.h.b16 %v361
        %v921 = vunpack.c.l.b16 %v362
        %v922 = vunpack.c.h.b16 %v362
        %v923 = vunpack.c.l.b16 %v363
        %v924 = vunpack.c.h.b16 %v363
        %v925 = vunpack.c.l.b16 %v364
        %v926 = vunpack.c.h.b16 %v364
        %v927 = vunpack.c.l.b16 %v365
        %v928 = vunpack.c.h.b16 %v365
        %v929 = vunpack.c.l.b16 %v366
        %v930 = vunpack.c.h.b16 %v366
        %v931 = vunpack.c.l.b16 %v367
        %v932 = vunpack.c.h.b16 %v367
        %v933 = vunpack.c.l.b16 %v368
        %v934 = vunpack.c.h.b16 %v368
        %v935 = vunpack.c.l.b16 %v369
        %v936 = vunpack.c.h.b16 %v369
        %v937 = vunpack.c.l.b16 %v370
        %v938 = vunpack.c.h.b16 %v370
        %v939 = vunpack.c.l.b16 %v371
        %v940 = vunpack.c.h.b16 %v371
        %v941 = vunpack.c.l.b16 %v372
        %v942 = vunpack.c.h.b16 %v372
        %v943 = vunpack.c.l.b16 %v373
        %v944 = vunpack.c.h.b16 %v373
        %v945 = vunpack.c.l.b16 %v374
        %v946 = vunpack.c.h.b16 %v374
        %v947 = vunpack.c.l.b16 %v375
        %v948 = vunpack.c.h.b16 %v375
        %v949 = vunpack.c.l.b16 %v376
        %v950 = vunpack.c.h.b16 %v376
        %v951 = vunpack.c.l.b16 %v377
        %v952 = vunpack.c.h.b16 %v377
        %v953 = vunpack.c.l.b16 %v378
        %v954 = vunpack.c.h.b16 %v378
        %v955 = vunpack.c.l.b16 %v379
        %v956 = vunpack.c.h.b16 %v379
        %v957 = vunpack.c.l.b16 %v380
        %v958 = vunpack.c.h.b16 %v380
        %v959 = vunpack.c.l.b16 %v381
        %v960 = vunpack.c.h.b16 %v381
        %v961 = vunpack.c.l.b16 %v382
        %v962 = vunpack.c.h.b16 %v382
        %v963 = vunpack.c.l.b16 %v383
        %v964 = vunpack.c.h.b16 %v383
        %v965 = vunpack.c.l.b16 %v384
        %v966 = vunpack.c.h.b16 %v384
        %v967 = vunpack.c.l.b16 %v385
        %v968 = vunpack.c.h.b16 %v385
        %v969 = vunpack.c.l.b16 %v386
        %v970 = vunpack.c.h.b16 %v386
        %v971 = vunpack.c.l.b16 %v387
        %v972 = vunpack.c.h.b16 %v387
        %v973 = vunpack.c.l.b16 %v388
        %v974 = vunpack.c.h.b16 %v388
        %v975 = vunpack.c.l.b16 %v389
        %v976 = vunpack.c.h.b16 %v389
        %v977 = vunpack.c.l.b16 %v390
        %v978 = vunpack.c.h.b16 %v390
        %v979 = vunpack.c.l.b16 %v391
        %v980 = vunpack.c.h.b16 %v391
        %v981 = vunpack.c.l.b16 %v392
        %v982 = vunpack.c.h.b16 %v392
        %v983 = vunpack.c.l.b16 %v393
        %v984 = vunpack.c.h.b16 %v393
        %v985 = vunpack.c.l.b16 %v394
        %v986 = vunpack.c.h.b16 %v394
        %v987 = vunpack.c.l.b16 %v395
        %v988 = vunpack.c.h.b16 %v395
        %v989 = vunpack.c.l.b16 %v396
        %v990 = vunpack.c.h.b16 %v396
        %v991 = vunpack.c.l.b16 %v397
        %v992 = vunpack.c.h.b16 %v397
        %v993 = vunpack.c.l.b16 %v398
        %v994 = vunpack.c.h.b16 %v398
        %v995 = vunpack.c.l.b16 %v399
        %v996 = vunpack.c.h.b16 %v399
        %v997 = vunpack.c.l.b16 %v400
        %v998 = vunpack.c.h.b16 %v400
        %v999 = vunpack.c.l.b16 %v401
        %v1000 = vunpack.c.h.b16 %v401
        %v1001 = vunpack.c.l.b16 %v402
        %v1002 = vunpack.c.h.b16 %v402
        %v1003 = vunpack.c.l.b16 %v403
        %v1004 = vunpack.c.h.b16 %v403
        %v1005 = vunpack.c.l.b16 %v404
        %v1006 = vunpack.c.h.b16 %v404
        %v1007 = vunpack.c.l.b16 %v405
        %v1008 = vunpack.c.h.b16 %v405
        %v1009 = vunpack.c.l.b16 %v406
        %v1010 = vunpack.c.h.b16 %v406
        %v1011 = vunpack.c.l.b16 %v407
        %v1012 = vunpack.c.h.b16 %v407
        %v1013 = vunpack.c.l.b16 %v408
        %v1014 = vunpack.c.h.b16 %v408
        %v1015 = vunpack.c.l.b16 %v409
        %v1016 = vunpack.c.h.b16 %v409
        %v1017 = vunpack.c.l.b16 %v410
        %v1018 = vunpack.c.h.b16 %v410
        %v1019 = vunpack.c.l.b16 %v411
        %v1020 = vunpack.c.h.b16 %v411
        %v1021 = vunpack.c.l.b16 %v412
        %v1022 = vunpack.c.h.b16 %v412
        %v1023 = vunpack.c.l.b16 %v413
        %v1024 = vunpack.c.h.b16 %v413
        %v1025 = vunpack.c.l.b16 %v414
        %v1026 = vunpack.c.h.b16 %v414
        %v1027 = vunpack.c.l.b16 %v415
        %v1028 = vunpack.c.h.b16 %v415
        %v1029 = vunpack.c.l.b16 %v416
        %v1030 = vunpack.c.h.b16 %v416
        %v1031 = vunpack.c.l.b16 %v417
        %v1032 = vunpack.c.h.b16 %v417
        %v1033 = vunpack.c.l.b16 %v418
        %v1034 = vunpack.c.h.b16 %v418
        %v1035 = vunpack.c.l.b16 %v419
        %v1036 = vunpack.c.h.b16 %v419
        %v1037 = vunpack.c.l.b16 %v420
        %v1038 = vunpack.c.h.b16 %v420
        %v1039 = vunpack.c.l.b16 %v421
        %v1040 = vunpack.c.h.b16 %v421
        %v1041 = vunpack.c.l.b16 %v422
        %v1042 = vunpack.c.h.b16 %v422
        %v1043 = vunpack.c.l.b16 %v423
        %v1044 = vunpack.c.h.b16 %v423
        %v1045 = vunpack.c.l.b16 %v424
        %v1046 = vunpack.c.h.b16 %v424
        %v1047 = vunpack.c.l.b16 %v425
        %v1048 = vunpack.c.h.b16 %v425
        %v1049 = vunpack.c.l.b16 %v426
        %v1050 = vunpack.c.h.b16 %v426
        %v1051 = vunpack.c.l.b16 %v427
        %v1052 = vunpack.c.h.b16 %v427
        %v1053 = vunpack.c.l.b16 %v428
        %v1054 = vunpack.c.h.b16 %v428
        %v1055 = vunpack.c.l.b16 %v429
        %v1056 = vunpack.c.h.b16 %v429
        %v1057 = vunpack.c.l.b16 %v430
        %v1058 = vunpack.c.h.b16 %v430
        %v1059 = vunpack.c.l.b16 %v431
        %v1060 = vunpack.c.h.b16 %v431
        %v1061 = vunpack.c.l.b16 %v432
        %v1062 = vunpack.c.h.b16 %v432
        %v1063 = vunpack.c.l.b16 %v433
        %v1064 = vunpack.c.h.b16 %v433
        %v1065 = vunpack.c.l.b16 %v434
        %v1066 = vunpack.c.h.b16 %v434
        %v1067 = vunpack.c.l.b16 %v435
        %v1068 = vunpack.c.h.b16 %v435
        %v1069 = vunpack.c.l.b16 %v436
        %v1070 = vunpack.c.h.b16 %v436
        %v1071 = vunpack.c.l.b16 %v437
        %v1072 = vunpack.c.h.b16 %v437
        %v1073 = vunpack.c.l.b16 %v438
        %v1074 = vunpack.c.h.b16 %v438
        %v1075 = vunpack.c.l.b16 %v439
        %v1076 = vunpack.c.h.b16 %v439
        %v1077 = vunpack.c.l.b16 %v440
        %v1078 = vunpack.c.h.b16 %v440
        %v1079 = vunpack.c.l.b16 %v441
        %v1080 = vunpack.c.h.b16 %v441
        %v1081 = vunpack.c.l.b16 %v442
        %v1082 = vunpack.c.h.b16 %v442
        %v1083 = vunpack.c.l.b16 %v443
        %v1084 = vunpack.c.h.b16 %v443
        %v1085 = vunpack.c.l.b16 %v444
        %v1086 = vunpack.c.h.b16 %v444
        %v1087 = vunpack.c.l.b16 %v445
        %v1088 = vunpack.c.h.b16 %v445
        %v1089 = vunpack.c.l.b16 %v446
        %v1090 = vunpack.c.h.b16 %v446
        %v1091 = vunpack.c.l.b16 %v447
        %v1092 = vunpack.c.h.b16 %v447
        %v1093 = vunpack.c.l.b16 %v448
        %v1094 = vunpack.c.h.b16 %v448
        %v1095 = vunpack.c.l.b16 %v449
        %v1096 = vunpack.c.h.b16 %v449
        %v1097 = vunpack.c.l.b16 %v450
        %v1098 = vunpack.c.h.b16 %v450
        %v1099 = vunpack.c.l.b16 %v451
        %v1100 = vunpack.c.h.b16 %v451
        %v1101 = vunpack.c.l.b16 %v452
        %v1102 = vunpack.c.h.b16 %v452
        %v1103 = vunpack.c.l.b16 %v453
        %v1104 = vunpack.c.h.b16 %v453
        %v1105 = vunpack.c.l.b16 %v454
        %v1106 = vunpack.c.h.b16 %v454
        %v1107 = vunpack.c.l.b16 %v455
        %v1108 = vunpack.c.h.b16 %v455
        %v1109 = vunpack.c.l.b16 %v456
        %v1110 = vunpack.c.h.b16 %v456
        %v1111 = vunpack.c.l.b16 %v457
        %v1112 = vunpack.c.h.b16 %v457
        %v1113 = vunpack.c.l.b16 %v458
        %v1114 = vunpack.c.h.b16 %v458
        %v1115 = vunpack.c.l.b16 %v459
        %v1116 = vunpack.c.h.b16 %v459
        %v1117 = vunpack.c.l.b16 %v460
        %v1118 = vunpack.c.h.b16 %v460
        %v1119 = vunpack.c.l.b16 %v461
        %v1120 = vunpack.c.h.b16 %v461
        %v1121 = vunpack.c.l.b16 %v462
        %v1122 = vunpack.c.h.b16 %v462
        %v1123 = vunpack.c.l.b16 %v463
        %v1124 = vunpack.c.h.b16 %v463
        %v1125 = vunpack.c.l.b16 %v464
        %v1126 = vunpack.c.h.b16 %v464
        %v1127 = vunpack.c.l.b16 %v465
        %v1128 = vunpack.c.h.b16 %v465
        %v1129 = vunpack.c.l.b16 %v466
        %v1130 = vunpack.c.h.b16 %v466
        %v1131 = vunpack.c.l.b16 %v467
        %v1132 = vunpack.c.h.b16 %v467
        %v1133 = vunpack.c.l.b16 %v468
        %v1134 = vunpack.c.h.b16 %v468
        %v1135 = vunpack.c.l.b16 %v469
        %v1136 = vunpack.c.h.b16 %v469
        %v1137 = vunpack.c.l.b16 %v470
        %v1138 = vunpack.c.h.b16 %v470
        %v1139 = vunpack.c.l.b16 %v471
        %v1140 = vunpack.c.h.b16 %v471
        %v1141 = vunpack.c.l.b16 %v472
        %v1142 = vunpack.c.h.b16 %v472
        %v1143 = vunpack.c.l.b16 %v473
        %v1144 = vunpack.c.h.b16 %v473
        %v1145 = vunpack.c.l.b16 %v474
        %v1146 = vunpack.c.h.b16 %v474
        %v1147 = vunpack.c.l.b16 %v475
        %v1148 = vunpack.c.h.b16 %v475
        %v1149 = vunpack.c.l.b16 %v476
        %v1150 = vunpack.c.h.b16 %v476
        %v1151 = vunpack.c.l.b16 %v477
        %v1152 = vunpack.c.h.b16 %v477
        %v1153 = vunpack.c.l.b16 %v478
        %v1154 = vunpack.c.h.b16 %v478
        %v1155 = vunpack.c.l.b16 %v479
        %v1156 = vunpack.c.h.b16 %v479
        %v1157 = vunpack.c.l.b16 %v480
        %v1158 = vunpack.c.h.b16 %v480
        %v1159 = vunpack.c.l.b16 %v481
        %v1160 = vunpack.c.h.b16 %v481
        %v1161 = vunpack.c.l.b16 %v482
        %v1162 = vunpack.c.h.b16 %v482
        %v1163 = vunpack.c.l.b16 %v483
        %v1164 = vunpack.c.h.b16 %v483
        %v1165 = vunpack.c.l.b16 %v484
        %v1166 = vunpack.c.h.b16 %v484
        %v1167 = vunpack.c.l.b16 %v485
        %v1168 = vunpack.c.h.b16 %v485
        %v1169 = vunpack.c.l.b16 %v486
        %v1170 = vunpack.c.h.b16 %v486
        %v1171 = vunpack.c.l.b16 %v487
        %v1172 = vunpack.c.h.b16 %v487
        %v1173 = vunpack.c.l.b16 %v488
        %v1174 = vunpack.c.h.b16 %v488
        %v1175 = vunpack.c.l.b16 %v489
        %v1176 = vunpack.c.h.b16 %v489
        %v1177 = vunpack.c.l.b16 %v490
        %v1178 = vunpack.c.h.b16 %v490
        %v1179 = vunpack.c.l.b16 %v491
        %v1180 = vunpack.c.h.b16 %v491
        %v1181 = vunpack.c.l.b16 %v492
        %v1182 = vunpack.c.h.b16 %v492
        %v1183 = vunpack.c.l.b16 %v493
        %v1184 = vunpack.c.h.b16 %v493
        %v1185 = vunpack.c.l.b16 %v494
        %v1186 = vunpack.c.h.b16 %v494
        %v1187 = vunpack.c.l.b16 %v495
        %v1188 = vunpack.c.h.b16 %v495
        %v1189 = vunpack.c.l.b16 %v496
        %v1190 = vunpack.c.h.b16 %v496
        %v1191 = vunpack.c.l.b16 %v497
        %v1192 = vunpack.c.h.b16 %v497
        %v1193 = vunpack.c.l.b16 %v498
        %v1194 = vunpack.c.h.b16 %v498
        %v1195 = vunpack.c.l.b16 %v499
        %v1196 = vunpack.c.h.b16 %v499
        %v1197 = vunpack.c.l.b16 %v500
        %v1198 = vunpack.c.h.b16 %v500
        %v1199 = vunpack.c.l.b16 %v501
        %v1200 = vunpack.c.h.b16 %v501
        %v1201 = vunpack.c.l.b16 %v502
        %v1202 = vunpack.c.h.b16 %v502
        %v1203 = vunpack.c.l.b16 %v503
        %v1204 = vunpack.c.h.b16 %v503
        %v1205 = vunpack.c.l.b16 %v504
        %v1206 = vunpack.c.h.b16 %v504
        %v1207 = vunpack.c.l.b16 %v505
        %v1208 = vunpack.c.h.b16 %v505
        %v1209 = vunpack.c.l.b16 %v506
        %v1210 = vunpack.c.h.b16 %v506
        %v1211 = vunpack.c.l.b16 %v507
        %v1212 = vunpack.c.h.b16 %v507
        %v1213 = vunpack.c.l.b16 %v508
        %v1214 = vunpack.c.h.b16 %v508
        %v1215 = vunpack.c.l.b16 %v509
        %v1216 = vunpack.c.h.b16 %v509
        %v1217 = vunpack.c.l.b16 %v510
        %v1218 = vunpack.c.h.b16 %v510
        %v1219 = vunpack.c.l.b16 %v511
        %v1220 = vunpack.c.h.b16 %v511
        %v1221 = vunpack.c.l.b16 %v512
        %v1222 = vunpack.c.h.b16 %v512
        %v1223 = vunpack.c.l.b16 %v513
        %v1224 = vunpack.c.h.b16 %v513
        %v1225 = vunpack.c.l.b16 %v514
        %v1226 = vunpack.c.h.b16 %v514
        %v1227 = vunpack.c.l.b16 %v515
        %v1228 = vunpack.c.h.b16 %v515
        %v1229 = vunpack.c.l.b16 %v516
        %v1230 = vunpack.c.h.b16 %v516
        %v1231 = vunpack.c.l.b16 %v517
        %v1232 = vunpack.c.h.b16 %v517
        %v1233 = vunpack.c.l.b16 %v518
        %v1234 = vunpack.c.h.b16 %v518
        %v1235 = vunpack.c.l.b16 %v519
        %v1236 = vunpack.c.h.b16 %v519
        %v1237 = vunpack.c.l.b16 %v520
        %v1238 = vunpack.c.h.b16 %v520
        %v1239 = vunpack.c.l.b16 %v521
        %v1240 = vunpack.c.h.b16 %v521
        %v1241 = vunpack.c.l.b16 %v522
        %v1242 = vunpack.c.h.b16 %v522
        %v1243 = vunpack.c.l.b16 %v523
        %v1244 = vunpack.c.h.b16 %v523
        %v1245 = vunpack.c.l.b16 %v524
        %v1246 = vunpack.c.h.b16 %v524
        %v1247 = vunpack.c.l.b16 %v525
        %v1248 = vunpack.c.h.b16 %v525
        %v1249 = vunpack.c.l.b16 %v526
        %v1250 = vunpack.c.h.b16 %v526
        %v1251 = vunpack.c.l.b16 %v527
        %v1252 = vunpack.c.h.b16 %v527
        %v1253 = vunpack.c.l.b16 %v528
        %v1254 = vunpack.c.h.b16 %v528
        %v1255 = vunpack.c.l.b16 %v529
        %v1256 = vunpack.c.h.b16 %v529
        %v1257 = vunpack.c.l.b16 %v530
        %v1258 = vunpack.c.h.b16 %v530
        %v1259 = vunpack.c.l.b16 %v531
        %v1260 = vunpack.c.h.b16 %v531
        %v1261 = vunpack.c.l.b16 %v532
        %v1262 = vunpack.c.h.b16 %v532
        %v1263 = vunpack.c.l.b16 %v533
        %v1264 = vunpack.c.h.b16 %v533
        %v1265 = vunpack.c.l.b16 %v534
        %v1266 = vunpack.c.h.b16 %v534
        %v1267 = vunpack.c.l.b16 %v535
        %v1268 = vunpack.c.h.b16 %v535
        %v1269 = vunpack.c.l.b16 %v536
        %v1270 = vunpack.c.h.b16 %v536
        %v1271 = vunpack.c.l.b16 %v537
        %v1272 = vunpack.c.h.b16 %v537
        %v1273 = vunpack.c.l.b16 %v538
        %v1274 = vunpack.c.h.b16 %v538
        %v1275 = vunpack.c.l.b16 %v539
        %v1276 = vunpack.c.h.b16 %v539
        %v1277 = vunpack.c.l.b16 %v540
        %v1278 = vunpack.c.h.b16 %v540
        %v1279 = vunpack.c.l.b16 %v541
        %v1280 = vunpack.c.h.b16 %v541
        %v1281 = vunpack.c.l.b16 %v542
        %v1282 = vunpack.c.h.b16 %v542
        %v1283 = vunpack.c.l.b16 %v543
        %v1284 = vunpack.c.h.b16 %v543
        %v1285 = vunpack.c.l.b16 %v544
        %v1286 = vunpack.c.h.b16 %v544
        %v1287 = vunpack.c.l.b16 %v545
        %v1288 = vunpack.c.h.b16 %v545
        %v1289 = vunpack.c.l.b16 %v546
        %v1290 = vunpack.c.h.b16 %v546
        %v1291 = vunpack.c.l.b16 %v547
        %v1292 = vunpack.c.h.b16 %v547
        %v1293 = vunpack.c.l.b16 %v548
        %v1294 = vunpack.c.h.b16 %v548
        %v1295 = vunpack.c.l.b16 %v549
        %v1296 = vunpack.c.h.b16 %v549
        %v1297 = vunpack.c.l.b16 %v550
        %v1298 = vunpack.c.h.b16 %v550
        %v1299 = vunpack.c.l.b16 %v551
        %v1300 = vunpack.c.h.b16 %v551
        %v1301 = vunpack.c.l.b16 %v552
        %v1302 = vunpack.c.h.b16 %v552
        %v1303 = vunpack.c.l.b16 %v553
        %v1304 = vunpack.c.h.b16 %v553
        %v1305 = vunpack.c.l.b16 %v554
        %v1306 = vunpack.c.h.b16 %v554
        %v1307 = vunpack.c.l.b16 %v555
        %v1308 = vunpack.c.h.b16 %v555
        %v1309 = vunpack.c.l.b16 %v556
        %v1310 = vunpack.c.h.b16 %v556
        %v1311 = vunpack.c.l.b16 %v557
        %v1312 = vunpack.c.h.b16 %v557
        %v1313 = vunpack.c.l.b16 %v558
        %v1314 = vunpack.c.h.b16 %v558
        %v1315 = vunpack.c.l.b16 %v559
        %v1316 = vunpack.c.h.b16 %v559
        %v1317 = vunpack.c.l.b16 %v560
        %v1318 = vunpack.c.h.b16 %v560
        %v1319 = vunpack.c.l.b16 %v561
        %v1320 = vunpack.c.h.b16 %v561
        %v1321 = vunpack.c.l.b16 %v562
        %v1322 = vunpack.c.h.b16 %v562
        %v1323 = vunpack.c.l.b16 %v563
        %v1324 = vunpack.c.h.b16 %v563
        %v1325 = vunpack.c.l.b16 %v564
        %v1326 = vunpack.c.h.b16 %v564
        %v1327 = vunpack.c.l.b16 %v565
        %v1328 = vunpack.c.h.b16 %v565
        %v1329 = vunpack.c.l.b16 %v566
        %v1330 = vunpack.c.h.b16 %v566
        %v1331 = vunpack.c.l.b16 %v567
        %v1332 = vunpack.c.h.b16 %v567
        %v1333 = vunpack.c.l.b16 %v568
        %v1334 = vunpack.c.h.b16 %v568
        %v1335 = vunpack.c.l.b16 %v569
        %v1336 = vunpack.c.h.b16 %v569
        %v1337 = vunpack.c.l.b16 %v570
        %v1338 = vunpack.c.h.b16 %v570
        %v1339 = vunpack.c.l.b16 %v571
        %v1340 = vunpack.c.h.b16 %v571
        %v1341 = vunpack.c.l.b16 %v572
        %v1342 = vunpack.c.h.b16 %v572
        %v1343 = vunpack.c.l.b16 %v573
        %v1344 = vunpack.c.h.b16 %v573
        %v1345 = vunpack.c.l.b16 %v574
        %v1346 = vunpack.c.h.b16 %v574
        %v1347 = vunpack.c.l.b16 %v575
        %v1348 = vunpack.c.h.b16 %v575
        %v1349 = vunpack.c.l.b16 %v576
        %v1350 = vunpack.c.h.b16 %v576
        %v1351 = vunpack.c.l.b16 %v577
        %v1352 = vunpack.c.h.b16 %v577
        %v1353 = vunpack.c.l.b16 %v578
        %v1354 = vunpack.c.h.b16 %v578
        %v1355 = vunpack.c.l.b16 %v579
        %v1356 = vunpack.c.h.b16 %v579
        %v1357 = vunpack.c.l.b16 %v580
        %v1358 = vunpack.c.h.b16 %v580
        %v1359 = vunpack.c.l.b16 %v581
        %v1360 = vunpack.c.h.b16 %v581
        %v1361 = vunpack.c.l.b16 %v582
        %v1362 = vunpack.c.h.b16 %v582
        %v1363 = vunpack.c.l.b16 %v583
        %v1364 = vunpack.c.h.b16 %v583
        %v1365 = vunpack.c.l.b16 %v584
        %v1366 = vunpack.c.h.b16 %v584
        %v1367 = vunpack.c.l.b16 %v585
        %v1368 = vunpack.c.h.b16 %v585
        %v1369 = vunpack.c.l.b16 %v586
        %v1370 = vunpack.c.h.b16 %v586
        %v1371 = vunpack.c.l.b16 %v587
        %v1372 = vunpack.c.h.b16 %v587
        %v1373 = vunpack.c.l.b16 %v588
        %v1374 = vunpack.c.h.b16 %v588
        %v1375 = vunpack.c.l.b16 %v589
        %v1376 = vunpack.c.h.b16 %v589
        %v1377 = vunpack.c.l.b16 %v590
        %v1378 = vunpack.c.h.b16 %v590
        %v1379 = vunpack.c.l.b16 %v591
        %v1380 = vunpack.c.h.b16 %v591
        %v1381 = vunpack.c.l.b16 %v592
        %v1382 = vunpack.c.h.b16 %v592
        %v1383 = vunpack.c.l.b16 %v593
        %v1384 = vunpack.c.h.b16 %v593
        %v1385 = vunpack.c.l.b16 %v594
        %v1386 = vunpack.c.h.b16 %v594
        %v1387 = vunpack.c.l.b16 %v595
        %v1388 = vunpack.c.h.b16 %v595
        %v1389 = vunpack.c.l.b16 %v596
        %v1390 = vunpack.c.h.b16 %v596
        %v1391 = vunpack.c.l.b16 %v597
        %v1392 = vunpack.c.h.b16 %v597
        %v1393 = vunpack.c.l.b16 %v598
        %v1394 = vunpack.c.h.b16 %v598
        %v1395 = vunpack.c.l.b16 %v599
        %v1396 = vunpack.c.h.b16 %v599
        %v1397 = vunpack.c.l.b16 %v600
        %v1398 = vunpack.c.h.b16 %v600
        %v1399 = vunpack.c.l.b16 %v601
        %v1400 = vunpack.c.h.b16 %v601
        %v1401 = vunpack.c.l.b16 %v602
        %v1402 = vunpack.c.h.b16 %v602
        %v1403 = vunpack.c.l.b16 %v603
        %v1404 = vunpack.c.h.b16 %v603
        %v1405 = vunpack.c.l.b16 %v604
        %v1406 = vunpack.c.h.b16 %v604
        %v1407 = vunpack.c.l.b16 %v605
        %v1408 = vunpack.c.h.b16 %v605
        %v1409 = vunpack.c.l.b16 %v606
        %v1410 = vunpack.c.h.b16 %v606
        %v1411 = vpack.c.b16 %v901, %v899
        %v1412 = vpack.c.b16 %v902, %v900
        %v1413 = vpack.c.b16 %v905, %v903
        %v1414 = vpack.c.b16 %v906, %v904
        %v1415 = vpack.c.b16 %v909, %v907
        %v1416 = vpack.c.b16 %v910, %v908
        %v1417 = vpack.c.b16 %v913, %v911
        %v1418 = vpack.c.b16 %v914, %v912
        %v1419 = vpack.c.b16 %v917, %v915
        %v1420 = vpack.c.b16 %v918, %v916
        %v1421 = vpack.c.b16 %v921, %v919
        %v1422 = vpack.c.b16 %v922, %v920
        %v1423 = vpack.c.b16 %v925, %v923
        %v1424 = vpack.c.b16 %v926, %v924
        %v1425 = vpack.c.b16 %v929, %v927
        %v1426 = vpack.c.b16 %v930, %v928
        %v1427 = vpack.c.b16 %v933, %v931
        %v1428 = vpack.c.b16 %v934, %v932
        %v1429 = vpack.c.b16 %v937, %v935
        %v1430 = vpack.c.b16 %v938, %v936
        %v1431 = vpack.c.b16 %v941, %v939
        %v1432 = vpack.c.b16 %v942, %v940
        %v1433 = vpack.c.b16 %v945, %v943
        %v1434 = vpack.c.b16 %v946, %v944
        %v1435 = vpack.c.b16 %v949, %v947
        %v1436 = vpack.c.b16 %v950, %v948
        %v1437 = vpack.c.b16 %v953, %v951
        %v1438 = vpack.c.b16 %v954, %v952
        %v1439 = vpack.c.b16 %v957, %v955
        %v1440 = vpack.c.b16 %v958, %v956
        %v1441 = vpack.c.b16 %v961, %v959
        %v1442 = vpack.c.b16 %v962, %v960
        %v1443 = vpack.c.b16 %v965, %v963
        %v1444 = vpack.c.b16 %v966, %v964
        %v1445 = vpack.c.b16 %v969, %v967
        %v1446 = vpack.c.b16 %v970, %v968
        %v1447 = vpack.c.b16 %v973, %v971
        %v1448 = vpack.c.b16 %v974, %v972
        %v1449 = vpack.c.b16 %v977, %v975
        %v1450 = vpack.c.b16 %v978, %v976
        %v1451 = vpack.c.b16 %v981, %v979
        %v1452 = vpack.c.b16 %v982, %v980
        %v1453 = vpack.c.b16 %v985, %v983
        %v1454 = vpack.c.b16 %v986, %v984
        %v1455 = vpack.c.b16 %v989, %v987
        %v1456 = vpack.c.b16 %v990, %v988
        %v1457 = vpack.c.b16 %v993, %v991
        %v1458 = vpack.c.b16 %v994, %v992
        %v1459 = vpack.c.b16 %v997, %v995
        %v1460 = vpack.c.b16 %v998, %v996
        %v1461 = vpack.c.b16 %v1001, %v999
        %v1462 = vpack.c.b16 %v1002, %v1000
        %v1463 = vpack.c.b16 %v1005, %v1003
        %v1464 = vpack.c.b16 %v1006, %v1004
        %v1465 = vpack.c.b16 %v1009, %v1007
        %v1466 = vpack.c.b16 %v1010, %v1008
        %v1467 = vpack.c.b16 %v1013, %v1011
        %v1468 = vpack.c.b16 %v1014, %v1012
        %v1469 = vpack.c.b16 %v1017, %v1015
        %v1470 = vpack.c.b16 %v1018, %v1016
        %v1471 = vpack.c.b16 %v1021, %v1019
        %v1472 = vpack.c.b16 %v1022, %v1020
        %v1473 = vpack.c.b16 %v1025, %v1023
        %v1474 = vpack.c.b16 %v1026, %v1024
        %v1475 = vpack.c.b16 %v1029, %v1027
        %v1476 = vpack.c.b16 %v1030, %v1028
        %v1477 = vpack.c.b16 %v1033, %v1031
        %v1478 = vpack.c.b16 %v1034, %v1032
        %v1479 = vpack.c.b16 %v1037, %v1035
        %v1480 = vpack.c.b16 %v1038, %v1036
        %v1481 = vpack.c.b16 %v1041, %v1039
        %v1482 = vpack.c.b16 %v1042, %v1040
        %v1483 = vpack.c.b16 %v1045, %v1043
        %v1484 = vpack.c.b16 %v1046, %v1044
        %v1485 = vpack.c.b16 %v1049, %v1047
        %v1486 = vpack.c.b16 %v1050, %v1048
        %v1487 = vpack.c.b16 %v1053, %v1051
        %v1488 = vpack.c.b16 %v1054, %v1052
        %v1489 = vpack.c.b16 %v1057, %v1055
        %v1490 = vpack.c.b16 %v1058, %v1056
        %v1491 = vpack.c.b16 %v1061, %v1059
        %v1492 = vpack.c.b16 %v1062, %v1060
        %v1493 = vpack.c.b16 %v1065, %v1063
        %v1494 = vpack.c.b16 %v1066, %v1064
        %v1495 = vpack.c.b16 %v1069, %v1067
        %v1496 = vpack.c.b16 %v1070, %v1068
        %v1497 = vpack.c.b16 %v1073, %v1071
        %v1498 = vpack.c.b16 %v1074, %v1072
        %v1499 = vpack.c.b16 %v1077, %v1075
        %v1500 = vpack.c.b16 %v1078, %v1076
        %v1501 = vpack.c.b16 %v1081, %v1079
        %v1502 = vpack.c.b16 %v1082, %v1080
        %v1503 = vpack.c.b16 %v1085, %v1083
        %v1504 = vpack.c.b16 %v1086, %v1084
        %v1505 = vpack.c.b16 %v1089, %v1087
        %v1506 = vpack.c.b16 %v1090, %v1088
        %v1507 = vpack.c.b16 %v1093, %v1091
        %v1508 = vpack.c.b16 %v1094, %v1092
        %v1509 = vpack.c.b16 %v1097, %v1095
        %v1510 = vpack.c.b16 %v1098, %v1096
        %v1511 = vpack.c.b16 %v1101, %v1099
        %v1512 = vpack.c.b16 %v1102, %v1100
        %v1513 = vpack.c.b16 %v1105, %v1103
        %v1514 = vpack.c.b16 %v1106, %v1104
        %v1515 = vpack.c.b16 %v1109, %v1107
        %v1516 = vpack.c.b16 %v1110, %v1108
        %v1517 = vpack.c.b16 %v1113, %v1111
        %v1518 = vpack.c.b16 %v1114, %v1112
        %v1519 = vpack.c.b16 %v1117, %v1115
        %v1520 = vpack.c.b16 %v1118, %v1116
        %v1521 = vpack.c.b16 %v1121, %v1119
        %v1522 = vpack.c.b16 %v1122, %v1120
        %v1523 = vpack.c.b16 %v1125, %v1123
        %v1524 = vpack.c.b16 %v1126, %v1124
        %v1525 = vpack.c.b16 %v1129, %v1127
        %v1526 = vpack.c.b16 %v1130, %v1128
        %v1527 = vpack.c.b16 %v1133, %v1131
        %v1528 = vpack.c.b16 %v1134, %v1132
        %v1529 = vpack.c.b16 %v1137, %v1135
        %v1530 = vpack.c.b16 %v1138, %v1136
        %v1531 = vpack.c.b16 %v1141, %v1139
        %v1532 = vpack.c.b16 %v1142, %v1140
        %v1533 = vpack.c.b16 %v1145, %v1143
        %v1534 = vpack.c.b16 %v1146, %v1144
        %v1535 = vpack.c.b16 %v1149, %v1147
        %v1536 = vpack.c.b16 %v1150, %v1148
        %v1537 = vpack.c.b16 %v1153, %v1151
        %v1538 = vpack.c.b16 %v1154, %v1152
        %v1539 = vpack.c.b16 %v1157, %v1155
        %v1540 = vpack.c.b16 %v1158, %v1156
        %v1541 = vpack.c.b16 %v1161, %v1159
        %v1542 = vpack.c.b16 %v1162, %v1160
        %v1543 = vpack.c.b16 %v1165, %v1163
        %v1544 = vpack.c.b16 %v1166, %v1164
        %v1545 = vpack.c.b16 %v1169, %v1167
        %v1546 = vpack.c.b16 %v1170, %v1168
        %v1547 = vpack.c.b16 %v1173, %v1171
        %v1548 = vpack.c.b16 %v1174, %v1172
        %v1549 = vpack.c.b16 %v1177, %v1175
        %v1550 = vpack.c.b16 %v1178, %v1176
        %v1551 = vpack.c.b16 %v1181, %v1179
        %v1552 = vpack.c.b16 %v1182, %v1180
        %v1553 = vpack.c.b16 %v1185, %v1183
        %v1554 = vpack.c.b16 %v1186, %v1184
        %v1555 = vpack.c.b16 %v1189, %v1187
        %v1556 = vpack.c.b16 %v1190, %v1188
        %v1557 = vpack.c.b16 %v1193, %v1191
        %v1558 = vpack.c.b16 %v1194, %v1192
        %v1559 = vpack.c.b16 %v1197, %v1195
        %v1560 = vpack.c.b16 %v1198, %v1196
        %v1561 = vpack.c.b16 %v1201, %v1199
        %v1562 = vpack.c.b16 %v1202, %v1200
        %v1563 = vpack.c.b16 %v1205, %v1203
        %v1564 = vpack.c.b16 %v1206, %v1204
        %v1565 = vpack.c.b16 %v1209, %v1207
        %v1566 = vpack.c.b16 %v1210, %v1208
        %v1567 = vpack.c.b16 %v1213, %v1211
        %v1568 = vpack.c.b16 %v1214, %v1212
        %v1569 = vpack.c.b16 %v1217, %v1215
        %v1570 = vpack.c.b16 %v1218, %v1216
        %v1571 = vpack.c.b16 %v1221, %v1219
        %v1572 = vpack.c.b16 %v1222, %v1220
        %v1573 = vpack.c.b16 %v1225, %v1223
        %v1574 = vpack.c.b16 %v1226, %v1224
        %v1575 = vpack.c.b16 %v1229, %v1227
        %v1576 = vpack.c.b16 %v1230, %v1228
        %v1577 = vpack.c.b16 %v1233, %v1231
        %v1578 = vpack.c.b16 %v1234, %v1232
        %v1579 = vpack.c.b16 %v1237, %v1235
        %v1580 = vpack.c.b16 %v1238, %v1236
        %v1581 = vpack.c.b16 %v1241, %v1239
        %v1582 = vpack.c.b16 %v1242, %v1240
        %v1583 = vpack.c.b16 %v1245, %v1243
        %v1584 = vpack.c.b16 %v1246, %v1244
        %v1585 = vpack.c.b16 %v1249, %v1247
        %v1586 = vpack.c.b16 %v1250, %v1248
        %v1587 = vpack.c.b16 %v1253, %v1251
        %v1588 = vpack.c.b16 %v1254, %v1252
        %v1589 = vpack.c.b16 %v1257, %v1255
        %v1590 = vpack.c.b16 %v1258, %v1256
        %v1591 = vpack.c.b16 %v1261, %v1259
        %v1592 = vpack.c.b16 %v1262, %v1260
        %v1593 = vpack.c.b16 %v1265, %v1263
        %v1594 = vpack.c.b16 %v1266, %v1264
        %v1595 = vpack.c.b16 %v1269, %v1267
        %v1596 = vpack.c.b16 %v1270, %v1268
        %v1597 = vpack.c.b16 %v1273, %v1271
        %v1598 = vpack.c.b16 %v1274, %v1272
        %v1599 = vpack.c.b16 %v1277, %v1275
        %v1600 = vpack.c.b16 %v1278, %v1276
        %v1601 = vpack.c.b16 %v1281, %v1279
        %v1602 = vpack.c.b16 %v1282, %v1280
        %v1603 = vpack.c.b16 %v1285, %v1283
        %v1604 = vpack.c.b16 %v1286, %v1284
        %v1605 = vpack.c.b16 %v1289, %v1287
        %v1606 = vpack.c.b16 %v1290, %v1288
        %v1607 = vpack.c.b16 %v1293, %v1291
        %v1608 = vpack.c.b16 %v1294, %v1292
        %v1609 = vpack.c.b16 %v1297, %v1295
        %v1610 = vpack.c.b16 %v1298, %v1296
        %v1611 = vpack.c.b16 %v1301, %v1299
        %v1612 = vpack.c.b16 %v1302, %v1300
        %v1613 = vpack.c.b16 %v1305, %v1303
        %v1614 = vpack.c.b16 %v1306, %v1304
        %v1615 = vpack.c.b16 %v1309, %v1307
        %v1616 = vpack.c.b16 %v1310, %v1308
        %v1617 = vpack.c.b16 %v1313, %v1311
        %v1618 = vpack.c.b16 %v1314, %v1312
        %v1619 = vpack.c.b16 %v1317, %v1315
        %v1620 = vpack.c.b16 %v1318, %v1316
        %v1621 = vpack.c.b16 %v1321, %v1319
        %v1622 = vpack.c.b16 %v1322, %v1320
        %v1623 = vpack.c.b16 %v1325, %v1323
        %v1624 = vpack.c.b16 %v1326, %v1324
        %v1625 = vpack.c.b16 %v1329, %v1327
        %v1626 = vpack.c.b16 %v1330, %v1328
        %v1627 = vpack.c.b16 %v1333, %v1331
        %v1628 = vpack.c.b16 %v1334, %v1332
        %v1629 = vpack.c.b16 %v1337, %v1335
        %v1630 = vpack.c.b16 %v1338, %v1336
        %v1631 = vpack.c.b16 %v1341, %v1339
        %v1632 = vpack.c.b16 %v1342, %v1340
        %v1633 = vpack.c.b16 %v1345, %v1343
        %v1634 = vpack.c.b16 %v1346, %v1344
        %v1635 = vpack.c.b16 %v1349, %v1347
        %v1636 = vpack.c.b16 %v1350, %v1348
        %v1637 = vpack.c.b16 %v1353, %v1351
        %v1638 = vpack.c.b16 %v1354, %v1352
        %v1639 = vpack.c.b16 %v1357, %v1355
        %v1640 = vpack.c.b16 %v1358, %v1356
        %v1641 = vpack.c.b16 %v1361, %v1359
        %v1642 = vpack.c.b16 %v1362, %v1360
        %v1643 = vpack.c.b16 %v1365, %v1363
        %v1644 = vpack.c.b16 %v1366, %v1364
        %v1645 = vpack.c.b16 %v1369, %v1367
        %v1646 = vpack.c.b16 %v1370, %v1368
        %v1647 = vpack.c.b16 %v1373, %v1371
        %v1648 = vpack.c.b16 %v1374, %v1372
        %v1649 = vpack.c.b16 %v1377, %v1375
        %v1650 = vpack.c.b16 %v1378, %v1376
        %v1651 = vpack.c.b16 %v1381, %v1379
        %v1652 = vpack.c.b16 %v1382, %v1380
        %v1653 = vpack.c.b16 %v1385, %v1383
        %v1654 = vpack.c.b16 %v1386, %v1384
        %v1655 = vpack.c.b16 %v1389, %v1387
        %v1656 = vpack.c.b16 %v1390, %v1388
        %v1657 = vpack.c.b16 %v1393, %v1391
        %v1658 = vpack.c.b16 %v1394, %v1392
        %v1659 = vpack.c.b16 %v1397, %v1395
        %v1660 = vpack.c.b16 %v1398, %v1396
        %v1661 = vpack.c.b16 %v1401, %v1399
        %v1662 = vpack.c.b16 %v1402, %v1400
        %v1663 = vpack.c.b16 %v1405, %v1403
        %v1664 = vpack.c.b16 %v1406, %v1404
        %v1665 = vpack.c.b16 %v1409, %v1407
        %v1666 = vpack.c.b16 %v1410, %v1408
        %1923 = vmatpush.bf16.msra.mxu0 %v1425
        %1924 = vmatpush.bf16.msra.mxu0 %v1423
        %1925 = vmatpush.bf16.msra.mxu0 %v1421
        %1926 = vmatpush.bf16.msra.mxu0 %v1419
        %1927 = vmatpush.bf16.msra.mxu0 %v1417
        %1928 = vmatpush.bf16.msra.mxu0 %v1415
        %1929 = vmatpush.bf16.msra.mxu0 %v1413
        %1930 = vmatpush.bf16.msra.mxu0 %v1411
        %1931 = vmatmul.bf16.gmra.mxu0 %v609
        %v1932 = vpop.f32.mrf.mxu0
        %v1933 = vadd.f32 0.0, %v1932
        %v1934 = vpop.f32.mrf.mxu0
        %1935 = vdwg.mxu0
        %1936 = vmatpush.bf16.msra.mxu0 %v1441
        %1937 = vmatpush.bf16.msra.mxu0 %v1439
        %1938 = vmatpush.bf16.msra.mxu0 %v1437
        %1939 = vmatpush.bf16.msra.mxu0 %v1435
        %1940 = vmatpush.bf16.msra.mxu0 %v1433
        %1941 = vmatpush.bf16.msra.mxu0 %v1431
        %1942 = vmatpush.bf16.msra.mxu0 %v1429
        %1943 = vmatpush.bf16.msra.mxu0 %v1427
        %1944 = vmatmul.bf16.gmra.mxu0 %v610
        %v1945 = vpop.f32.mrf.mxu0
        %v1946 = vadd.f32 %v1933, %v1945
        %v1947 = vpop.f32.mrf.mxu0
        %1948 = vdwg.mxu0
        %1949 = vmatpush.bf16.msra.mxu0 %v1457
        %1950 = vmatpush.bf16.msra.mxu0 %v1455
        %1951 = vmatpush.bf16.msra.mxu0 %v1453
        %1952 = vmatpush.bf16.msra.mxu0 %v1451
        %1953 = vmatpush.bf16.msra.mxu0 %v1449
        %1954 = vmatpush.bf16.msra.mxu0 %v1447
        %1955 = vmatpush.bf16.msra.mxu0 %v1445
        %1956 = vmatpush.bf16.msra.mxu0 %v1443
        %1957 = vmatmul.bf16.gmra.mxu0 %v611
        %v1958 = vpop.f32.mrf.mxu0
        %v1959 = vadd.f32 %v1946, %v1958
        %v1960 = vpop.f32.mrf.mxu0
        %1961 = vdwg.mxu0
        %1962 = vmatpush.bf16.msra.mxu0 %v1473
        %1963 = vmatpush.bf16.msra.mxu0 %v1471
        %1964 = vmatpush.bf16.msra.mxu0 %v1469
        %1965 = vmatpush.bf16.msra.mxu0 %v1467
        %1966 = vmatpush.bf16.msra.mxu0 %v1465
        %1967 = vmatpush.bf16.msra.mxu0 %v1463
        %1968 = vmatpush.bf16.msra.mxu0 %v1461
        %1969 = vmatpush.bf16.msra.mxu0 %v1459
        %1970 = vmatmul.bf16.gmra.mxu0 %v612
        %v1971 = vpop.f32.mrf.mxu0
        %v1972 = vadd.f32 %v1959, %v1971
        %v1973 = vpop.f32.mrf.mxu0
        %1974 = vdwg.mxu0
        %1975 = vmatpush.bf16.msra.mxu0 %v1489
        %1976 = vmatpush.bf16.msra.mxu0 %v1487
        %1977 = vmatpush.bf16.msra.mxu0 %v1485
        %1978 = vmatpush.bf16.msra.mxu0 %v1483
        %1979 = vmatpush.bf16.msra.mxu0 %v1481
        %1980 = vmatpush.bf16.msra.mxu0 %v1479
        %1981 = vmatpush.bf16.msra.mxu0 %v1477
        %1982 = vmatpush.bf16.msra.mxu0 %v1475
        %1983 = vmatmul.bf16.gmra.mxu0 %v613
        %v1984 = vpop.f32.mrf.mxu0
        %v1985 = vadd.f32 %v1972, %v1984
        %v1986 = vpop.f32.mrf.mxu0
        %1987 = vdwg.mxu0
        %1988 = vmatpush.bf16.msra.mxu0 %v1505
        %1989 = vmatpush.bf16.msra.mxu0 %v1503
        %1990 = vmatpush.bf16.msra.mxu0 %v1501
        %1991 = vmatpush.bf16.msra.mxu0 %v1499
        %1992 = vmatpush.bf16.msra.mxu0 %v1497
        %1993 = vmatpush.bf16.msra.mxu0 %v1495
        %1994 = vmatpush.bf16.msra.mxu0 %v1493
        %1995 = vmatpush.bf16.msra.mxu0 %v1491
        %1996 = vmatmul.bf16.gmra.mxu0 %v614
        %v1997 = vpop.f32.mrf.mxu0
        %v1998 = vadd.f32 %v1985, %v1997
        %v1999 = vpop.f32.mrf.mxu0
        %2000 = vdwg.mxu0
        %2001 = vmatpush.bf16.msra.mxu0 %v1521
        %2002 = vmatpush.bf16.msra.mxu0 %v1519
        %2003 = vmatpush.bf16.msra.mxu0 %v1517
        %2004 = vmatpush.bf16.msra.mxu0 %v1515
        %2005 = vmatpush.bf16.msra.mxu0 %v1513
        %2006 = vmatpush.bf16.msra.mxu0 %v1511
        %2007 = vmatpush.bf16.msra.mxu0 %v1509
        %2008 = vmatpush.bf16.msra.mxu0 %v1507
        %2009 = vmatmul.bf16.gmra.mxu0 %v615
        %v2010 = vpop.f32.mrf.mxu0
        %v2011 = vadd.f32 %v1998, %v2010
        %v2012 = vpop.f32.mrf.mxu0
        %2013 = vdwg.mxu0
        %2014 = vmatpush.bf16.msra.mxu0 %v1537
        %2015 = vmatpush.bf16.msra.mxu0 %v1535
        %2016 = vmatpush.bf16.msra.mxu0 %v1533
        %2017 = vmatpush.bf16.msra.mxu0 %v1531
        %2018 = vmatpush.bf16.msra.mxu0 %v1529
        %2019 = vmatpush.bf16.msra.mxu0 %v1527
        %2020 = vmatpush.bf16.msra.mxu0 %v1525
        %2021 = vmatpush.bf16.msra.mxu0 %v1523
        %2022 = vmatmul.bf16.gmra.mxu0 %v616
        %v2023 = vpop.f32.mrf.mxu0
        %v2024 = vadd.f32 %v2011, %v2023
        %v2025 = vpop.f32.mrf.mxu0
        %2026 = vdwg.mxu0
        %2027 = vmatpush.bf16.msra.mxu0 %v1553
        %2028 = vmatpush.bf16.msra.mxu0 %v1551
        %2029 = vmatpush.bf16.msra.mxu0 %v1549
        %2030 = vmatpush.bf16.msra.mxu0 %v1547
        %2031 = vmatpush.bf16.msra.mxu0 %v1545
        %2032 = vmatpush.bf16.msra.mxu0 %v1543
        %2033 = vmatpush.bf16.msra.mxu0 %v1541
        %2034 = vmatpush.bf16.msra.mxu0 %v1539
        %2035 = vmatmul.bf16.gmra.mxu0 %v619
        %v2036 = vpop.f32.mrf.mxu0
        %v2037 = vadd.f32 %v2024, %v2036
        %v2038 = vpop.f32.mrf.mxu0
        %2039 = vdwg.mxu0
        %2040 = vmatpush.bf16.msra.mxu0 %v1569
        %2041 = vmatpush.bf16.msra.mxu0 %v1567
        %2042 = vmatpush.bf16.msra.mxu0 %v1565
        %2043 = vmatpush.bf16.msra.mxu0 %v1563
        %2044 = vmatpush.bf16.msra.mxu0 %v1561
        %2045 = vmatpush.bf16.msra.mxu0 %v1559
        %2046 = vmatpush.bf16.msra.mxu0 %v1557
        %2047 = vmatpush.bf16.msra.mxu0 %v1555
        %2048 = vmatmul.bf16.gmra.mxu0 %v620
        %v2049 = vpop.f32.mrf.mxu0
        %v2050 = vadd.f32 %v2037, %v2049
        %v2051 = vpop.f32.mrf.mxu0
        %2052 = vdwg.mxu0
        %2053 = vmatpush.bf16.msra.mxu0 %v1585
        %2054 = vmatpush.bf16.msra.mxu0 %v1583
        %2055 = vmatpush.bf16.msra.mxu0 %v1581
        %2056 = vmatpush.bf16.msra.mxu0 %v1579
        %2057 = vmatpush.bf16.msra.mxu0 %v1577
        %2058 = vmatpush.bf16.msra.mxu0 %v1575
        %2059 = vmatpush.bf16.msra.mxu0 %v1573
        %2060 = vmatpush.bf16.msra.mxu0 %v1571
        %2061 = vmatmul.bf16.gmra.mxu0 %v621
        %v2062 = vpop.f32.mrf.mxu0
        %v2063 = vadd.f32 %v2050, %v2062
        %v2064 = vpop.f32.mrf.mxu0
        %2065 = vdwg.mxu0
        %2066 = vmatpush.bf16.msra.mxu0 %v1601
        %2067 = vmatpush.bf16.msra.mxu0 %v1599
        %2068 = vmatpush.bf16.msra.mxu0 %v1597
        %2069 = vmatpush.bf16.msra.mxu0 %v1595
        %2070 = vmatpush.bf16.msra.mxu0 %v1593
        %2071 = vmatpush.bf16.msra.mxu0 %v1591
        %2072 = vmatpush.bf16.msra.mxu0 %v1589
        %2073 = vmatpush.bf16.msra.mxu0 %v1587
        %2074 = vmatmul.bf16.gmra.mxu0 %v622
        %v2075 = vpop.f32.mrf.mxu0
        %v2076 = vadd.f32 %v2063, %v2075
        %v2077 = vpop.f32.mrf.mxu0
        %2078 = vdwg.mxu0
        %2079 = vmatpush.bf16.msra.mxu0 %v1617
        %2080 = vmatpush.bf16.msra.mxu0 %v1615
        %2081 = vmatpush.bf16.msra.mxu0 %v1613
        %2082 = vmatpush.bf16.msra.mxu0 %v1611
        %2083 = vmatpush.bf16.msra.mxu0 %v1609
        %2084 = vmatpush.bf16.msra.mxu0 %v1607
        %2085 = vmatpush.bf16.msra.mxu0 %v1605
        %2086 = vmatpush.bf16.msra.mxu0 %v1603
        %2087 = vmatmul.bf16.gmra.mxu0 %v623
        %v2088 = vpop.f32.mrf.mxu0
        %v2089 = vadd.f32 %v2076, %v2088
        %v2090 = vpop.f32.mrf.mxu0
        %2091 = vdwg.mxu0
        %2092 = vmatpush.bf16.msra.mxu0 %v1633
        %2093 = vmatpush.bf16.msra.mxu0 %v1631
        %2094 = vmatpush.bf16.msra.mxu0 %v1629
        %2095 = vmatpush.bf16.msra.mxu0 %v1627
        %2096 = vmatpush.bf16.msra.mxu0 %v1625
        %2097 = vmatpush.bf16.msra.mxu0 %v1623
        %2098 = vmatpush.bf16.msra.mxu0 %v1621
        %2099 = vmatpush.bf16.msra.mxu0 %v1619
        %2100 = vmatmul.bf16.gmra.mxu0 %v624
        %v2101 = vpop.f32.mrf.mxu0
        %v2102 = vadd.f32 %v2089, %v2101
        %v2103 = vpop.f32.mrf.mxu0
        %2104 = vdwg.mxu0
        %2105 = vmatpush.bf16.msra.mxu0 %v1649
        %2106 = vmatpush.bf16.msra.mxu0 %v1647
        %2107 = vmatpush.bf16.msra.mxu0 %v1645
        %2108 = vmatpush.bf16.msra.mxu0 %v1643
        %2109 = vmatpush.bf16.msra.mxu0 %v1641
        %2110 = vmatpush.bf16.msra.mxu0 %v1639
        %2111 = vmatpush.bf16.msra.mxu0 %v1637
        %2112 = vmatpush.bf16.msra.mxu0 %v1635
        %2113 = vmatmul.bf16.gmra.mxu0 %v625
        %v2114 = vpop.f32.mrf.mxu0
        %v2115 = vadd.f32 %v2102, %v2114
        %v2116 = vpop.f32.mrf.mxu0
        %2117 = vdwg.mxu0
        %2118 = vmatpush.bf16.msra.mxu0 %v1665
        %2119 = vmatpush.bf16.msra.mxu0 %v1663
        %2120 = vmatpush.bf16.msra.mxu0 %v1661
        %2121 = vmatpush.bf16.msra.mxu0 %v1659
        %2122 = vmatpush.bf16.msra.mxu0 %v1657
        %2123 = vmatpush.bf16.msra.mxu0 %v1655
        %2124 = vmatpush.bf16.msra.mxu0 %v1653
        %2125 = vmatpush.bf16.msra.mxu0 %v1651
        %2126 = vmatmul.bf16.gmra.mxu0 %v626
        %v2127 = vpop.f32.mrf.mxu0
        %v2128 = vadd.f32 %v2115, %v2127
        %v2129 = vpop.f32.mrf.mxu0
        %2130 = vdwg.mxu0
        %2131 = vmatpush.bf16.msra.mxu0 %v1426
        %2132 = vmatpush.bf16.msra.mxu0 %v1424
        %2133 = vmatpush.bf16.msra.mxu0 %v1422
        %2134 = vmatpush.bf16.msra.mxu0 %v1420
        %2135 = vmatpush.bf16.msra.mxu0 %v1418
        %2136 = vmatpush.bf16.msra.mxu0 %v1416
        %2137 = vmatpush.bf16.msra.mxu0 %v1414
        %2138 = vmatpush.bf16.msra.mxu0 %v1412
        %2139 = vmatmul.bf16.gmra.mxu0 %v609
        %v2140 = vpop.f32.mrf.mxu0
        %v2141 = vadd.f32 0.0, %v2140
        %v2142 = vpop.f32.mrf.mxu0
        %2143 = vdwg.mxu0
        %2144 = vmatpush.bf16.msra.mxu0 %v1442
        %2145 = vmatpush.bf16.msra.mxu0 %v1440
        %2146 = vmatpush.bf16.msra.mxu0 %v1438
        %2147 = vmatpush.bf16.msra.mxu0 %v1436
        %2148 = vmatpush.bf16.msra.mxu0 %v1434
        %2149 = vmatpush.bf16.msra.mxu0 %v1432
        %2150 = vmatpush.bf16.msra.mxu0 %v1430
        %2151 = vmatpush.bf16.msra.mxu0 %v1428
        %2152 = vmatmul.bf16.gmra.mxu0 %v610
        %v2153 = vpop.f32.mrf.mxu0
        %v2154 = vadd.f32 %v2141, %v2153
        %v2155 = vpop.f32.mrf.mxu0
        %2156 = vdwg.mxu0
        %2157 = vmatpush.bf16.msra.mxu0 %v1458
        %2158 = vmatpush.bf16.msra.mxu0 %v1456
        %2159 = vmatpush.bf16.msra.mxu0 %v1454
        %2160 = vmatpush.bf16.msra.mxu0 %v1452
        %2161 = vmatpush.bf16.msra.mxu0 %v1450
        %2162 = vmatpush.bf16.msra.mxu0 %v1448
        %2163 = vmatpush.bf16.msra.mxu0 %v1446
        %2164 = vmatpush.bf16.msra.mxu0 %v1444
        %2165 = vmatmul.bf16.gmra.mxu0 %v611
        %v2166 = vpop.f32.mrf.mxu0
        %v2167 = vadd.f32 %v2154, %v2166
        %v2168 = vpop.f32.mrf.mxu0
        %2169 = vdwg.mxu0
        %2170 = vmatpush.bf16.msra.mxu0 %v1474
        %2171 = vmatpush.bf16.msra.mxu0 %v1472
        %2172 = vmatpush.bf16.msra.mxu0 %v1470
        %2173 = vmatpush.bf16.msra.mxu0 %v1468
        %2174 = vmatpush.bf16.msra.mxu0 %v1466
        %2175 = vmatpush.bf16.msra.mxu0 %v1464
        %2176 = vmatpush.bf16.msra.mxu0 %v1462
        %2177 = vmatpush.bf16.msra.mxu0 %v1460
        %2178 = vmatmul.bf16.gmra.mxu0 %v612
        %v2179 = vpop.f32.mrf.mxu0
        %v2180 = vadd.f32 %v2167, %v2179
        %v2181 = vpop.f32.mrf.mxu0
        %2182 = vdwg.mxu0
        %2183 = vmatpush.bf16.msra.mxu0 %v1490
        %2184 = vmatpush.bf16.msra.mxu0 %v1488
        %2185 = vmatpush.bf16.msra.mxu0 %v1486
        %2186 = vmatpush.bf16.msra.mxu0 %v1484
        %2187 = vmatpush.bf16.msra.mxu0 %v1482
        %2188 = vmatpush.bf16.msra.mxu0 %v1480
        %2189 = vmatpush.bf16.msra.mxu0 %v1478
        %2190 = vmatpush.bf16.msra.mxu0 %v1476
        %2191 = vmatmul.bf16.gmra.mxu0 %v613
        %v2192 = vpop.f32.mrf.mxu0
        %v2193 = vadd.f32 %v2180, %v2192
        %v2194 = vpop.f32.mrf.mxu0
        %2195 = vdwg.mxu0
        %2196 = vmatpush.bf16.msra.mxu0 %v1506
        %2197 = vmatpush.bf16.msra.mxu0 %v1504
        %2198 = vmatpush.bf16.msra.mxu0 %v1502
        %2199 = vmatpush.bf16.msra.mxu0 %v1500
        %2200 = vmatpush.bf16.msra.mxu0 %v1498
        %2201 = vmatpush.bf16.msra.mxu0 %v1496
        %2202 = vmatpush.bf16.msra.mxu0 %v1494
        %2203 = vmatpush.bf16.msra.mxu0 %v1492
        %2204 = vmatmul.bf16.gmra.mxu0 %v614
        %v2205 = vpop.f32.mrf.mxu0
        %v2206 = vadd.f32 %v2193, %v2205
        %v2207 = vpop.f32.mrf.mxu0
        %2208 = vdwg.mxu0
        %2209 = vmatpush.bf16.msra.mxu0 %v1522
        %2210 = vmatpush.bf16.msra.mxu0 %v1520
        %2211 = vmatpush.bf16.msra.mxu0 %v1518
        %2212 = vmatpush.bf16.msra.mxu0 %v1516
        %2213 = vmatpush.bf16.msra.mxu0 %v1514
        %2214 = vmatpush.bf16.msra.mxu0 %v1512
        %2215 = vmatpush.bf16.msra.mxu0 %v1510
        %2216 = vmatpush.bf16.msra.mxu0 %v1508
        %2217 = vmatmul.bf16.gmra.mxu0 %v615
        %v2218 = vpop.f32.mrf.mxu0
        %v2219 = vadd.f32 %v2206, %v2218
        %v2220 = vpop.f32.mrf.mxu0
        %2221 = vdwg.mxu0
        %2222 = vmatpush.bf16.msra.mxu0 %v1538
        %2223 = vmatpush.bf16.msra.mxu0 %v1536
        %2224 = vmatpush.bf16.msra.mxu0 %v1534
        %2225 = vmatpush.bf16.msra.mxu0 %v1532
        %2226 = vmatpush.bf16.msra.mxu0 %v1530
        %2227 = vmatpush.bf16.msra.mxu0 %v1528
        %2228 = vmatpush.bf16.msra.mxu0 %v1526
        %2229 = vmatpush.bf16.msra.mxu0 %v1524
        %2230 = vmatmul.bf16.gmra.mxu0 %v616
        %v2231 = vpop.f32.mrf.mxu0
        %v2232 = vadd.f32 %v2219, %v2231
        %v2233 = vpop.f32.mrf.mxu0
        %2234 = vdwg.mxu0
        %2235 = vmatpush.bf16.msra.mxu0 %v1554
        %2236 = vmatpush.bf16.msra.mxu0 %v1552
        %2237 = vmatpush.bf16.msra.mxu0 %v1550
        %2238 = vmatpush.bf16.msra.mxu0 %v1548
        %2239 = vmatpush.bf16.msra.mxu0 %v1546
        %2240 = vmatpush.bf16.msra.mxu0 %v1544
        %2241 = vmatpush.bf16.msra.mxu0 %v1542
        %2242 = vmatpush.bf16.msra.mxu0 %v1540
        %2243 = vmatmul.bf16.gmra.mxu0 %v619
        %v2244 = vpop.f32.mrf.mxu0
        %v2245 = vadd.f32 %v2232, %v2244
        %v2246 = vpop.f32.mrf.mxu0
        %2247 = vdwg.mxu0
        %2248 = vmatpush.bf16.msra.mxu0 %v1570
        %2249 = vmatpush.bf16.msra.mxu0 %v1568
        %2250 = vmatpush.bf16.msra.mxu0 %v1566
        %2251 = vmatpush.bf16.msra.mxu0 %v1564
        %2252 = vmatpush.bf16.msra.mxu0 %v1562
        %2253 = vmatpush.bf16.msra.mxu0 %v1560
        %2254 = vmatpush.bf16.msra.mxu0 %v1558
        %2255 = vmatpush.bf16.msra.mxu0 %v1556
        %2256 = vmatmul.bf16.gmra.mxu0 %v620
        %v2257 = vpop.f32.mrf.mxu0
        %v2258 = vadd.f32 %v2245, %v2257
        %v2259 = vpop.f32.mrf.mxu0
        %2260 = vdwg.mxu0
        %2261 = vmatpush.bf16.msra.mxu0 %v1586
        %2262 = vmatpush.bf16.msra.mxu0 %v1584
        %2263 = vmatpush.bf16.msra.mxu0 %v1582
        %2264 = vmatpush.bf16.msra.mxu0 %v1580
        %2265 = vmatpush.bf16.msra.mxu0 %v1578
        %2266 = vmatpush.bf16.msra.mxu0 %v1576
        %2267 = vmatpush.bf16.msra.mxu0 %v1574
        %2268 = vmatpush.bf16.msra.mxu0 %v1572
        %2269 = vmatmul.bf16.gmra.mxu0 %v621
        %v2270 = vpop.f32.mrf.mxu0
        %v2271 = vadd.f32 %v2258, %v2270
        %v2272 = vpop.f32.mrf.mxu0
        %2273 = vdwg.mxu0
        %2274 = vmatpush.bf16.msra.mxu0 %v1602
        %2275 = vmatpush.bf16.msra.mxu0 %v1600
        %2276 = vmatpush.bf16.msra.mxu0 %v1598
        %2277 = vmatpush.bf16.msra.mxu0 %v1596
        %2278 = vmatpush.bf16.msra.mxu0 %v1594
        %2279 = vmatpush.bf16.msra.mxu0 %v1592
        %2280 = vmatpush.bf16.msra.mxu0 %v1590
        %2281 = vmatpush.bf16.msra.mxu0 %v1588
        %2282 = vmatmul.bf16.gmra.mxu0 %v622
        %v2283 = vpop.f32.mrf.mxu0
        %v2284 = vadd.f32 %v2271, %v2283
        %v2285 = vpop.f32.mrf.mxu0
        %2286 = vdwg.mxu0
        %2287 = vmatpush.bf16.msra.mxu0 %v1618
        %2288 = vmatpush.bf16.msra.mxu0 %v1616
        %2289 = vmatpush.bf16.msra.mxu0 %v1614
        %2290 = vmatpush.bf16.msra.mxu0 %v1612
        %2291 = vmatpush.bf16.msra.mxu0 %v1610
        %2292 = vmatpush.bf16.msra.mxu0 %v1608
        %2293 = vmatpush.bf16.msra.mxu0 %v1606
        %2294 = vmatpush.bf16.msra.mxu0 %v1604
        %2295 = vmatmul.bf16.gmra.mxu0 %v623
        %v2296 = vpop.f32.mrf.mxu0
        %v2297 = vadd.f32 %v2284, %v2296
        %v2298 = vpop.f32.mrf.mxu0
        %2299 = vdwg.mxu0
        %2300 = vmatpush.bf16.msra.mxu0 %v1634
        %2301 = vmatpush.bf16.msra.mxu0 %v1632
        %2302 = vmatpush.bf16.msra.mxu0 %v1630
        %2303 = vmatpush.bf16.msra.mxu0 %v1628
        %2304 = vmatpush.bf16.msra.mxu0 %v1626
        %2305 = vmatpush.bf16.msra.mxu0 %v1624
        %2306 = vmatpush.bf16.msra.mxu0 %v1622
        %2307 = vmatpush.bf16.msra.mxu0 %v1620
        %2308 = vmatmul.bf16.gmra.mxu0 %v624
        %v2309 = vpop.f32.mrf.mxu0
        %v2310 = vadd.f32 %v2297, %v2309
        %v2311 = vpop.f32.mrf.mxu0
        %2312 = vdwg.mxu0
        %2313 = vmatpush.bf16.msra.mxu0 %v1650
        %2314 = vmatpush.bf16.msra.mxu0 %v1648
        %2315 = vmatpush.bf16.msra.mxu0 %v1646
        %2316 = vmatpush.bf16.msra.mxu0 %v1644
        %2317 = vmatpush.bf16.msra.mxu0 %v1642
        %2318 = vmatpush.bf16.msra.mxu0 %v1640
        %2319 = vmatpush.bf16.msra.mxu0 %v1638
        %2320 = vmatpush.bf16.msra.mxu0 %v1636
        %2321 = vmatmul.bf16.gmra.mxu0 %v625
        %v2322 = vpop.f32.mrf.mxu0
        %v2323 = vadd.f32 %v2310, %v2322
        %v2324 = vpop.f32.mrf.mxu0
        %2325 = vdwg.mxu0
        %2326 = vmatpush.bf16.msra.mxu0 %v1666
        %2327 = vmatpush.bf16.msra.mxu0 %v1664
        %2328 = vmatpush.bf16.msra.mxu0 %v1662
        %2329 = vmatpush.bf16.msra.mxu0 %v1660
        %2330 = vmatpush.bf16.msra.mxu0 %v1658
        %2331 = vmatpush.bf16.msra.mxu0 %v1656
        %2332 = vmatpush.bf16.msra.mxu0 %v1654
        %2333 = vmatpush.bf16.msra.mxu0 %v1652
        %2334 = vmatmul.bf16.gmra.mxu0 %v626
        %v2335 = vpop.f32.mrf.mxu0
        %v2336 = vadd.f32 %v2323, %v2335
        %v2337 = vpop.f32.mrf.mxu0
        %2338 = vdwg.mxu0
        %v2341 = vrot.slane %v2336, 6
        %vm2342 = vcmask 1041408
        %v2343 = vsel %vm2342, %v2128, %v2341
        %v2345 = vadd.f32 %v348, %v2343
        %2346 = vst [vmem:[#allocation2] sm:$0xf] %v2345
        %p2347 = scmp.eq.s32.totalorder %s21, 3
        // Predicated region
        $region61: #{_forward_impl.5} parent=55 // pred_check
          %p2348 = pneg %p2347
        $region62: #{_forward_impl.5} parent=55 // pred_check_branch
          %2350 = sbr.rel (%p2348) target = $region64
        $region63: #{_forward_impl.5} parent=55 // pred_region
          %v2351 = vld [vmem:[#allocation2] sm:$0xf]
          %v2352 = vld [vmem:[%s2] sm:$0x3]
          %v2354 = vperm.slane %v2352, 0
          %v2355 = vperm.slane %v2352, 1
          %v2356 = vrot.slane %v2355, 6
          %v2357 = vsel %vm2342, %v2354, %v2356
          %v2359 = vadd.f32 %v2351, %v2357
          %v2360 = vmax.f32 %v2359, 0.0
          %v2361 = vld [vmem:[%s3] sm:$0x3]
          %v2363 = vperm.slane %v2361, 0
          %v2364 = vperm.slane %v2361, 1
          %v2365 = vrot.slane %v2364, 6
          %v2366 = vsel %vm2342, %v2363, %v2365
          %v2368 = vmul.f32 %v2360, %v2366
          %2370 = vst [vmem:[#allocation1] ss:$4 sm:$0xff] %v2368
          %v2371 = vld.sshfl [vmem:[#allocation1] sm:$0xff pattern:$0x73625140]
          %v2372 = vld.sshfl [vmem:[#allocation1 + $0x8] sm:$0xff pattern:$0x73625140]
          %v2375 = vpack.c.bf16 %v2371, %v2371
          %v2376 = vpack.c.bf16 %v2372, %v2372
          %v2377 = vld [vmem:[%s4] sm:$0xff]
          %v2378 = vld [vmem:[%s4 + $0x8] sm:$0xff]
          %v2379 = vld [vmem:[%s4 + $0x10] sm:$0xff]
          %v2380 = vld [vmem:[%s4 + $0x18] sm:$0xff]
          %v2381 = vld [vmem:[%s4 + $0x20] sm:$0xff]
          %v2382 = vld [vmem:[%s4 + $0x28] sm:$0xff]
          %v2383 = vld [vmem:[%s4 + $0x30] sm:$0xff]
          %v2384 = vld [vmem:[%s4 + $0x38] sm:$0xff]
          %v2385 = vld [vmem:[%s4 + $0x40] sm:$0xff]
          %v2386 = vld [vmem:[%s4 + $0x48] sm:$0xff]
          %v2387 = vld [vmem:[%s4 + $0x50] sm:$0xff]
          %v2388 = vld [vmem:[%s4 + $0x58] sm:$0xff]
          %v2389 = vld [vmem:[%s4 + $0x60] sm:$0xff]
          %v2390 = vld [vmem:[%s4 + $0x68] sm:$0xff]
          %v2391 = vld [vmem:[%s4 + $0x70] sm:$0xff]
          %v2392 = vld [vmem:[%s4 + $0x78] sm:$0xff]
          %v2393 = vld [vmem:[%s4 + $0x80] sm:$0xff]
          %v2394 = vld [vmem:[%s4 + $0x88] sm:$0xff]
          %v2395 = vld [vmem:[%s4 + $0x90] sm:$0xff]
          %v2396 = vld [vmem:[%s4 + $0x98] sm:$0xff]
          %v2397 = vld [vmem:[%s4 + $0xa0] sm:$0xff]
          %v2398 = vld [vmem:[%s4 + $0xa8] sm:$0xff]
          %v2399 = vld [vmem:[%s4 + $0xb0] sm:$0xff]
          %v2400 = vld [vmem:[%s4 + $0xb8] sm:$0xff]
          %v2401 = vld [vmem:[%s4 + $0xc0] sm:$0xff]
          %v2402 = vld [vmem:[%s4 + $0xc8] sm:$0xff]
          %v2403 = vld [vmem:[%s4 + $0xd0] sm:$0xff]
          %v2404 = vld [vmem:[%s4 + $0xd8] sm:$0xff]
          %v2405 = vld [vmem:[%s4 + $0xe0] sm:$0xff]
          %v2406 = vld [vmem:[%s4 + $0xe8] sm:$0xff]
          %v2407 = vld [vmem:[%s4 + $0xf0] sm:$0xff]
          %v2408 = vld [vmem:[%s4 + $0xf8] sm:$0xff]
          %v2409 = vld [vmem:[%s5] sm:$0x3]
          %v2411 = vperm.slane %v2409, 0
          %v2412 = vperm.slane %v2409, 1
          %v2447 = vunpack.c.l.b16 %v2377
          %v2448 = vunpack.c.h.b16 %v2377
          %v2449 = vunpack.c.l.b16 %v2378
          %v2450 = vunpack.c.h.b16 %v2378
          %v2451 = vunpack.c.l.b16 %v2379
          %v2452 = vunpack.c.h.b16 %v2379
          %v2453 = vunpack.c.l.b16 %v2380
          %v2454 = vunpack.c.h.b16 %v2380
          %v2455 = vunpack.c.l.b16 %v2381
          %v2456 = vunpack.c.h.b16 %v2381
          %v2457 = vunpack.c.l.b16 %v2382
          %v2458 = vunpack.c.h.b16 %v2382
          %v2459 = vunpack.c.l.b16 %v2383
          %v2460 = vunpack.c.h.b16 %v2383
          %v2461 = vunpack.c.l.b16 %v2384
          %v2462 = vunpack.c.h.b16 %v2384
          %v2463 = vunpack.c.l.b16 %v2385
          %v2464 = vunpack.c.h.b16 %v2385
          %v2465 = vunpack.c.l.b16 %v2386
          %v2466 = vunpack.c.h.b16 %v2386
          %v2467 = vunpack.c.l.b16 %v2387
          %v2468 = vunpack.c.h.b16 %v2387
          %v2469 = vunpack.c.l.b16 %v2388
          %v2470 = vunpack.c.h.b16 %v2388
          %v2471 = vunpack.c.l.b16 %v2389
          %v2472 = vunpack.c.h.b16 %v2389
          %v2473 = vunpack.c.l.b16 %v2390
          %v2474 = vunpack.c.h.b16 %v2390
          %v2475 = vunpack.c.l.b16 %v2391
          %v2476 = vunpack.c.h.b16 %v2391
          %v2477 = vunpack.c.l.b16 %v2392
          %v2478 = vunpack.c.h.b16 %v2392
          %v2479 = vunpack.c.l.b16 %v2393
          %v2480 = vunpack.c.h.b16 %v2393
          %v2481 = vunpack.c.l.b16 %v2394
          %v2482 = vunpack.c.h.b16 %v2394
          %v2483 = vunpack.c.l.b16 %v2395
          %v2484 = vunpack.c.h.b16 %v2395
          %v2485 = vunpack.c.l.b16 %v2396
          %v2486 = vunpack.c.h.b16 %v2396
          %v2487 = vunpack.c.l.b16 %v2397
          %v2488 = vunpack.c.h.b16 %v2397
          %v2489 = vunpack.c.l.b16 %v2398
          %v2490 = vunpack.c.h.b16 %v2398
          %v2491 = vunpack.c.l.b16 %v2399
          %v2492 = vunpack.c.h.b16 %v2399
          %v2493 = vunpack.c.l.b16 %v2400
          %v2494 = vunpack.c.h.b16 %v2400
          %v2495 = vunpack.c.l.b16 %v2401
          %v2496 = vunpack.c.h.b16 %v2401
          %v2497 = vunpack.c.l.b16 %v2402
          %v2498 = vunpack.c.h.b16 %v2402
          %v2499 = vunpack.c.l.b16 %v2403
          %v2500 = vunpack.c.h.b16 %v2403
          %v2501 = vunpack.c.l.b16 %v2404
          %v2502 = vunpack.c.h.b16 %v2404
          %v2503 = vunpack.c.l.b16 %v2405
          %v2504 = vunpack.c.h.b16 %v2405
          %v2505 = vunpack.c.l.b16 %v2406
          %v2506 = vunpack.c.h.b16 %v2406
          %v2507 = vunpack.c.l.b16 %v2407
          %v2508 = vunpack.c.h.b16 %v2407
          %v2509 = vunpack.c.l.b16 %v2408
          %v2510 = vunpack.c.h.b16 %v2408
          %v2511 = vpack.c.b16 %v2449, %v2447
          %v2512 = vpack.c.b16 %v2450, %v2448
          %v2513 = vpack.c.b16 %v2453, %v2451
          %v2514 = vpack.c.b16 %v2454, %v2452
          %v2515 = vpack.c.b16 %v2457, %v2455
          %v2516 = vpack.c.b16 %v2458, %v2456
          %v2517 = vpack.c.b16 %v2461, %v2459
          %v2518 = vpack.c.b16 %v2462, %v2460
          %v2519 = vpack.c.b16 %v2465, %v2463
          %v2520 = vpack.c.b16 %v2466, %v2464
          %v2521 = vpack.c.b16 %v2469, %v2467
          %v2522 = vpack.c.b16 %v2470, %v2468
          %v2523 = vpack.c.b16 %v2473, %v2471
          %v2524 = vpack.c.b16 %v2474, %v2472
          %v2525 = vpack.c.b16 %v2477, %v2475
          %v2526 = vpack.c.b16 %v2478, %v2476
          %v2527 = vpack.c.b16 %v2481, %v2479
          %v2528 = vpack.c.b16 %v2482, %v2480
          %v2529 = vpack.c.b16 %v2485, %v2483
          %v2530 = vpack.c.b16 %v2486, %v2484
          %v2531 = vpack.c.b16 %v2489, %v2487
          %v2532 = vpack.c.b16 %v2490, %v2488
          %v2533 = vpack.c.b16 %v2493, %v2491
          %v2534 = vpack.c.b16 %v2494, %v2492
          %v2535 = vpack.c.b16 %v2497, %v2495
          %v2536 = vpack.c.b16 %v2498, %v2496
          %v2537 = vpack.c.b16 %v2501, %v2499
          %v2538 = vpack.c.b16 %v2502, %v2500
          %v2539 = vpack.c.b16 %v2505, %v2503
          %v2540 = vpack.c.b16 %v2506, %v2504
          %v2541 = vpack.c.b16 %v2509, %v2507
          %v2542 = vpack.c.b16 %v2510, %v2508
          %2575 = vmatpush.bf16.msra.mxu0 %v2525
          %2576 = vmatpush.bf16.msra.mxu0 %v2523
          %2577 = vmatpush.bf16.msra.mxu0 %v2521
          %2578 = vmatpush.bf16.msra.mxu0 %v2519
          %2579 = vmatpush.bf16.msra.mxu0 %v2517
          %2580 = vmatpush.bf16.msra.mxu0 %v2515
          %2581 = vmatpush.bf16.msra.mxu0 %v2513
          %2582 = vmatpush.bf16.msra.mxu0 %v2511
          %2583 = vmatmul.bf16.gmra.mxu0 %v2375
          %v2584 = vpop.f32.mrf.mxu0
          %v2585 = vadd.f32 %v2411, %v2584
          %v2586 = vpop.f32.mrf.mxu0
          %2587 = vdwg.mxu0
          %2588 = vmatpush.bf16.msra.mxu0 %v2541
          %2589 = vmatpush.bf16.msra.mxu0 %v2539
          %2590 = vmatpush.bf16.msra.mxu0 %v2537
          %2591 = vmatpush.bf16.msra.mxu0 %v2535
          %2592 = vmatpush.bf16.msra.mxu0 %v2533
          %2593 = vmatpush.bf16.msra.mxu0 %v2531
          %2594 = vmatpush.bf16.msra.mxu0 %v2529
          %2595 = vmatpush.bf16.msra.mxu0 %v2527
          %2596 = vmatmul.bf16.gmra.mxu0 %v2376
          %v2597 = vpop.f32.mrf.mxu0
          %v2598 = vadd.f32 %v2585, %v2597
          %v2599 = vpop.f32.mrf.mxu0
          %2600 = vdwg.mxu0
          %2601 = vmatpush.bf16.msra.mxu0 %v2526
          %2602 = vmatpush.bf16.msra.mxu0 %v2524
          %2603 = vmatpush.bf16.msra.mxu0 %v2522
          %2604 = vmatpush.bf16.msra.mxu0 %v2520
          %2605 = vmatpush.bf16.msra.mxu0 %v2518
          %2606 = vmatpush.bf16.msra.mxu0 %v2516
          %2607 = vmatpush.bf16.msra.mxu0 %v2514
          %2608 = vmatpush.bf16.msra.mxu0 %v2512
          %2609 = vmatmul.bf16.gmra.mxu0 %v2375
          %v2610 = vpop.f32.mrf.mxu0
          %v2611 = vadd.f32 %v2412, %v2610
          %v2612 = vpop.f32.mrf.mxu0
          %2613 = vdwg.mxu0
          %2614 = vmatpush.bf16.msra.mxu0 %v2542
          %2615 = vmatpush.bf16.msra.mxu0 %v2540
          %2616 = vmatpush.bf16.msra.mxu0 %v2538
          %2617 = vmatpush.bf16.msra.mxu0 %v2536
          %2618 = vmatpush.bf16.msra.mxu0 %v2534
          %2619 = vmatpush.bf16.msra.mxu0 %v2532
          %2620 = vmatpush.bf16.msra.mxu0 %v2530
          %2621 = vmatpush.bf16.msra.mxu0 %v2528
          %2622 = vmatmul.bf16.gmra.mxu0 %v2376
          %v2623 = vpop.f32.mrf.mxu0
          %v2624 = vadd.f32 %v2611, %v2623
          %v2625 = vpop.f32.mrf.mxu0
          %2626 = vdwg.mxu0
          %v2627 = vmax.f32 %v2598, 0.0
          %v2628 = vmax.f32 %v2624, 0.0
          %v2629 = vld [vmem:[%s6] sm:$0x3]
          %v2631 = vperm.slane %v2629, 0
          %v2632 = vperm.slane %v2629, 1
          %v2635 = vmul.f32 %v2627, %v2631
          %v2636 = vmul.f32 %v2628, %v2632
          %v2637 = vpack.c.bf16 %v2635, %v2635
          %v2638 = vpack.c.bf16 %v2636, %v2636
          %v2639 = vld [vmem:[%s7] sm:$0xf]
          %v2640 = vld [vmem:[%s7 + $0x4] sm:$0xf]
          %v2641 = vld [vmem:[%s7 + $0x8] sm:$0xf]
          %v2642 = vld [vmem:[%s7 + $0xc] sm:$0xf]
          %v2643 = vld [vmem:[%s7 + $0x10] sm:$0xf]
          %v2644 = vld [vmem:[%s7 + $0x14] sm:$0xf]
          %v2645 = vld [vmem:[%s7 + $0x18] sm:$0xf]
          %v2646 = vld [vmem:[%s7 + $0x1c] sm:$0xf]
          %v2647 = vld [vmem:[%s7 + $0x20] sm:$0xf]
          %v2648 = vld [vmem:[%s7 + $0x24] sm:$0xf]
          %v2649 = vld [vmem:[%s7 + $0x28] sm:$0xf]
          %v2650 = vld [vmem:[%s7 + $0x2c] sm:$0xf]
          %v2651 = vld [vmem:[%s7 + $0x30] sm:$0xf]
          %v2652 = vld [vmem:[%s7 + $0x34] sm:$0xf]
          %v2653 = vld [vmem:[%s7 + $0x38] sm:$0xf]
          %v2654 = vld [vmem:[%s7 + $0x3c] sm:$0xf]
          %v2655 = vld [vmem:[%s7 + $0x40] sm:$0xf]
          %v2656 = vld [vmem:[%s7 + $0x44] sm:$0xf]
          %v2657 = vld [vmem:[%s7 + $0x48] sm:$0xf]
          %v2658 = vld [vmem:[%s7 + $0x4c] sm:$0xf]
          %v2659 = vld [vmem:[%s7 + $0x50] sm:$0xf]
          %v2660 = vld [vmem:[%s7 + $0x54] sm:$0xf]
          %v2661 = vld [vmem:[%s7 + $0x58] sm:$0xf]
          %v2662 = vld [vmem:[%s7 + $0x5c] sm:$0xf]
          %v2663 = vld [vmem:[%s7 + $0x60] sm:$0xf]
          %v2664 = vld [vmem:[%s7 + $0x64] sm:$0xf]
          %v2665 = vld [vmem:[%s7 + $0x68] sm:$0xf]
          %v2666 = vld [vmem:[%s7 + $0x6c] sm:$0xf]
          %v2667 = vld [vmem:[%s7 + $0x70] sm:$0xf]
          %v2668 = vld [vmem:[%s7 + $0x74] sm:$0xf]
          %v2669 = vld [vmem:[%s7 + $0x78] sm:$0xf]
          %v2670 = vld [vmem:[%s7 + $0x7c] sm:$0xf]
          %v2671 = vld [vmem:[%s8] sm:$0x1]
          %v2673 = vperm.slane %v2671, 0
          %v2707 = vunpack.c.l.b16 %v2639
          %v2708 = vunpack.c.l.b16 %v2640
          %v2709 = vunpack.c.l.b16 %v2641
          %v2710 = vunpack.c.l.b16 %v2642
          %v2711 = vunpack.c.l.b16 %v2643
          %v2712 = vunpack.c.l.b16 %v2644
          %v2713 = vunpack.c.l.b16 %v2645
          %v2714 = vunpack.c.l.b16 %v2646
          %v2715 = vunpack.c.l.b16 %v2647
          %v2716 = vunpack.c.l.b16 %v2648
          %v2717 = vunpack.c.l.b16 %v2649
          %v2718 = vunpack.c.l.b16 %v2650
          %v2719 = vunpack.c.l.b16 %v2651
          %v2720 = vunpack.c.l.b16 %v2652
          %v2721 = vunpack.c.l.b16 %v2653
          %v2722 = vunpack.c.l.b16 %v2654
          %v2723 = vunpack.c.l.b16 %v2655
          %v2724 = vunpack.c.l.b16 %v2656
          %v2725 = vunpack.c.l.b16 %v2657
          %v2726 = vunpack.c.l.b16 %v2658
          %v2727 = vunpack.c.l.b16 %v2659
          %v2728 = vunpack.c.l.b16 %v2660
          %v2729 = vunpack.c.l.b16 %v2661
          %v2730 = vunpack.c.l.b16 %v2662
          %v2731 = vunpack.c.l.b16 %v2663
          %v2732 = vunpack.c.l.b16 %v2664
          %v2733 = vunpack.c.l.b16 %v2665
          %v2734 = vunpack.c.l.b16 %v2666
          %v2735 = vunpack.c.l.b16 %v2667
          %v2736 = vunpack.c.l.b16 %v2668
          %v2737 = vunpack.c.l.b16 %v2669
          %v2738 = vunpack.c.l.b16 %v2670
          %v2739 = vpack.c.b16 %v2708, %v2707
          %v2740 = vpack.c.b16 %v2710, %v2709
          %v2741 = vpack.c.b16 %v2712, %v2711
          %v2742 = vpack.c.b16 %v2714, %v2713
          %v2743 = vpack.c.b16 %v2716, %v2715
          %v2744 = vpack.c.b16 %v2718, %v2717
          %v2745 = vpack.c.b16 %v2720, %v2719
          %v2746 = vpack.c.b16 %v2722, %v2721
          %v2747 = vpack.c.b16 %v2724, %v2723
          %v2748 = vpack.c.b16 %v2726, %v2725
          %v2749 = vpack.c.b16 %v2728, %v2727
          %v2750 = vpack.c.b16 %v2730, %v2729
          %v2751 = vpack.c.b16 %v2732, %v2731
          %v2752 = vpack.c.b16 %v2734, %v2733
          %v2753 = vpack.c.b16 %v2736, %v2735
          %v2754 = vpack.c.b16 %v2738, %v2737
          %2771 = vmatpush.bf16.msra.mxu0 %v2746
          %2772 = vmatpush.bf16.msra.mxu0 %v2745
          %2773 = vmatpush.bf16.msra.mxu0 %v2744
          %2774 = vmatpush.bf16.msra.mxu0 %v2743
          %2775 = vmatpush.bf16.msra.mxu0 %v2742
          %2776 = vmatpush.bf16.msra.mxu0 %v2741
          %2777 = vmatpush.bf16.msra.mxu0 %v2740
          %2778 = vmatpush.bf16.msra.mxu0 %v2739
          %2779 = vmatmul.bf16.gmra.mxu0 %v2637
          %v2780 = vpop.f32.mrf.mxu0
          %v2781 = vadd.f32 %v2673, %v2780
          %v2782 = vpop.f32.mrf.mxu0
          %2783 = vdwg.mxu0
          %2784 = vmatpush.bf16.msra.mxu0 %v2754
          %2785 = vmatpush.bf16.msra.mxu0 %v2753
          %2786 = vmatpush.bf16.msra.mxu0 %v2752
          %2787 = vmatpush.bf16.msra.mxu0 %v2751
          %2788 = vmatpush.bf16.msra.mxu0 %v2750
          %2789 = vmatpush.bf16.msra.mxu0 %v2749
          %2790 = vmatpush.bf16.msra.mxu0 %v2748
          %2791 = vmatpush.bf16.msra.mxu0 %v2747
          %2792 = vmatmul.bf16.gmra.mxu0 %v2638
          %v2793 = vpop.f32.mrf.mxu0
          %v2794 = vadd.f32 %v2781, %v2793
          %v2795 = vpop.f32.mrf.mxu0
          %2796 = vdwg.mxu0
          %2797 = vst [vmem:[#allocation3] sm:$0x3] %v2794
        $region64: #{_forward_impl.5} parent=55 // pred_fallthru
          _
        // Predicated region
        $region65: #{_forward_impl.5} parent=55 // pred_check
          %p2798 = pneg %p233
        $region66: #{_forward_impl.5} parent=55 // pred_check_branch
          %2800 = sbr.rel (%p2798) target = $region68
        $region67: #{_forward_impl.5} parent=55 // pred_region
          %2802 = vsyncadd [#allocation4], 0
          %s2804 = sshll.u32 [#allocation3], 4
          %s2805 = int_to_ptr.vmem [resolvable:$true] %s2804
          %s2806 = sshll.u32 %s9, 4
          %s2807 = int_to_ptr.hbm [resolvable:$true] %s2806
          %2809 = dma.vmem_to_hbm [thread:$0]  %s2805, 32, %s2807, [#allocation4]
        $region68: #{_forward_impl.5} parent=55 // pred_fallthru
          _
        // Predicated region
        $region69: #{_forward_impl.5} parent=55 // pred_check
          %p2810 = pneg %p233
        $region70: #{_forward_impl.5} parent=55 // pred_check_branch
          %2812 = sbr.rel (%p2810) target = $region72
        $region71: #{_forward_impl.5} parent=55 // pred_region
          %2814 = dma.done [#allocation4], 32
        $region72: #{_forward_impl.5} parent=55 // pred_fallthru
          _
      $region56: #{_forward_impl.5} parent=5 // pred_fallthru
        _
      %p2815 = scmp.le.s32.totalorder 2, %s16
      // Predicated region
      $region73: #{_forward_impl.5} parent=5 // pred_check
        %p2816 = pneg %p2815
      $region74: #{_forward_impl.5} parent=5 // pred_check_branch
        %2818 = sbr.rel (%p2816) target = $region76
      $region75: #{_forward_impl.5} parent=5 // pred_region
        %s2819 = ssub.s32 %s16, 2
      $region76: #{_forward_impl.5} parent=5 // pred_fallthru
        _
    $region6: #{_forward_impl.5} parent=1 // loop_footer
      %s20 = sadd.s32 1, %s16
    $region7: #{_forward_impl.5} parent=1 // loop_footer_branch
      %15 = sbr.rel target = $region3
    $region8: #{_forward_impl.5} parent=1 // loop_exit
      _
    %2820 = vsyncpa [#allocation4], 1
    %s2821 = scalar_lea.sflag [#allocation4], 1
    %2822 = vsyncpa %s2821, 1

</llo_original>
